<compile_context>
chip_gen: v6e
topology: v6e:2x2x1
jax: 0.10.0
libtpu: 0.0.40
codegen_flags: <defaults>
</compile_context>

<pallas_src>
import functools

import jax
import jax.numpy as jnp
from jax import lax
from jax.experimental import pallas as pl
from jax.experimental.pallas import tpu as pltpu


# ---------------------------------------------------------------------------
# Pallas kernel: conv as KH*KW shifted matmuls, fused bias + ReLU
# ---------------------------------------------------------------------------
def _conv_kernel(x_ref, w_ref, b_ref, o_ref, *, kh, kw, oh, ow, apply_relu):
    # x_ref: (HP, WP, C)        bf16  padded NHWC image (one image per grid step)
    # w_ref: (KH*KW, C, OCp)    bf16  conv taps, OC zero-padded to a lane-dense OCp
    # b_ref: (1, OCp)           f32   bias (BN already folded in by the wrapper)
    # o_ref: (OH*OW, OCp)       f32   lane-dense output block (used as the accumulator)
    c = x_ref.shape[-1]

    # Initialize the accumulator (= output block) with the bias.
    o_ref[...] = jnp.broadcast_to(b_ref[...], o_ref.shape)

    # Accumulate one small matmul per kernel tap; input is read from VMEM only.
    for i in range(kh):
        for j in range(kw):
            patch = x_ref[pl.ds(i, oh), pl.ds(j, ow), :]          # (OH, OW, C) bf16
            patch = patch.reshape(oh * ow, c)                      # (OH*OW, C)
            o_ref[...] += jnp.dot(patch, w_ref[i * kw + j],
                                  preferred_element_type=jnp.float32)

    if apply_relu:
        o_ref[...] = jnp.maximum(o_ref[...], 0.0)


# ---------------------------------------------------------------------------
# Wrapper: layout prep (NCHW -> padded NHWC), weight/bias (+BN) folding, pallas_call
# ---------------------------------------------------------------------------
def conv2d_forward(x, weight, bias, *, stride=1, relu=True, same_padding=False,
                   bn=False, bn_params=None, compute_dtype=jnp.bfloat16):
    """Pallas implementation of MCNN.Conv2d.forward.

    x:      (N, C, H, W)  float32 (NCHW, PyTorch layout)
    weight: (OC, C, KH, KW)
    bias:   (OC,)
    returns (N, OC, OH, OW)
    """
    n, c, h, w = x.shape
    oc, cin, kh, kw = weight.shape
    assert cin == c
    if stride != 1:
        # TODO(synk): stride > 1 not implemented in the fused Pallas path (MCNN uses stride=1).
        raise NotImplementedError("conv2d_forward Pallas path supports stride=1 only")

    padding = (kh - 1) // 2 if same_padding else 0
    oh = h + 2 * padding - kh + 1
    ow = w + 2 * padding - kw + 1
    hp, wp = h + 2 * padding, w + 2 * padding

    # --- fold eval-mode BatchNorm into weight / bias ------------------------------
    weight_f = weight.astype(jnp.float32)
    bias_f = bias.astype(jnp.float32)
    if bn:
        # TODO(synk): training-mode BatchNorm (batch statistics) not implemented.
        gamma, beta, running_mean, running_var, eps = bn_params
        s = gamma / jnp.sqrt(running_var + eps)                      # (OC,)
        weight_f = weight_f * s[:, None, None, None]
        bias_f = (bias_f - running_mean) * s + beta

    # --- lane-dense channel padding -----------------------------------------------
    ocp = ((oc + 127) // 128) * 128

    # --- input: NCHW -> NHWC, spatial zero-pad, bf16 streaming dtype ---------------
    # TODO(synk): in a full MCNN stack keep activations NHWC end-to-end and transpose
    #             only at the network boundary instead of once per layer.
    xp = jnp.transpose(x, (0, 2, 3, 1))                              # (N, H, W, C)
    if padding:
        xp = jnp.pad(xp, ((0, 0), (padding, padding), (padding, padding), (0, 0)))
    xp = xp.astype(compute_dtype)                                    # (N, HP, WP, C)

    # --- weights: (OC, C, KH, KW) -> (KH*KW, C, OCp), taps indexed by i*KW + j -----
    w_taps = jnp.transpose(weight_f, (2, 3, 1, 0)).reshape(kh * kw, c, oc)
    w_taps = jnp.pad(w_taps, ((0, 0), (0, 0), (0, ocp - oc))).astype(compute_dtype)
    b_pad = jnp.pad(bias_f, (0, ocp - oc)).reshape(1, ocp)           # stays f32

    kernel = functools.partial(_conv_kernel, kh=kh, kw=kw, oh=oh, ow=ow,
                               apply_relu=relu)

    # --- explicit VMEM budget (double-buffered x/out blocks + resident weights) ----
    in_bytes = jnp.dtype(compute_dtype).itemsize
    blk_bytes = (2 * hp * wp * c * in_bytes          # x block, double-buffered
                 + 2 * oh * ow * ocp * 4             # out block, double-buffered
                 + kh * kw * c * ocp * in_bytes      # weights (resident)
                 + ocp * 4)                          # bias
    vmem_limit = int(min(64 * 1024 * 1024, max(16 * 1024 * 1024, 4 * blk_bytes)))

    out = pl.pallas_call(
        kernel,
        out_shape=jax.ShapeDtypeStruct((n, oh * ow, ocp), jnp.float32),
        grid_spec=pltpu.PrefetchScalarGridSpec(
            num_scalar_prefetch=0,
            grid=(n,),
            in_specs=[
                pl.BlockSpec((None, hp, wp, c), lambda b: (b, 0, 0, 0)),   # x (NHWC)
                pl.BlockSpec((kh * kw, c, ocp), lambda b: (0, 0, 0)),      # weights
                pl.BlockSpec((1, ocp), lambda b: (0, 0)),                  # bias
            ],
            out_specs=pl.BlockSpec((None, oh * ow, ocp), lambda b: (b, 0, 0)),
        ),
        compiler_params=pltpu.CompilerParams(
            dimension_semantics=("parallel",),
            vmem_limit_bytes=vmem_limit),
    )(xp, w_taps, b_pad)

    out = out.reshape(n, oh, ow, ocp)[..., :oc]      # drop channel padding
    return jnp.transpose(out, (0, 3, 1, 2))          # NHWC -> NCHW (PyTorch layout)


# ---------------------------------------------------------------------------
# Pure-JAX reference (for correctness check)
# ---------------------------------------------------------------------------
def conv2d_reference(x, weight, bias, *, stride=1, relu=True, same_padding=False,
                     cast_dtype=None):
    kh = weight.shape[2]
    padding = (kh - 1) // 2 if same_padding else 0
    if cast_dtype is not None:   # match the kernel's bf16 streaming inputs
        x = x.astype(cast_dtype)
        weight = weight.astype(cast_dtype)
    y = lax.conv_general_dilated(
        x, weight, window_strides=(stride, stride),
        padding=[(padding, padding), (padding, padding)],
        dimension_numbers=("NCHW", "OIHW", "NCHW"),
        preferred_element_type=jnp.float32)
    y = y + bias.reshape(1, -1, 1, 1).astype(jnp.float32)
    if relu:
        y = jnp.maximum(y, 0.0)
    return y


if __name__ == "__main__":
    # Module config (MCNN-style): Conv2d(4, 8, kernel_size=3, same_padding=True, relu=True)
    in_channels, out_channels, ksize = 4, 8, 3
    N, H, W = 2, 16, 16

    key = jax.random.PRNGKey(0)
    kx, kw_, kb = jax.random.split(key, 3)
    x = jax.random.normal(kx, (N, in_channels, H, W), jnp.float32)
    weight = jax.random.normal(kw_, (out_channels, in_channels, ksize, ksize),
                               jnp.float32) * 0.1
    bias = jax.random.normal(kb, (out_channels,), jnp.float32) * 0.1

    out = conv2d_forward(x, weight, bias, stride=1, relu=True,
                         same_padding=True, bn=False)
    out = jax.block_until_ready(out)

    # Tight check vs a reference that uses the same bf16-rounded inputs (f32 accum),
    # plus a loose sanity check vs the pure-f32 reference.
    ref_bf16 = conv2d_reference(x, weight, bias, stride=1, relu=True,
                                same_padding=True, cast_dtype=jnp.bfloat16)
    ref_f32 = conv2d_reference(x, weight, bias, stride=1, relu=True,
                               same_padding=True)
    assert out.shape == ref_f32.shape == (N, out_channels, H, W)
    assert jnp.allclose(out, ref_bf16, atol=2e-3, rtol=2e-3), "mismatch vs bf16 reference"
    assert jnp.allclose(out, ref_f32, atol=3e-2, rtol=3e-2), "mismatch vs f32 reference"

    print("KERNEL_OK")
</pallas_src>

<mosaic_0001>
module attributes {stable_mosaic.version = 11 : i64} {
  func.func @_conv_kernel(%arg0: i32, %arg1: memref<1x18x18x4xbf16, #tpu.memory_space<vmem>>, %arg2: memref<9x4x128xbf16, #tpu.memory_space<vmem>>, %arg3: memref<1x128xf32, #tpu.memory_space<vmem>>, %arg4: memref<1x256x128xf32, #tpu.memory_space<vmem>>) attributes {dimension_semantics = [#tpu.dimension_semantics<parallel>], iteration_bounds = array<i64: 2>, scalar_prefetch = 0 : i64, scratch_operands = 0 : i64, tpu.core_type = #tpu.core_type<tc>, window_params = [{transform_indices = @transform_0, window_bounds = array<i64: 1, 18, 18, 4>}, {pipeline_mode = #tpu.pipeline_mode<synchronous>, transform_indices = @transform_1, window_bounds = array<i64: 9, 4, 128>}, {pipeline_mode = #tpu.pipeline_mode<synchronous>, transform_indices = @transform_2, window_bounds = array<i64: 1, 128>}, {transform_indices = @transform_3, window_bounds = array<i64: 1, 256, 128>}]} {
    %c0 = arith.constant 0 : index
    %c0_0 = arith.constant 0 : index
    %0 = vector.load %arg3[%c0, %c0_0] : memref<1x128xf32, #tpu.memory_space<vmem>>, vector<1x128xf32>
    %1 = vector.shape_cast %0 : vector<1x128xf32> to vector<1x128xf32>
    %2 = vector.broadcast %1 : vector<1x128xf32> to vector<256x128xf32>
    %c0_1 = arith.constant 0 : index
    %c0_2 = arith.constant 0 : index
    %c0_3 = arith.constant 0 : index
    %3 = vector.load %arg4[%c0_1, %c0_2, %c0_3] : memref<1x256x128xf32, #tpu.memory_space<vmem>>, vector<1x256x128xf32>
    %4 = vector.shape_cast %3 : vector<1x256x128xf32> to vector<256x128xf32>
    %5 = vector.shape_cast %2 : vector<256x128xf32> to vector<1x256x128xf32>
    tpu.vector_store %arg4[%c0_1, %c0_2, %c0_3], %5 {strides = array<i32>} : memref<1x256x128xf32, #tpu.memory_space<vmem>>, vector<1x256x128xf32>,
    %c0_4 = arith.constant 0 : index
    %c0_5 = arith.constant 0 : index
    %c0_6 = arith.constant 0 : index
    %c0_7 = arith.constant 0 : index
    %6 = vector.load %arg1[%c0_4, %c0_5, %c0_6, %c0_7] : memref<1x18x18x4xbf16, #tpu.memory_space<vmem>>, vector<1x16x16x4xbf16>
    %7 = vector.shape_cast %6 : vector<1x16x16x4xbf16> to vector<16x16x4xbf16>
    %8 = vector.shape_cast %7 : vector<16x16x4xbf16> to vector<256x4xbf16>
    %c0_8 = arith.constant 0 : index
    %c0_9 = arith.constant 0 : index
    %c0_10 = arith.constant 0 : index
    %9 = vector.load %arg4[%c0_8, %c0_9, %c0_10] : memref<1x256x128xf32, #tpu.memory_space<vmem>>, vector<1x256x128xf32>
    %10 = vector.shape_cast %9 : vector<1x256x128xf32> to vector<256x128xf32>
    %c0_11 = arith.constant 0 : index
    %c0_12 = arith.constant 0 : index
    %c0_13 = arith.constant 0 : index
    %11 = vector.load %arg2[%c0_11, %c0_12, %c0_13] : memref<9x4x128xbf16, #tpu.memory_space<vmem>>, vector<1x4x128xbf16>
    %12 = vector.shape_cast %11 : vector<1x4x128xbf16> to vector<4x128xbf16>
    %cst = arith.constant dense<0.000000e+00> : vector<256x128xf32>
    %13 = tpu.matmul %8, %12, %cst {dimension_numbers = #tpu.dot_dimension_numbers<[1], [0], [0], [1], [0, 0, 1, 1], [], []>} : vector<256x4xbf16>, vector<4x128xbf16>, vector<256x128xf32> -> vector<256x128xf32>
    %14 = arith.addf %10, %13 : vector<256x128xf32>
    %c0_14 = arith.constant 0 : index
    %c0_15 = arith.constant 0 : index
    %c0_16 = arith.constant 0 : index
    %15 = vector.load %arg4[%c0_14, %c0_15, %c0_16] : memref<1x256x128xf32, #tpu.memory_space<vmem>>, vector<1x256x128xf32>
    %16 = vector.shape_cast %15 : vector<1x256x128xf32> to vector<256x128xf32>
    %17 = vector.shape_cast %14 : vector<256x128xf32> to vector<1x256x128xf32>
    tpu.vector_store %arg4[%c0_14, %c0_15, %c0_16], %17 {strides = array<i32>} : memref<1x256x128xf32, #tpu.memory_space<vmem>>, vector<1x256x128xf32>,
    %c0_17 = arith.constant 0 : index
    %c0_18 = arith.constant 0 : index
    %c1 = arith.constant 1 : index
    %c0_19 = arith.constant 0 : index
    %18 = vector.load %arg1[%c0_17, %c0_18, %c1, %c0_19] : memref<1x18x18x4xbf16, #tpu.memory_space<vmem>>, vector<1x16x16x4xbf16>
    %19 = vector.shape_cast %18 : vector<1x16x16x4xbf16> to vector<16x16x4xbf16>
    %20 = vector.shape_cast %19 : vector<16x16x4xbf16> to vector<256x4xbf16>
    %c0_20 = arith.constant 0 : index
    %c0_21 = arith.constant 0 : index
    %c0_22 = arith.constant 0 : index
    %21 = vector.load %arg4[%c0_20, %c0_21, %c0_22] : memref<1x256x128xf32, #tpu.memory_space<vmem>>, vector<1x256x128xf32>
    %22 = vector.shape_cast %21 : vector<1x256x128xf32> to vector<256x128xf32>
    %c1_23 = arith.constant 1 : index
    %c0_24 = arith.constant 0 : index
    %c0_25 = arith.constant 0 : index
    %23 = vector.load %arg2[%c1_23, %c0_24, %c0_25] : memref<9x4x128xbf16, #tpu.memory_space<vmem>>, vector<1x4x128xbf16>
    %24 = vector.shape_cast %23 : vector<1x4x128xbf16> to vector<4x128xbf16>
    %cst_26 = arith.constant dense<0.000000e+00> : vector<256x128xf32>
    %25 = tpu.matmul %20, %24, %cst_26 {dimension_numbers = #tpu.dot_dimension_numbers<[1], [0], [0], [1], [0, 0, 1, 1], [], []>} : vector<256x4xbf16>, vector<4x128xbf16>, vector<256x128xf32> -> vector<256x128xf32>
    %26 = arith.addf %22, %25 : vector<256x128xf32>
    %c0_27 = arith.constant 0 : index
    %c0_28 = arith.constant 0 : index
    %c0_29 = arith.constant 0 : index
    %27 = vector.load %arg4[%c0_27, %c0_28, %c0_29] : memref<1x256x128xf32, #tpu.memory_space<vmem>>, vector<1x256x128xf32>
    %28 = vector.shape_cast %27 : vector<1x256x128xf32> to vector<256x128xf32>
    %29 = vector.shape_cast %26 : vector<256x128xf32> to vector<1x256x128xf32>
    tpu.vector_store %arg4[%c0_27, %c0_28, %c0_29], %29 {strides = array<i32>} : memref<1x256x128xf32, #tpu.memory_space<vmem>>, vector<1x256x128xf32>,
    %c0_30 = arith.constant 0 : index
    %c0_31 = arith.constant 0 : index
    %c2 = arith.constant 2 : index
    %c0_32 = arith.constant 0 : index
    %30 = vector.load %arg1[%c0_30, %c0_31, %c2, %c0_32] : memref<1x18x18x4xbf16, #tpu.memory_space<vmem>>, vector<1x16x16x4xbf16>
    %31 = vector.shape_cast %30 : vector<1x16x16x4xbf16> to vector<16x16x4xbf16>
    %32 = vector.shape_cast %31 : vector<16x16x4xbf16> to vector<256x4xbf16>
    %c0_33 = arith.constant 0 : index
    %c0_34 = arith.constant 0 : index
    %c0_35 = arith.constant 0 : index
    %33 = vector.load %arg4[%c0_33, %c0_34, %c0_35] : memref<1x256x128xf32, #tpu.memory_space<vmem>>, vector<1x256x128xf32>
    %34 = vector.shape_cast %33 : vector<1x256x128xf32> to vector<256x128xf32>
    %c2_36 = arith.constant 2 : index
    %c0_37 = arith.constant 0 : index
    %c0_38 = arith.constant 0 : index
    %35 = vector.load %arg2[%c2_36, %c0_37, %c0_38] : memref<9x4x128xbf16, #tpu.memory_space<vmem>>, vector<1x4x128xbf16>
    %36 = vector.shape_cast %35 : vector<1x4x128xbf16> to vector<4x128xbf16>
    %cst_39 = arith.constant dense<0.000000e+00> : vector<256x128xf32>
    %37 = tpu.matmul %32, %36, %cst_39 {dimension_numbers = #tpu.dot_dimension_numbers<[1], [0], [0], [1], [0, 0, 1, 1], [], []>} : vector<256x4xbf16>, vector<4x128xbf16>, vector<256x128xf32> -> vector<256x128xf32>
    %38 = arith.addf %34, %37 : vector<256x128xf32>
    %c0_40 = arith.constant 0 : index
    %c0_41 = arith.constant 0 : index
    %c0_42 = arith.constant 0 : index
    %39 = vector.load %arg4[%c0_40, %c0_41, %c0_42] : memref<1x256x128xf32, #tpu.memory_space<vmem>>, vector<1x256x128xf32>
    %40 = vector.shape_cast %39 : vector<1x256x128xf32> to vector<256x128xf32>
    %41 = vector.shape_cast %38 : vector<256x128xf32> to vector<1x256x128xf32>
    tpu.vector_store %arg4[%c0_40, %c0_41, %c0_42], %41 {strides = array<i32>} : memref<1x256x128xf32, #tpu.memory_space<vmem>>, vector<1x256x128xf32>,
    %c0_43 = arith.constant 0 : index
    %c1_44 = arith.constant 1 : index
    %c0_45 = arith.constant 0 : index
    %c0_46 = arith.constant 0 : index
    %42 = vector.load %arg1[%c0_43, %c1_44, %c0_45, %c0_46] : memref<1x18x18x4xbf16, #tpu.memory_space<vmem>>, vector<1x16x16x4xbf16>
    %43 = vector.shape_cast %42 : vector<1x16x16x4xbf16> to vector<16x16x4xbf16>
    %44 = vector.shape_cast %43 : vector<16x16x4xbf16> to vector<256x4xbf16>
    %c0_47 = arith.constant 0 : index
    %c0_48 = arith.constant 0 : index
    %c0_49 = arith.constant 0 : index
    %45 = vector.load %arg4[%c0_47, %c0_48, %c0_49] : memref<1x256x128xf32, #tpu.memory_space<vmem>>, vector<1x256x128xf32>
    %46 = vector.shape_cast %45 : vector<1x256x128xf32> to vector<256x128xf32>
    %c3 = arith.constant 3 : index
    %c0_50 = arith.constant 0 : index
    %c0_51 = arith.constant 0 : index
    %47 = vector.load %arg2[%c3, %c0_50, %c0_51] : memref<9x4x128xbf16, #tpu.memory_space<vmem>>, vector<1x4x128xbf16>
    %48 = vector.shape_cast %47 : vector<1x4x128xbf16> to vector<4x128xbf16>
    %cst_52 = arith.constant dense<0.000000e+00> : vector<256x128xf32>
    %49 = tpu.matmul %44, %48, %cst_52 {dimension_numbers = #tpu.dot_dimension_numbers<[1], [0], [0], [1], [0, 0, 1, 1], [], []>} : vector<256x4xbf16>, vector<4x128xbf16>, vector<256x128xf32> -> vector<256x128xf32>
    %50 = arith.addf %46, %49 : vector<256x128xf32>
    %c0_53 = arith.constant 0 : index
    %c0_54 = arith.constant 0 : index
    %c0_55 = arith.constant 0 : index
    %51 = vector.load %arg4[%c0_53, %c0_54, %c0_55] : memref<1x256x128xf32, #tpu.memory_space<vmem>>, vector<1x256x128xf32>
    %52 = vector.shape_cast %51 : vector<1x256x128xf32> to vector<256x128xf32>
    %53 = vector.shape_cast %50 : vector<256x128xf32> to vector<1x256x128xf32>
    tpu.vector_store %arg4[%c0_53, %c0_54, %c0_55], %53 {strides = array<i32>} : memref<1x256x128xf32, #tpu.memory_space<vmem>>, vector<1x256x128xf32>,
    %c0_56 = arith.constant 0 : index
    %c1_57 = arith.constant 1 : index
    %c1_58 = arith.constant 1 : index
    %c0_59 = arith.constant 0 : index
    %54 = vector.load %arg1[%c0_56, %c1_57, %c1_58, %c0_59] : memref<1x18x18x4xbf16, #tpu.memory_space<vmem>>, vector<1x16x16x4xbf16>
    %55 = vector.shape_cast %54 : vector<1x16x16x4xbf16> to vector<16x16x4xbf16>
    %56 = vector.shape_cast %55 : vector<16x16x4xbf16> to vector<256x4xbf16>
    %c0_60 = arith.constant 0 : index
    %c0_61 = arith.constant 0 : index
    %c0_62 = arith.constant 0 : index
    %57 = vector.load %arg4[%c0_60, %c0_61, %c0_62] : memref<1x256x128xf32, #tpu.memory_space<vmem>>, vector<1x256x128xf32>
    %58 = vector.shape_cast %57 : vector<1x256x128xf32> to vector<256x128xf32>
    %c4 = arith.constant 4 : index
    %c0_63 = arith.constant 0 : index
    %c0_64 = arith.constant 0 : index
    %59 = vector.load %arg2[%c4, %c0_63, %c0_64] : memref<9x4x128xbf16, #tpu.memory_space<vmem>>, vector<1x4x128xbf16>
    %60 = vector.shape_cast %59 : vector<1x4x128xbf16> to vector<4x128xbf16>
    %cst_65 = arith.constant dense<0.000000e+00> : vector<256x128xf32>
    %61 = tpu.matmul %56, %60, %cst_65 {dimension_numbers = #tpu.dot_dimension_numbers<[1], [0], [0], [1], [0, 0, 1, 1], [], []>} : vector<256x4xbf16>, vector<4x128xbf16>, vector<256x128xf32> -> vector<256x128xf32>
    %62 = arith.addf %58, %61 : vector<256x128xf32>
    %c0_66 = arith.constant 0 : index
    %c0_67 = arith.constant 0 : index
    %c0_68 = arith.constant 0 : index
    %63 = vector.load %arg4[%c0_66, %c0_67, %c0_68] : memref<1x256x128xf32, #tpu.memory_space<vmem>>, vector<1x256x128xf32>
    %64 = vector.shape_cast %63 : vector<1x256x128xf32> to vector<256x128xf32>
    %65 = vector.shape_cast %62 : vector<256x128xf32> to vector<1x256x128xf32>
    tpu.vector_store %arg4[%c0_66, %c0_67, %c0_68], %65 {strides = array<i32>} : memref<1x256x128xf32, #tpu.memory_space<vmem>>, vector<1x256x128xf32>,
    %c0_69 = arith.constant 0 : index
    %c1_70 = arith.constant 1 : index
    %c2_71 = arith.constant 2 : index
    %c0_72 = arith.constant 0 : index
    %66 = vector.load %arg1[%c0_69, %c1_70, %c2_71, %c0_72] : memref<1x18x18x4xbf16, #tpu.memory_space<vmem>>, vector<1x16x16x4xbf16>
    %67 = vector.shape_cast %66 : vector<1x16x16x4xbf16> to vector<16x16x4xbf16>
    %68 = vector.shape_cast %67 : vector<16x16x4xbf16> to vector<256x4xbf16>
    %c0_73 = arith.constant 0 : index
    %c0_74 = arith.constant 0 : index
    %c0_75 = arith.constant 0 : index
    %69 = vector.load %arg4[%c0_73, %c0_74, %c0_75] : memref<1x256x128xf32, #tpu.memory_space<vmem>>, vector<1x256x128xf32>
    %70 = vector.shape_cast %69 : vector<1x256x128xf32> to vector<256x128xf32>
    %c5 = arith.constant 5 : index
    %c0_76 = arith.constant 0 : index
    %c0_77 = arith.constant 0 : index
    %71 = vector.load %arg2[%c5, %c0_76, %c0_77] : memref<9x4x128xbf16, #tpu.memory_space<vmem>>, vector<1x4x128xbf16>
    %72 = vector.shape_cast %71 : vector<1x4x128xbf16> to vector<4x128xbf16>
    %cst_78 = arith.constant dense<0.000000e+00> : vector<256x128xf32>
    %73 = tpu.matmul %68, %72, %cst_78 {dimension_numbers = #tpu.dot_dimension_numbers<[1], [0], [0], [1], [0, 0, 1, 1], [], []>} : vector<256x4xbf16>, vector<4x128xbf16>, vector<256x128xf32> -> vector<256x128xf32>
    %74 = arith.addf %70, %73 : vector<256x128xf32>
    %c0_79 = arith.constant 0 : index
    %c0_80 = arith.constant 0 : index
    %c0_81 = arith.constant 0 : index
    %75 = vector.load %arg4[%c0_79, %c0_80, %c0_81] : memref<1x256x128xf32, #tpu.memory_space<vmem>>, vector<1x256x128xf32>
    %76 = vector.shape_cast %75 : vector<1x256x128xf32> to vector<256x128xf32>
    %77 = vector.shape_cast %74 : vector<256x128xf32> to vector<1x256x128xf32>
    tpu.vector_store %arg4[%c0_79, %c0_80, %c0_81], %77 {strides = array<i32>} : memref<1x256x128xf32, #tpu.memory_space<vmem>>, vector<1x256x128xf32>,
    %c0_82 = arith.constant 0 : index
    %c2_83 = arith.constant 2 : index
    %c0_84 = arith.constant 0 : index
    %c0_85 = arith.constant 0 : index
    %78 = vector.load %arg1[%c0_82, %c2_83, %c0_84, %c0_85] : memref<1x18x18x4xbf16, #tpu.memory_space<vmem>>, vector<1x16x16x4xbf16>
    %79 = vector.shape_cast %78 : vector<1x16x16x4xbf16> to vector<16x16x4xbf16>
    %80 = vector.shape_cast %79 : vector<16x16x4xbf16> to vector<256x4xbf16>
    %c0_86 = arith.constant 0 : index
    %c0_87 = arith.constant 0 : index
    %c0_88 = arith.constant 0 : index
    %81 = vector.load %arg4[%c0_86, %c0_87, %c0_88] : memref<1x256x128xf32, #tpu.memory_space<vmem>>, vector<1x256x128xf32>
    %82 = vector.shape_cast %81 : vector<1x256x128xf32> to vector<256x128xf32>
    %c6 = arith.constant 6 : index
    %c0_89 = arith.constant 0 : index
    %c0_90 = arith.constant 0 : index
    %83 = vector.load %arg2[%c6, %c0_89, %c0_90] : memref<9x4x128xbf16, #tpu.memory_space<vmem>>, vector<1x4x128xbf16>
    %84 = vector.shape_cast %83 : vector<1x4x128xbf16> to vector<4x128xbf16>
    %cst_91 = arith.constant dense<0.000000e+00> : vector<256x128xf32>
    %85 = tpu.matmul %80, %84, %cst_91 {dimension_numbers = #tpu.dot_dimension_numbers<[1], [0], [0], [1], [0, 0, 1, 1], [], []>} : vector<256x4xbf16>, vector<4x128xbf16>, vector<256x128xf32> -> vector<256x128xf32>
    %86 = arith.addf %82, %85 : vector<256x128xf32>
    %c0_92 = arith.constant 0 : index
    %c0_93 = arith.constant 0 : index
    %c0_94 = arith.constant 0 : index
    %87 = vector.load %arg4[%c0_92, %c0_93, %c0_94] : memref<1x256x128xf32, #tpu.memory_space<vmem>>, vector<1x256x128xf32>
    %88 = vector.shape_cast %87 : vector<1x256x128xf32> to vector<256x128xf32>
    %89 = vector.shape_cast %86 : vector<256x128xf32> to vector<1x256x128xf32>
    tpu.vector_store %arg4[%c0_92, %c0_93, %c0_94], %89 {strides = array<i32>} : memref<1x256x128xf32, #tpu.memory_space<vmem>>, vector<1x256x128xf32>,
    %c0_95 = arith.constant 0 : index
    %c2_96 = arith.constant 2 : index
    %c1_97 = arith.constant 1 : index
    %c0_98 = arith.constant 0 : index
    %90 = vector.load %arg1[%c0_95, %c2_96, %c1_97, %c0_98] : memref<1x18x18x4xbf16, #tpu.memory_space<vmem>>, vector<1x16x16x4xbf16>
    %91 = vector.shape_cast %90 : vector<1x16x16x4xbf16> to vector<16x16x4xbf16>
    %92 = vector.shape_cast %91 : vector<16x16x4xbf16> to vector<256x4xbf16>
    %c0_99 = arith.constant 0 : index
    %c0_100 = arith.constant 0 : index
    %c0_101 = arith.constant 0 : index
    %93 = vector.load %arg4[%c0_99, %c0_100, %c0_101] : memref<1x256x128xf32, #tpu.memory_space<vmem>>, vector<1x256x128xf32>
    %94 = vector.shape_cast %93 : vector<1x256x128xf32> to vector<256x128xf32>
    %c7 = arith.constant 7 : index
    %c0_102 = arith.constant 0 : index
    %c0_103 = arith.constant 0 : index
    %95 = vector.load %arg2[%c7, %c0_102, %c0_103] : memref<9x4x128xbf16, #tpu.memory_space<vmem>>, vector<1x4x128xbf16>
    %96 = vector.shape_cast %95 : vector<1x4x128xbf16> to vector<4x128xbf16>
    %cst_104 = arith.constant dense<0.000000e+00> : vector<256x128xf32>
    %97 = tpu.matmul %92, %96, %cst_104 {dimension_numbers = #tpu.dot_dimension_numbers<[1], [0], [0], [1], [0, 0, 1, 1], [], []>} : vector<256x4xbf16>, vector<4x128xbf16>, vector<256x128xf32> -> vector<256x128xf32>
    %98 = arith.addf %94, %97 : vector<256x128xf32>
    %c0_105 = arith.constant 0 : index
    %c0_106 = arith.constant 0 : index
    %c0_107 = arith.constant 0 : index
    %99 = vector.load %arg4[%c0_105, %c0_106, %c0_107] : memref<1x256x128xf32, #tpu.memory_space<vmem>>, vector<1x256x128xf32>
    %100 = vector.shape_cast %99 : vector<1x256x128xf32> to vector<256x128xf32>
    %101 = vector.shape_cast %98 : vector<256x128xf32> to vector<1x256x128xf32>
    tpu.vector_store %arg4[%c0_105, %c0_106, %c0_107], %101 {strides = array<i32>} : memref<1x256x128xf32, #tpu.memory_space<vmem>>, vector<1x256x128xf32>,
    %c0_108 = arith.constant 0 : index
    %c2_109 = arith.constant 2 : index
    %c2_110 = arith.constant 2 : index
    %c0_111 = arith.constant 0 : index
    %102 = vector.load %arg1[%c0_108, %c2_109, %c2_110, %c0_111] : memref<1x18x18x4xbf16, #tpu.memory_space<vmem>>, vector<1x16x16x4xbf16>
    %103 = vector.shape_cast %102 : vector<1x16x16x4xbf16> to vector<16x16x4xbf16>
    %104 = vector.shape_cast %103 : vector<16x16x4xbf16> to vector<256x4xbf16>
    %c0_112 = arith.constant 0 : index
    %c0_113 = arith.constant 0 : index
    %c0_114 = arith.constant 0 : index
    %105 = vector.load %arg4[%c0_112, %c0_113, %c0_114] : memref<1x256x128xf32, #tpu.memory_space<vmem>>, vector<1x256x128xf32>
    %106 = vector.shape_cast %105 : vector<1x256x128xf32> to vector<256x128xf32>
    %c8 = arith.constant 8 : index
    %c0_115 = arith.constant 0 : index
    %c0_116 = arith.constant 0 : index
    %107 = vector.load %arg2[%c8, %c0_115, %c0_116] : memref<9x4x128xbf16, #tpu.memory_space<vmem>>, vector<1x4x128xbf16>
    %108 = vector.shape_cast %107 : vector<1x4x128xbf16> to vector<4x128xbf16>
    %cst_117 = arith.constant dense<0.000000e+00> : vector<256x128xf32>
    %109 = tpu.matmul %104, %108, %cst_117 {dimension_numbers = #tpu.dot_dimension_numbers<[1], [0], [0], [1], [0, 0, 1, 1], [], []>} : vector<256x4xbf16>, vector<4x128xbf16>, vector<256x128xf32> -> vector<256x128xf32>
    %110 = arith.addf %106, %109 : vector<256x128xf32>
    %c0_118 = arith.constant 0 : index
    %c0_119 = arith.constant 0 : index
    %c0_120 = arith.constant 0 : index
    %111 = vector.load %arg4[%c0_118, %c0_119, %c0_120] : memref<1x256x128xf32, #tpu.memory_space<vmem>>, vector<1x256x128xf32>
    %112 = vector.shape_cast %111 : vector<1x256x128xf32> to vector<256x128xf32>
    %113 = vector.shape_cast %110 : vector<256x128xf32> to vector<1x256x128xf32>
    tpu.vector_store %arg4[%c0_118, %c0_119, %c0_120], %113 {strides = array<i32>} : memref<1x256x128xf32, #tpu.memory_space<vmem>>, vector<1x256x128xf32>,
    %c0_121 = arith.constant 0 : index
    %c0_122 = arith.constant 0 : index
    %c0_123 = arith.constant 0 : index
    %114 = vector.load %arg4[%c0_121, %c0_122, %c0_123] : memref<1x256x128xf32, #tpu.memory_space<vmem>>, vector<1x256x128xf32>
    %115 = vector.shape_cast %114 : vector<1x256x128xf32> to vector<256x128xf32>
    %cst_124 = arith.constant 0.000000e+00 : f32
    %116 = vector.broadcast %cst_124 : f32 to vector<256x128xf32>
    %117 = arith.maximumf %115, %116 : vector<256x128xf32>
    %c0_125 = arith.constant 0 : index
    %c0_126 = arith.constant 0 : index
    %c0_127 = arith.constant 0 : index
    %118 = vector.load %arg4[%c0_125, %c0_126, %c0_127] : memref<1x256x128xf32, #tpu.memory_space<vmem>>, vector<1x256x128xf32>
    %119 = vector.shape_cast %118 : vector<1x256x128xf32> to vector<256x128xf32>
    %120 = vector.shape_cast %117 : vector<256x128xf32> to vector<1x256x128xf32>
    tpu.vector_store %arg4[%c0_125, %c0_126, %c0_127], %120 {strides = array<i32>} : memref<1x256x128xf32, #tpu.memory_space<vmem>>, vector<1x256x128xf32>,
    return
  }
  func.func @transform_0(%arg0: i32) -> (i32, i32, i32, i32) {
    %c0_i32 = arith.constant 0 : i32
    %c0_i32_0 = arith.constant 0 : i32
    %c0_i32_1 = arith.constant 0 : i32
    %c0_i32_2 = arith.constant 0 : i32
    return %arg0, %c0_i32, %c0_i32_0, %c0_i32_1 : i32, i32, i32, i32
  }
  func.func @transform_1(%arg0: i32) -> (i32, i32, i32) {
    %c0_i32 = arith.constant 0 : i32
    %c0_i32_0 = arith.constant 0 : i32
    %c0_i32_1 = arith.constant 0 : i32
    %c0_i32_2 = arith.constant 0 : i32
    return %c0_i32, %c0_i32_0, %c0_i32_1 : i32, i32, i32
  }
  func.func @transform_2(%arg0: i32) -> (i32, i32) {
    %c0_i32 = arith.constant 0 : i32
    %c0_i32_0 = arith.constant 0 : i32
    %c0_i32_1 = arith.constant 0 : i32
    return %c0_i32, %c0_i32_0 : i32, i32
  }
  func.func @transform_3(%arg0: i32) -> (i32, i32, i32) {
    %c0_i32 = arith.constant 0 : i32
    %c0_i32_0 = arith.constant 0 : i32
    %c0_i32_1 = arith.constant 0 : i32
    return %arg0, %c0_i32, %c0_i32_0 : i32, i32, i32
  }
}

</mosaic_0001>

<llo_original>
// kernel: tpu_custom_call.1
$region0: #{tpu_custom_call.1}
  #allocation0 [shape = 'u32[]', space=smem, size = 0x4, offset = 0x4, fixed_abs, tag = 'smem constant byte address 0x4 - core index']
  #allocation1 [shape = 'u32[144,128]{1,0:T(1,128)}', space=vmem, size = 0x12000, scoped, tag = 'internal scratch']
  %s0 = inlined_call_operand.vmem [shape: bf16[2,18,18,4], index: 0, kind: input, shape index: {}]
  %s1 = inlined_call_operand.vmem [shape: bf16[9,4,128], index: 1, kind: input, shape index: {}]
  %s2 = inlined_call_operand.vmem [shape: f32[1,128], index: 2, kind: input, shape index: {}]
  %s3 = inlined_call_operand.hbm [shape: f32[2,256,128], index: 3, kind: output, shape index: {}]
  %s4 = sld [smem:[#allocation0]]
  $region45: #{tpu_custom_call.1} parent=0
    _
  %s6 = ssub.s32 1, %s4
  %s7 = scalar_select 0, %s6, %s4
  $region1: #{tpu_custom_call.1} parent=0
    #allocation2 [shape = 'u8[262144]{0}', space=vmem, size = 0x40000, scoped, tag = 'output window, operand 0']
    #allocation3 [shape = 's32[2]{0}', space=sflag, size = 0x8, scoped, tag = 'scoped memory for tpu_custom_call.1']
    %8 = vsyncpa [#allocation3], 0
    %s9 = scalar_lea.sflag [#allocation3], 1
    %10 = vsyncpa %s9, 0
    loop: start=0, step=1, limit=4
    $region2: #{tpu_custom_call.1} parent=1 // loop_pre_header
      _
    $region3: #{tpu_custom_call.1} parent=1 // loop_header
      %s12 = sphi 0, %s16
      %p13 = scmp.ge.s32.totalorder %s12, 4
      %s22 = sphi 0, %s24
      %s25 = sphi 0, %s22
      %s26 = sphi 0, %s25
      %s42 = sphi 0, %s26
      %s46 = sphi 0, %s46
      %s48 = sphi 0, %s46
      %s49 = sphi 0, %s48
      %s63 = sphi 0, %s49
      %s67 = sphi 0, %s67
      %s69 = sphi 0, %s67
      %s70 = sphi 0, %s69
      %s84 = sphi 0, %s70
      %s90 = sphi 0, %s92
      %s93 = sphi 0, %s90
      %s94 = sphi 0, %s93
      %s110 = sphi 0, %s94
    $region4: #{tpu_custom_call.1} parent=1 // loop_header_branch
      %15 = sbr.rel (%p13) target = $region8
    $region5: #{tpu_custom_call.1} parent=1 // loop_body
      %s17 = ssub.s32 %s12, 1
      %s18 = ssub.s32 %s12, 2
      %s19 = sadd.s32 %s12, 1
      %s20 = ssub.s32 %s12, %s19
      %p21 = scmp.eq.s32.totalorder %s20, 0
      %s23 = sadd.s32 %s22, 1
      %s24 = scalar_select %p21, %s22, %s23
      %p27 = pneg %p21
      %p28 = scmp.eq.s32.totalorder %s12, 1
      %p29 = por %p27, %p28
      %p30 = scmp.ne.s32.totalorder %s22, %s25
      %p31 = scmp.eq.s32.totalorder %s12, 0
      %p32 = por %p30, %p31
      %p33 = scmp.ne.s32.totalorder %s22, %s25
      %p34 = scmp.eq.s32.totalorder %s17, 1
      %p35 = por %p33, %p34
      %p36 = scmp.ne.s32.totalorder %s25, %s26
      %p37 = scmp.eq.s32.totalorder %s17, 0
      %p38 = por %p36, %p37
      %p39 = scmp.ne.s32.totalorder %s25, %s26
      %p40 = scmp.eq.s32.totalorder %s18, 1
      %p41 = por %p39, %p40
      %p43 = scmp.ne.s32.totalorder %s26, %s42
      %p44 = scmp.eq.s32.totalorder %s18, 0
      %p45 = por %p43, %p44
      %s47 = sadd.s32 %s46, 1
      %p50 = scmp.eq.s32.totalorder %s12, 1
      %p51 = scmp.ne.s32.totalorder %s46, %s48
      %p52 = scmp.eq.s32.totalorder %s12, 0
      %p53 = por %p51, %p52
      %p54 = scmp.ne.s32.totalorder %s46, %s48
      %p55 = scmp.eq.s32.totalorder %s17, 1
      %p56 = por %p54, %p55
      %p57 = scmp.ne.s32.totalorder %s48, %s49
      %p58 = scmp.eq.s32.totalorder %s17, 0
      %p59 = por %p57, %p58
      %p60 = scmp.ne.s32.totalorder %s48, %s49
      %p61 = scmp.eq.s32.totalorder %s18, 1
      %p62 = por %p60, %p61
      %p64 = scmp.ne.s32.totalorder %s49, %s63
      %p65 = scmp.eq.s32.totalorder %s18, 0
      %p66 = por %p64, %p65
      %s68 = sadd.s32 %s67, 1
      %p71 = scmp.eq.s32.totalorder %s12, 1
      %p72 = scmp.ne.s32.totalorder %s67, %s69
      %p73 = scmp.eq.s32.totalorder %s12, 0
      %p74 = por %p72, %p73
      %p75 = scmp.ne.s32.totalorder %s67, %s69
      %p76 = scmp.eq.s32.totalorder %s17, 1
      %p77 = por %p75, %p76
      %p78 = scmp.ne.s32.totalorder %s69, %s70
      %p79 = scmp.eq.s32.totalorder %s17, 0
      %p80 = por %p78, %p79
      %p81 = scmp.ne.s32.totalorder %s69, %s70
      %p82 = scmp.eq.s32.totalorder %s18, 1
      %p83 = por %p81, %p82
      %p85 = scmp.ne.s32.totalorder %s70, %s84
      %p86 = scmp.eq.s32.totalorder %s18, 0
      %p87 = por %p85, %p86
      %s88 = ssub.s32 %s12, %s19
      %p89 = scmp.eq.s32.totalorder %s88, 0
      %s91 = sadd.s32 %s90, 1
      %s92 = scalar_select %p89, %s90, %s91
      %p95 = pneg %p89
      %p96 = scmp.eq.s32.totalorder %s12, 1
      %p97 = por %p95, %p96
      %p98 = scmp.ne.s32.totalorder %s90, %s93
      %p99 = scmp.eq.s32.totalorder %s12, 0
      %p100 = por %p98, %p99
      %p101 = scmp.ne.s32.totalorder %s90, %s93
      %p102 = scmp.eq.s32.totalorder %s17, 1
      %p103 = por %p101, %p102
      %p104 = scmp.ne.s32.totalorder %s93, %s94
      %p105 = scmp.eq.s32.totalorder %s17, 0
      %p106 = por %p104, %p105
      %p107 = scmp.ne.s32.totalorder %s93, %s94
      %p108 = scmp.eq.s32.totalorder %s18, 1
      %p109 = por %p107, %p108
      %p111 = scmp.ne.s32.totalorder %s94, %s110
      %p112 = scmp.eq.s32.totalorder %s18, 0
      %p113 = por %p111, %p112
      %p114 = scmp.le.s32.totalorder 1, %s12
      %p115 = scmp.lt.s32.totalorder %s12, 3
      %p116 = pnand %p114, %p115
      %p117 = pneg %p116
      // Predicated region
      $region9: #{tpu_custom_call.1} parent=5 // pred_check
        _
      $region10: #{tpu_custom_call.1} parent=5 // pred_check_branch
        %119 = sbr.rel (%p116) target = $region12
      $region11: #{tpu_custom_call.1} parent=5 // pred_region
        %s120 = ssub.s32 %s12, 1
        // Predicated region
        $region13: #{tpu_custom_call.1} parent=11 // pred_check
          %p121 = pneg %p59
        $region14: #{tpu_custom_call.1} parent=11 // pred_check_branch
          %123 = sbr.rel (%p121) target = $region16
        $region15: #{tpu_custom_call.1} parent=11 // pred_region
          _
        $region16: #{tpu_custom_call.1} parent=11 // pred_fallthru
          _
        // Predicated region
        $region17: #{tpu_custom_call.1} parent=11 // pred_check
          %p124 = pneg %p80
        $region18: #{tpu_custom_call.1} parent=11 // pred_check_branch
          %126 = sbr.rel (%p124) target = $region20
        $region19: #{tpu_custom_call.1} parent=11 // pred_region
          _
        $region20: #{tpu_custom_call.1} parent=11 // pred_fallthru
          _
      $region12: #{tpu_custom_call.1} parent=5 // pred_fallthru
        _
      %p127 = scmp.lt.s32.totalorder %s12, 2
      // Predicated region
      $region21: #{tpu_custom_call.1} parent=5 // pred_check
        %p128 = pneg %p127
      $region22: #{tpu_custom_call.1} parent=5 // pred_check_branch
        %130 = sbr.rel (%p128) target = $region24
      $region23: #{tpu_custom_call.1} parent=5 // pred_region
        // Predicated region
        $region25: #{tpu_custom_call.1} parent=23 // pred_check
          %p131 = pneg %p32
        $region26: #{tpu_custom_call.1} parent=23 // pred_check_branch
          %133 = sbr.rel (%p131) target = $region28
        $region27: #{tpu_custom_call.1} parent=23 // pred_region
          %p134 = scmp.lt.s32.totalorder %s12, 1
          %s135 = scalar_select %p134, %s12, 1
          %s136 = smul.addr %s135, 54
          %s137 = smul.addr %s136, 4
          %s138 = scalar_lea.vmem %s0, %s137
        $region28: #{tpu_custom_call.1} parent=23 // pred_fallthru
          _
      $region24: #{tpu_custom_call.1} parent=5 // pred_fallthru
        _
      %p139 = scmp.le.s32.totalorder 1, %s12
      %p140 = scmp.lt.s32.totalorder %s12, 3
      %p141 = pnand %p139, %p140
      %p142 = pneg %p141
      // Predicated region
      $region29: #{tpu_custom_call.1} parent=5 // pred_check
        _
      $region30: #{tpu_custom_call.1} parent=5 // pred_check_branch
        %144 = sbr.rel (%p141) target = $region32
      $region31: #{tpu_custom_call.1} parent=5 // pred_region
        %s145 = ssub.s32 %s12, 1
        %p146 = scmp.lt.s32.totalorder %s17, 1
        %s147 = scalar_select %p146, %s17, 1
        %s148 = smul.addr %s147, 54
        %s149 = smul.addr %s148, 4
        %s150 = scalar_lea.vmem %s0, %s149
        %p151 = pneg %p38
        %p152 = pneg %p35
        %p153 = pneg %p59
        %p154 = pneg %p56
        %p155 = pneg %p80
        %p156 = pneg %p77
        %p157 = pneg %p106
        %p158 = pneg %p103
        %s159 = sand.u32 %s93, 1
        %s160 = scalar_lea.sflag [#allocation3], %s159
        %s161 = sand.u32 %s93, 1
        %s162 = smul.addr %s161, 256
        %s163 = scalar_lea.vmem [#allocation2], %s162
        %p164 = scmp.lt.s32.totalorder %s17, 1
        %s165 = scalar_select %p164, %s17, 1
        %s166 = smul.addr %s165, 54
        %s167 = smul.addr %s166, 4
        %s168 = scalar_lea.vmem %s0, %s167
        %v170 = vld [vmem:[%s2] sm:$0x1]
        %v172 = vlaneseq
        %v173 = vshrl.u32 %v172, 7
        %v174 = vsub.s32 0, %v173
        %v175 = vrot.slane %v170, %v174
        %177 = vst [vmem:[%s163] sm:$0xff] %v175
        %178 = vst [vmem:[%s163 + $0x8] sm:$0xff] %v175
        %179 = vst [vmem:[%s163 + $0x10] sm:$0xff] %v175
        %180 = vst [vmem:[%s163 + $0x18] sm:$0xff] %v175
        %181 = vst [vmem:[%s163 + $0x20] sm:$0xff] %v175
        %182 = vst [vmem:[%s163 + $0x28] sm:$0xff] %v175
        %183 = vst [vmem:[%s163 + $0x30] sm:$0xff] %v175
        %184 = vst [vmem:[%s163 + $0x38] sm:$0xff] %v175
        %185 = vst [vmem:[%s163 + $0x40] sm:$0xff] %v175
        %186 = vst [vmem:[%s163 + $0x48] sm:$0xff] %v175
        %187 = vst [vmem:[%s163 + $0x50] sm:$0xff] %v175
        %188 = vst [vmem:[%s163 + $0x58] sm:$0xff] %v175
        %189 = vst [vmem:[%s163 + $0x60] sm:$0xff] %v175
        %190 = vst [vmem:[%s163 + $0x68] sm:$0xff] %v175
        %191 = vst [vmem:[%s163 + $0x70] sm:$0xff] %v175
        %192 = vst [vmem:[%s163 + $0x78] sm:$0xff] %v175
        %193 = vst [vmem:[%s163 + $0x80] sm:$0xff] %v175
        %194 = vst [vmem:[%s163 + $0x88] sm:$0xff] %v175
        %195 = vst [vmem:[%s163 + $0x90] sm:$0xff] %v175
        %196 = vst [vmem:[%s163 + $0x98] sm:$0xff] %v175
        %197 = vst [vmem:[%s163 + $0xa0] sm:$0xff] %v175
        %198 = vst [vmem:[%s163 + $0xa8] sm:$0xff] %v175
        %199 = vst [vmem:[%s163 + $0xb0] sm:$0xff] %v175
        %200 = vst [vmem:[%s163 + $0xb8] sm:$0xff] %v175
        %201 = vst [vmem:[%s163 + $0xc0] sm:$0xff] %v175
        %202 = vst [vmem:[%s163 + $0xc8] sm:$0xff] %v175
        %203 = vst [vmem:[%s163 + $0xd0] sm:$0xff] %v175
        %204 = vst [vmem:[%s163 + $0xd8] sm:$0xff] %v175
        %205 = vst [vmem:[%s163 + $0xe0] sm:$0xff] %v175
        %206 = vst [vmem:[%s163 + $0xe8] sm:$0xff] %v175
        %207 = vst [vmem:[%s163 + $0xf0] sm:$0xff] %v175
        %208 = vst [vmem:[%s163 + $0xf8] sm:$0xff] %v175
        %v209 = vld [vmem:[%s168] sm:$0xf]
        %v210 = vld [vmem:[%s168 + $0x4] sm:$0xf]
        %v211 = vld [vmem:[%s168 + $0xc] sm:$0xf]
        %v212 = vld [vmem:[%s168 + $0x10] sm:$0xf]
        %v213 = vld [vmem:[%s168 + $0x18] sm:$0xf]
        %v214 = vld [vmem:[%s168 + $0x1c] sm:$0xf]
        %v215 = vld [vmem:[%s168 + $0x24] sm:$0xf]
        %v216 = vld [vmem:[%s168 + $0x28] sm:$0xf]
        %v217 = vld [vmem:[%s168 + $0x30] sm:$0xf]
        %v218 = vld [vmem:[%s168 + $0x34] sm:$0xf]
        %v219 = vld [vmem:[%s168 + $0x3c] sm:$0xf]
        %v220 = vld [vmem:[%s168 + $0x40] sm:$0xf]
        %v221 = vld [vmem:[%s168 + $0x48] sm:$0xf]
        %v222 = vld [vmem:[%s168 + $0x4c] sm:$0xf]
        %v223 = vld [vmem:[%s168 + $0x54] sm:$0xf]
        %v224 = vld [vmem:[%s168 + $0x58] sm:$0xf]
        %v225 = vld [vmem:[%s168 + $0x60] sm:$0xf]
        %v226 = vld [vmem:[%s168 + $0x64] sm:$0xf]
        %v227 = vld [vmem:[%s168 + $0x6c] sm:$0xf]
        %v228 = vld [vmem:[%s168 + $0x70] sm:$0xf]
        %v229 = vld [vmem:[%s168 + $0x78] sm:$0xf]
        %v230 = vld [vmem:[%s168 + $0x7c] sm:$0xf]
        %v231 = vld [vmem:[%s168 + $0x84] sm:$0xf]
        %v232 = vld [vmem:[%s168 + $0x88] sm:$0xf]
        %v233 = vld [vmem:[%s168 + $0x90] sm:$0xf]
        %v234 = vld [vmem:[%s168 + $0x94] sm:$0xf]
        %v235 = vld [vmem:[%s168 + $0x9c] sm:$0xf]
        %v236 = vld [vmem:[%s168 + $0xa0] sm:$0xf]
        %v237 = vld [vmem:[%s168 + $0xa8] sm:$0xf]
        %v238 = vld [vmem:[%s168 + $0xac] sm:$0xf]
        %v239 = vld [vmem:[%s168 + $0xb4] sm:$0xf]
        %v240 = vld [vmem:[%s168 + $0xb8] sm:$0xf]
        %v241 = vld [vmem:[%s163] sm:$0xff]
        %v242 = vld [vmem:[%s163 + $0x8] sm:$0xff]
        %v243 = vld [vmem:[%s163 + $0x10] sm:$0xff]
        %v244 = vld [vmem:[%s163 + $0x18] sm:$0xff]
        %v245 = vld [vmem:[%s163 + $0x20] sm:$0xff]
        %v246 = vld [vmem:[%s163 + $0x28] sm:$0xff]
        %v247 = vld [vmem:[%s163 + $0x30] sm:$0xff]
        %v248 = vld [vmem:[%s163 + $0x38] sm:$0xff]
        %v249 = vld [vmem:[%s163 + $0x40] sm:$0xff]
        %v250 = vld [vmem:[%s163 + $0x48] sm:$0xff]
        %v251 = vld [vmem:[%s163 + $0x50] sm:$0xff]
        %v252 = vld [vmem:[%s163 + $0x58] sm:$0xff]
        %v253 = vld [vmem:[%s163 + $0x60] sm:$0xff]
        %v254 = vld [vmem:[%s163 + $0x68] sm:$0xff]
        %v255 = vld [vmem:[%s163 + $0x70] sm:$0xff]
        %v256 = vld [vmem:[%s163 + $0x78] sm:$0xff]
        %v257 = vld [vmem:[%s163 + $0x80] sm:$0xff]
        %v258 = vld [vmem:[%s163 + $0x88] sm:$0xff]
        %v259 = vld [vmem:[%s163 + $0x90] sm:$0xff]
        %v260 = vld [vmem:[%s163 + $0x98] sm:$0xff]
        %v261 = vld [vmem:[%s163 + $0xa0] sm:$0xff]
        %v262 = vld [vmem:[%s163 + $0xa8] sm:$0xff]
        %v263 = vld [vmem:[%s163 + $0xb0] sm:$0xff]
        %v264 = vld [vmem:[%s163 + $0xb8] sm:$0xff]
        %v265 = vld [vmem:[%s163 + $0xc0] sm:$0xff]
        %v266 = vld [vmem:[%s163 + $0xc8] sm:$0xff]
        %v267 = vld [vmem:[%s163 + $0xd0] sm:$0xff]
        %v268 = vld [vmem:[%s163 + $0xd8] sm:$0xff]
        %v269 = vld [vmem:[%s163 + $0xe0] sm:$0xff]
        %v270 = vld [vmem:[%s163 + $0xe8] sm:$0xff]
        %v271 = vld [vmem:[%s163 + $0xf0] sm:$0xff]
        %v272 = vld [vmem:[%s163 + $0xf8] sm:$0xff]
        %v273 = vld [vmem:[%s1] sm:$0x3]
        %v306 = vunpack.c.l.b16 %v209
        %v307 = vunpack.c.l.b16 %v210
        %v308 = vunpack.c.l.b16 %v211
        %v309 = vunpack.c.l.b16 %v212
        %v310 = vunpack.c.l.b16 %v213
        %v311 = vunpack.c.l.b16 %v214
        %v312 = vunpack.c.l.b16 %v215
        %v313 = vunpack.c.l.b16 %v216
        %v314 = vunpack.c.l.b16 %v217
        %v315 = vunpack.c.l.b16 %v218
        %v316 = vunpack.c.l.b16 %v219
        %v317 = vunpack.c.l.b16 %v220
        %v318 = vunpack.c.l.b16 %v221
        %v319 = vunpack.c.l.b16 %v222
        %v320 = vunpack.c.l.b16 %v223
        %v321 = vunpack.c.l.b16 %v224
        %v322 = vunpack.c.l.b16 %v225
        %v323 = vunpack.c.l.b16 %v226
        %v324 = vunpack.c.l.b16 %v227
        %v325 = vunpack.c.l.b16 %v228
        %v326 = vunpack.c.l.b16 %v229
        %v327 = vunpack.c.l.b16 %v230
        %v328 = vunpack.c.l.b16 %v231
        %v329 = vunpack.c.l.b16 %v232
        %v330 = vunpack.c.l.b16 %v233
        %v331 = vunpack.c.l.b16 %v234
        %v332 = vunpack.c.l.b16 %v235
        %v333 = vunpack.c.l.b16 %v236
        %v334 = vunpack.c.l.b16 %v237
        %v335 = vunpack.c.l.b16 %v238
        %v336 = vunpack.c.l.b16 %v239
        %v337 = vunpack.c.l.b16 %v240
        %v338 = vpack.c.b16 %v307, %v306
        %v339 = vpack.c.b16 %v309, %v308
        %v340 = vpack.c.b16 %v311, %v310
        %v341 = vpack.c.b16 %v313, %v312
        %v342 = vpack.c.b16 %v315, %v314
        %v343 = vpack.c.b16 %v317, %v316
        %v344 = vpack.c.b16 %v319, %v318
        %v345 = vpack.c.b16 %v321, %v320
        %v346 = vpack.c.b16 %v323, %v322
        %v347 = vpack.c.b16 %v325, %v324
        %v348 = vpack.c.b16 %v327, %v326
        %v349 = vpack.c.b16 %v329, %v328
        %v350 = vpack.c.b16 %v331, %v330
        %v351 = vpack.c.b16 %v333, %v332
        %v352 = vpack.c.b16 %v335, %v334
        %v353 = vpack.c.b16 %v337, %v336
        %vm354 = vcmask 31744
        %v356 = vsel %vm354, %v338, 0
        %v359 = vsel %vm354, %v339, 0
        %v362 = vsel %vm354, %v340, 0
        %v365 = vsel %vm354, %v341, 0
        %v368 = vsel %vm354, %v342, 0
        %v371 = vsel %vm354, %v343, 0
        %v374 = vsel %vm354, %v344, 0
        %v377 = vsel %vm354, %v345, 0
        %v380 = vsel %vm354, %v346, 0
        %v383 = vsel %vm354, %v347, 0
        %v386 = vsel %vm354, %v348, 0
        %v389 = vsel %vm354, %v349, 0
        %v392 = vsel %vm354, %v350, 0
        %v395 = vsel %vm354, %v351, 0
        %v398 = vsel %vm354, %v352, 0
        %v401 = vsel %vm354, %v353, 0
        %vm403 = vcmask 1041408
        %v405 = vsel %vm403, %v273, 0
        %407 = vmatprep.subr.bf16.mxu0 0
        %408 = vmatpush1.bf16.msra.mxu0 0
        %409 = vmatprep.subr.bf16.mxu0 0
        %410 = vmatpush1.bf16.msra.mxu0 0
        %411 = vmatprep.subr.bf16.mxu0 0
        %412 = vmatpush1.bf16.msra.mxu0 0
        %413 = vmatprep.subr.bf16.mxu0 0
        %414 = vmatpush1.bf16.msra.mxu0 0
        %415 = vmatprep.subr.bf16.mxu0 0
        %416 = vmatpush1.bf16.msra.mxu0 0
        %417 = vmatprep.subr.bf16.mxu0 0
        %418 = vmatpush1.bf16.msra.mxu0 0
        %419 = vmatprep.subr.bf16.mxu0 0
        %420 = vmatpush1.bf16.msra.mxu0 0
        %421 = vmatprep.subr.bf16.mxu0 0
        %422 = vmatpush1.bf16.msra.mxu0 %v405
        %423 = vmatprep.subr.bf16.mxu0 0
        %424 = vmatpush2.bf16.msra.mxu0 0
        %425 = vmatprep.subr.bf16.mxu0 0
        %426 = vmatpush2.bf16.msra.mxu0 0
        %427 = vmatprep.subr.bf16.mxu0 0
        %428 = vmatpush2.bf16.msra.mxu0 0
        %429 = vmatprep.subr.bf16.mxu0 0
        %430 = vmatpush2.bf16.msra.mxu0 0
        %431 = vmatprep.subr.bf16.mxu0 0
        %432 = vmatpush2.bf16.msra.mxu0 0
        %433 = vmatprep.subr.bf16.mxu0 0
        %434 = vmatpush2.bf16.msra.mxu0 0
        %435 = vmatprep.subr.bf16.mxu0 0
        %436 = vmatpush2.bf16.msra.mxu0 0
        %437 = vmatprep.subr.bf16.mxu0 0
        %438 = vmatpush2.bf16.msra.mxu0 0
        %439 = vmatprep.mubr.bf16.mxu0 0
        %440 = vmatmul.mubr.bf16.gmra.mxu0 %v356
        %v441 = vpop.f32.mrf.mxu0
        %v442 = vadd.f32 0.0, %v441
        %v443 = vpop.f32.mrf.mxu0
        %v444 = vpop.f32.mrf.mxu0
        %v445 = vadd.f32 0.0, %v444
        %v446 = vpop.f32.mrf.mxu0
        %447 = vmatprep.mubr.bf16.mxu0 0
        %448 = vmatmul.mubr.bf16.gmra.mxu0 %v359
        %v449 = vpop.f32.mrf.mxu0
        %v450 = vadd.f32 0.0, %v449
        %v451 = vpop.f32.mrf.mxu0
        %v452 = vpop.f32.mrf.mxu0
        %v453 = vadd.f32 0.0, %v452
        %v454 = vpop.f32.mrf.mxu0
        %455 = vmatprep.mubr.bf16.mxu0 0
        %456 = vmatmul.mubr.bf16.gmra.mxu0 %v362
        %v457 = vpop.f32.mrf.mxu0
        %v458 = vadd.f32 0.0, %v457
        %v459 = vpop.f32.mrf.mxu0
        %v460 = vpop.f32.mrf.mxu0
        %v461 = vadd.f32 0.0, %v460
        %v462 = vpop.f32.mrf.mxu0
        %463 = vmatprep.mubr.bf16.mxu0 0
        %464 = vmatmul.mubr.bf16.gmra.mxu0 %v365
        %v465 = vpop.f32.mrf.mxu0
        %v466 = vadd.f32 0.0, %v465
        %v467 = vpop.f32.mrf.mxu0
        %v468 = vpop.f32.mrf.mxu0
        %v469 = vadd.f32 0.0, %v468
        %v470 = vpop.f32.mrf.mxu0
        %471 = vmatprep.mubr.bf16.mxu0 0
        %472 = vmatmul.mubr.bf16.gmra.mxu0 %v368
        %v473 = vpop.f32.mrf.mxu0
        %v474 = vadd.f32 0.0, %v473
        %v475 = vpop.f32.mrf.mxu0
        %v476 = vpop.f32.mrf.mxu0
        %v477 = vadd.f32 0.0, %v476
        %v478 = vpop.f32.mrf.mxu0
        %479 = vmatprep.mubr.bf16.mxu0 0
        %480 = vmatmul.mubr.bf16.gmra.mxu0 %v371
        %v481 = vpop.f32.mrf.mxu0
        %v482 = vadd.f32 0.0, %v481
        %v483 = vpop.f32.mrf.mxu0
        %v484 = vpop.f32.mrf.mxu0
        %v485 = vadd.f32 0.0, %v484
        %v486 = vpop.f32.mrf.mxu0
        %487 = vmatprep.mubr.bf16.mxu0 0
        %488 = vmatmul.mubr.bf16.gmra.mxu0 %v374
        %v489 = vpop.f32.mrf.mxu0
        %v490 = vadd.f32 0.0, %v489
        %v491 = vpop.f32.mrf.mxu0
        %v492 = vpop.f32.mrf.mxu0
        %v493 = vadd.f32 0.0, %v492
        %v494 = vpop.f32.mrf.mxu0
        %495 = vmatprep.mubr.bf16.mxu0 0
        %496 = vmatmul.mubr.bf16.gmra.mxu0 %v377
        %v497 = vpop.f32.mrf.mxu0
        %v498 = vadd.f32 0.0, %v497
        %v499 = vpop.f32.mrf.mxu0
        %v500 = vpop.f32.mrf.mxu0
        %v501 = vadd.f32 0.0, %v500
        %v502 = vpop.f32.mrf.mxu0
        %503 = vmatprep.mubr.bf16.mxu0 0
        %504 = vmatmul.mubr.bf16.gmra.mxu0 %v380
        %v505 = vpop.f32.mrf.mxu0
        %v506 = vadd.f32 0.0, %v505
        %v507 = vpop.f32.mrf.mxu0
        %v508 = vpop.f32.mrf.mxu0
        %v509 = vadd.f32 0.0, %v508
        %v510 = vpop.f32.mrf.mxu0
        %511 = vmatprep.mubr.bf16.mxu0 0
        %512 = vmatmul.mubr.bf16.gmra.mxu0 %v383
        %v513 = vpop.f32.mrf.mxu0
        %v514 = vadd.f32 0.0, %v513
        %v515 = vpop.f32.mrf.mxu0
        %v516 = vpop.f32.mrf.mxu0
        %v517 = vadd.f32 0.0, %v516
        %v518 = vpop.f32.mrf.mxu0
        %519 = vmatprep.mubr.bf16.mxu0 0
        %520 = vmatmul.mubr.bf16.gmra.mxu0 %v386
        %v521 = vpop.f32.mrf.mxu0
        %v522 = vadd.f32 0.0, %v521
        %v523 = vpop.f32.mrf.mxu0
        %v524 = vpop.f32.mrf.mxu0
        %v525 = vadd.f32 0.0, %v524
        %v526 = vpop.f32.mrf.mxu0
        %527 = vmatprep.mubr.bf16.mxu0 0
        %528 = vmatmul.mubr.bf16.gmra.mxu0 %v389
        %v529 = vpop.f32.mrf.mxu0
        %v530 = vadd.f32 0.0, %v529
        %v531 = vpop.f32.mrf.mxu0
        %v532 = vpop.f32.mrf.mxu0
        %v533 = vadd.f32 0.0, %v532
        %v534 = vpop.f32.mrf.mxu0
        %535 = vmatprep.mubr.bf16.mxu0 0
        %536 = vmatmul.mubr.bf16.gmra.mxu0 %v392
        %v537 = vpop.f32.mrf.mxu0
        %v538 = vadd.f32 0.0, %v537
        %v539 = vpop.f32.mrf.mxu0
        %v540 = vpop.f32.mrf.mxu0
        %v541 = vadd.f32 0.0, %v540
        %v542 = vpop.f32.mrf.mxu0
        %543 = vmatprep.mubr.bf16.mxu0 0
        %544 = vmatmul.mubr.bf16.gmra.mxu0 %v395
        %v545 = vpop.f32.mrf.mxu0
        %v546 = vadd.f32 0.0, %v545
        %v547 = vpop.f32.mrf.mxu0
        %v548 = vpop.f32.mrf.mxu0
        %v549 = vadd.f32 0.0, %v548
        %v550 = vpop.f32.mrf.mxu0
        %551 = vmatprep.mubr.bf16.mxu0 0
        %552 = vmatmul.mubr.bf16.gmra.mxu0 %v398
        %v553 = vpop.f32.mrf.mxu0
        %v554 = vadd.f32 0.0, %v553
        %v555 = vpop.f32.mrf.mxu0
        %v556 = vpop.f32.mrf.mxu0
        %v557 = vadd.f32 0.0, %v556
        %v558 = vpop.f32.mrf.mxu0
        %559 = vmatprep.mubr.bf16.mxu0 0
        %560 = vmatmul.mubr.bf16.gmra.mxu0 %v401
        %v561 = vpop.f32.mrf.mxu0
        %v562 = vadd.f32 0.0, %v561
        %v563 = vpop.f32.mrf.mxu0
        %v564 = vpop.f32.mrf.mxu0
        %v565 = vadd.f32 0.0, %v564
        %v566 = vpop.f32.mrf.mxu0
        %567 = vdwg.mxu0
        %v568 = vadd.f32 %v241, %v442
        %v569 = vadd.f32 %v242, %v445
        %v570 = vadd.f32 %v243, %v450
        %v571 = vadd.f32 %v244, %v453
        %v572 = vadd.f32 %v245, %v458
        %v573 = vadd.f32 %v246, %v461
        %v574 = vadd.f32 %v247, %v466
        %v575 = vadd.f32 %v248, %v469
        %v576 = vadd.f32 %v249, %v474
        %v577 = vadd.f32 %v250, %v477
        %v578 = vadd.f32 %v251, %v482
        %v579 = vadd.f32 %v252, %v485
        %v580 = vadd.f32 %v253, %v490
        %v581 = vadd.f32 %v254, %v493
        %v582 = vadd.f32 %v255, %v498
        %v583 = vadd.f32 %v256, %v501
        %v584 = vadd.f32 %v257, %v506
        %v585 = vadd.f32 %v258, %v509
        %v586 = vadd.f32 %v259, %v514
        %v587 = vadd.f32 %v260, %v517
        %v588 = vadd.f32 %v261, %v522
        %v589 = vadd.f32 %v262, %v525
        %v590 = vadd.f32 %v263, %v530
        %v591 = vadd.f32 %v264, %v533
        %v592 = vadd.f32 %v265, %v538
        %v593 = vadd.f32 %v266, %v541
        %v594 = vadd.f32 %v267, %v546
        %v595 = vadd.f32 %v268, %v549
        %v596 = vadd.f32 %v269, %v554
        %v597 = vadd.f32 %v270, %v557
        %v598 = vadd.f32 %v271, %v562
        %v599 = vadd.f32 %v272, %v565
        %600 = vst [vmem:[%s163] sm:$0xff] %v568
        %601 = vst [vmem:[%s163 + $0x8] sm:$0xff] %v569
        %602 = vst [vmem:[%s163 + $0x10] sm:$0xff] %v570
        %603 = vst [vmem:[%s163 + $0x18] sm:$0xff] %v571
        %604 = vst [vmem:[%s163 + $0x20] sm:$0xff] %v572
        %605 = vst [vmem:[%s163 + $0x28] sm:$0xff] %v573
        %606 = vst [vmem:[%s163 + $0x30] sm:$0xff] %v574
        %607 = vst [vmem:[%s163 + $0x38] sm:$0xff] %v575
        %608 = vst [vmem:[%s163 + $0x40] sm:$0xff] %v576
        %609 = vst [vmem:[%s163 + $0x48] sm:$0xff] %v577
        %610 = vst [vmem:[%s163 + $0x50] sm:$0xff] %v578
        %611 = vst [vmem:[%s163 + $0x58] sm:$0xff] %v579
        %612 = vst [vmem:[%s163 + $0x60] sm:$0xff] %v580
        %613 = vst [vmem:[%s163 + $0x68] sm:$0xff] %v581
        %614 = vst [vmem:[%s163 + $0x70] sm:$0xff] %v582
        %615 = vst [vmem:[%s163 + $0x78] sm:$0xff] %v583
        %616 = vst [vmem:[%s163 + $0x80] sm:$0xff] %v584
        %617 = vst [vmem:[%s163 + $0x88] sm:$0xff] %v585
        %618 = vst [vmem:[%s163 + $0x90] sm:$0xff] %v586
        %619 = vst [vmem:[%s163 + $0x98] sm:$0xff] %v587
        %620 = vst [vmem:[%s163 + $0xa0] sm:$0xff] %v588
        %621 = vst [vmem:[%s163 + $0xa8] sm:$0xff] %v589
        %622 = vst [vmem:[%s163 + $0xb0] sm:$0xff] %v590
        %623 = vst [vmem:[%s163 + $0xb8] sm:$0xff] %v591
        %624 = vst [vmem:[%s163 + $0xc0] sm:$0xff] %v592
        %625 = vst [vmem:[%s163 + $0xc8] sm:$0xff] %v593
        %626 = vst [vmem:[%s163 + $0xd0] sm:$0xff] %v594
        %627 = vst [vmem:[%s163 + $0xd8] sm:$0xff] %v595
        %628 = vst [vmem:[%s163 + $0xe0] sm:$0xff] %v596
        %629 = vst [vmem:[%s163 + $0xe8] sm:$0xff] %v597
        %630 = vst [vmem:[%s163 + $0xf0] sm:$0xff] %v598
        %631 = vst [vmem:[%s163 + $0xf8] sm:$0xff] %v599
        %v632 = vld [vmem:[%s168] sm:$0xf]
        %v633 = vld [vmem:[%s168 + $0x4] sm:$0xf]
        %v634 = vld [vmem:[%s168 + $0x8] sm:$0x1]
        %v635 = vld [vmem:[%s168 + $0xc] sm:$0xf]
        %v636 = vld [vmem:[%s168 + $0x10] sm:$0xf]
        %v637 = vld [vmem:[%s168 + $0x14] sm:$0x1]
        %v638 = vld [vmem:[%s168 + $0x18] sm:$0xf]
        %v639 = vld [vmem:[%s168 + $0x1c] sm:$0xf]
        %v640 = vld [vmem:[%s168 + $0x20] sm:$0x1]
        %v641 = vld [vmem:[%s168 + $0x24] sm:$0xf]
        %v642 = vld [vmem:[%s168 + $0x28] sm:$0xf]
        %v643 = vld [vmem:[%s168 + $0x2c] sm:$0x1]
        %v644 = vld [vmem:[%s168 + $0x30] sm:$0xf]
        %v645 = vld [vmem:[%s168 + $0x34] sm:$0xf]
        %v646 = vld [vmem:[%s168 + $0x38] sm:$0x1]
        %v647 = vld [vmem:[%s168 + $0x3c] sm:$0xf]
        %v648 = vld [vmem:[%s168 + $0x40] sm:$0xf]
        %v649 = vld [vmem:[%s168 + $0x44] sm:$0x1]
        %v650 = vld [vmem:[%s168 + $0x48] sm:$0xf]
        %v651 = vld [vmem:[%s168 + $0x4c] sm:$0xf]
        %v652 = vld [vmem:[%s168 + $0x50] sm:$0x1]
        %v653 = vld [vmem:[%s168 + $0x54] sm:$0xf]
        %v654 = vld [vmem:[%s168 + $0x58] sm:$0xf]
        %v655 = vld [vmem:[%s168 + $0x5c] sm:$0x1]
        %v656 = vld [vmem:[%s168 + $0x60] sm:$0xf]
        %v657 = vld [vmem:[%s168 + $0x64] sm:$0xf]
        %v658 = vld [vmem:[%s168 + $0x68] sm:$0x1]
        %v659 = vld [vmem:[%s168 + $0x6c] sm:$0xf]
        %v660 = vld [vmem:[%s168 + $0x70] sm:$0xf]
        %v661 = vld [vmem:[%s168 + $0x74] sm:$0x1]
        %v662 = vld [vmem:[%s168 + $0x78] sm:$0xf]
        %v663 = vld [vmem:[%s168 + $0x7c] sm:$0xf]
        %v664 = vld [vmem:[%s168 + $0x80] sm:$0x1]
        %v665 = vld [vmem:[%s168 + $0x84] sm:$0xf]
        %v666 = vld [vmem:[%s168 + $0x88] sm:$0xf]
        %v667 = vld [vmem:[%s168 + $0x8c] sm:$0x1]
        %v668 = vld [vmem:[%s168 + $0x90] sm:$0xf]
        %v669 = vld [vmem:[%s168 + $0x94] sm:$0xf]
        %v670 = vld [vmem:[%s168 + $0x98] sm:$0x1]
        %v671 = vld [vmem:[%s168 + $0x9c] sm:$0xf]
        %v672 = vld [vmem:[%s168 + $0xa0] sm:$0xf]
        %v673 = vld [vmem:[%s168 + $0xa4] sm:$0x1]
        %v674 = vld [vmem:[%s168 + $0xa8] sm:$0xf]
        %v675 = vld [vmem:[%s168 + $0xac] sm:$0xf]
        %v676 = vld [vmem:[%s168 + $0xb0] sm:$0x1]
        %v677 = vld [vmem:[%s168 + $0xb4] sm:$0xf]
        %v678 = vld [vmem:[%s168 + $0xb8] sm:$0xf]
        %v679 = vld [vmem:[%s168 + $0xbc] sm:$0x1]
        %vm680 = vsmask.f32 3328
        %vm681 = vsmask.f32 7440
        %vm682 = vmor %vm680, %vm681
        %v684 = vshrl.u32 %v632, 16
        %v686 = vrot.slane %v684, 4
        %v687 = vshll.u32 %v632, 16
        %v689 = vrot.slane %v687, 5
        %v690 = vor.u32 %v686, %v689
        %v691 = vrot.slane %v690, 4
        %v693 = vshll.u32 %v633, 16
        %v695 = vrot.slane %v693, 5
        %v696 = vsel %vm682, %v691, %v695
        %v697 = vshrl.u32 %v633, 16
        %v699 = vrot.slane %v697, 4
        %v700 = vor.u32 %v699, %v695
        %v701 = vrot.slane %v700, 4
        %v703 = vshll.u32 %v634, 16
        %v705 = vrot.slane %v703, 5
        %v706 = vsel %vm682, %v701, %v705
        %v708 = vshrl.u32 %v635, 16
        %v710 = vrot.slane %v708, 4
        %v711 = vshll.u32 %v635, 16
        %v713 = vrot.slane %v711, 5
        %v714 = vor.u32 %v710, %v713
        %v715 = vrot.slane %v714, 4
        %v717 = vshll.u32 %v636, 16
        %v719 = vrot.slane %v717, 5
        %v720 = vsel %vm682, %v715, %v719
        %v721 = vshrl.u32 %v636, 16
        %v723 = vrot.slane %v721, 4
        %v724 = vor.u32 %v723, %v719
        %v725 = vrot.slane %v724, 4
        %v727 = vshll.u32 %v637, 16
        %v729 = vrot.slane %v727, 5
        %v730 = vsel %vm682, %v725, %v729
        %v732 = vshrl.u32 %v638, 16
        %v734 = vrot.slane %v732, 4
        %v735 = vshll.u32 %v638, 16
        %v737 = vrot.slane %v735, 5
        %v738 = vor.u32 %v734, %v737
        %v739 = vrot.slane %v738, 4
        %v741 = vshll.u32 %v639, 16
        %v743 = vrot.slane %v741, 5
        %v744 = vsel %vm682, %v739, %v743
        %v745 = vshrl.u32 %v639, 16
        %v747 = vrot.slane %v745, 4
        %v748 = vor.u32 %v747, %v743
        %v749 = vrot.slane %v748, 4
        %v751 = vshll.u32 %v640, 16
        %v753 = vrot.slane %v751, 5
        %v754 = vsel %vm682, %v749, %v753
        %v756 = vshrl.u32 %v641, 16
        %v758 = vrot.slane %v756, 4
        %v759 = vshll.u32 %v641, 16
        %v761 = vrot.slane %v759, 5
        %v762 = vor.u32 %v758, %v761
        %v763 = vrot.slane %v762, 4
        %v765 = vshll.u32 %v642, 16
        %v767 = vrot.slane %v765, 5
        %v768 = vsel %vm682, %v763, %v767
        %v769 = vshrl.u32 %v642, 16
        %v771 = vrot.slane %v769, 4
        %v772 = vor.u32 %v771, %v767
        %v773 = vrot.slane %v772, 4
        %v775 = vshll.u32 %v643, 16
        %v777 = vrot.slane %v775, 5
        %v778 = vsel %vm682, %v773, %v777
        %v780 = vshrl.u32 %v644, 16
        %v782 = vrot.slane %v780, 4
        %v783 = vshll.u32 %v644, 16
        %v785 = vrot.slane %v783, 5
        %v786 = vor.u32 %v782, %v785
        %v787 = vrot.slane %v786, 4
        %v789 = vshll.u32 %v645, 16
        %v791 = vrot.slane %v789, 5
        %v792 = vsel %vm682, %v787, %v791
        %v793 = vshrl.u32 %v645, 16
        %v795 = vrot.slane %v793, 4
        %v796 = vor.u32 %v795, %v791
        %v797 = vrot.slane %v796, 4
        %v799 = vshll.u32 %v646, 16
        %v801 = vrot.slane %v799, 5
        %v802 = vsel %vm682, %v797, %v801
        %v804 = vshrl.u32 %v647, 16
        %v806 = vrot.slane %v804, 4
        %v807 = vshll.u32 %v647, 16
        %v809 = vrot.slane %v807, 5
        %v810 = vor.u32 %v806, %v809
        %v811 = vrot.slane %v810, 4
        %v813 = vshll.u32 %v648, 16
        %v815 = vrot.slane %v813, 5
        %v816 = vsel %vm682, %v811, %v815
        %v817 = vshrl.u32 %v648, 16
        %v819 = vrot.slane %v817, 4
        %v820 = vor.u32 %v819, %v815
        %v821 = vrot.slane %v820, 4
        %v823 = vshll.u32 %v649, 16
        %v825 = vrot.slane %v823, 5
        %v826 = vsel %vm682, %v821, %v825
        %v828 = vshrl.u32 %v650, 16
        %v830 = vrot.slane %v828, 4
        %v831 = vshll.u32 %v650, 16
        %v833 = vrot.slane %v831, 5
        %v834 = vor.u32 %v830, %v833
        %v835 = vrot.slane %v834, 4
        %v837 = vshll.u32 %v651, 16
        %v839 = vrot.slane %v837, 5
        %v840 = vsel %vm682, %v835, %v839
        %v841 = vshrl.u32 %v651, 16
        %v843 = vrot.slane %v841, 4
        %v844 = vor.u32 %v843, %v839
        %v845 = vrot.slane %v844, 4
        %v847 = vshll.u32 %v652, 16
        %v849 = vrot.slane %v847, 5
        %v850 = vsel %vm682, %v845, %v849
        %v852 = vshrl.u32 %v653, 16
        %v854 = vrot.slane %v852, 4
        %v855 = vshll.u32 %v653, 16
        %v857 = vrot.slane %v855, 5
        %v858 = vor.u32 %v854, %v857
        %v859 = vrot.slane %v858, 4
        %v861 = vshll.u32 %v654, 16
        %v863 = vrot.slane %v861, 5
        %v864 = vsel %vm682, %v859, %v863
        %v865 = vshrl.u32 %v654, 16
        %v867 = vrot.slane %v865, 4
        %v868 = vor.u32 %v867, %v863
        %v869 = vrot.slane %v868, 4
        %v871 = vshll.u32 %v655, 16
        %v873 = vrot.slane %v871, 5
        %v874 = vsel %vm682, %v869, %v873
        %v876 = vshrl.u32 %v656, 16
        %v878 = vrot.slane %v876, 4
        %v879 = vshll.u32 %v656, 16
        %v881 = vrot.slane %v879, 5
        %v882 = vor.u32 %v878, %v881
        %v883 = vrot.slane %v882, 4
        %v885 = vshll.u32 %v657, 16
        %v887 = vrot.slane %v885, 5
        %v888 = vsel %vm682, %v883, %v887
        %v889 = vshrl.u32 %v657, 16
        %v891 = vrot.slane %v889, 4
        %v892 = vor.u32 %v891, %v887
        %v893 = vrot.slane %v892, 4
        %v895 = vshll.u32 %v658, 16
        %v897 = vrot.slane %v895, 5
        %v898 = vsel %vm682, %v893, %v897
        %v900 = vshrl.u32 %v659, 16
        %v902 = vrot.slane %v900, 4
        %v903 = vshll.u32 %v659, 16
        %v905 = vrot.slane %v903, 5
        %v906 = vor.u32 %v902, %v905
        %v907 = vrot.slane %v906, 4
        %v909 = vshll.u32 %v660, 16
        %v911 = vrot.slane %v909, 5
        %v912 = vsel %vm682, %v907, %v911
        %v913 = vshrl.u32 %v660, 16
        %v915 = vrot.slane %v913, 4
        %v916 = vor.u32 %v915, %v911
        %v917 = vrot.slane %v916, 4
        %v919 = vshll.u32 %v661, 16
        %v921 = vrot.slane %v919, 5
        %v922 = vsel %vm682, %v917, %v921
        %v924 = vshrl.u32 %v662, 16
        %v926 = vrot.slane %v924, 4
        %v927 = vshll.u32 %v662, 16
        %v929 = vrot.slane %v927, 5
        %v930 = vor.u32 %v926, %v929
        %v931 = vrot.slane %v930, 4
        %v933 = vshll.u32 %v663, 16
        %v935 = vrot.slane %v933, 5
        %v936 = vsel %vm682, %v931, %v935
        %v937 = vshrl.u32 %v663, 16
        %v939 = vrot.slane %v937, 4
        %v940 = vor.u32 %v939, %v935
        %v941 = vrot.slane %v940, 4
        %v943 = vshll.u32 %v664, 16
        %v945 = vrot.slane %v943, 5
        %v946 = vsel %vm682, %v941, %v945
        %v948 = vshrl.u32 %v665, 16
        %v950 = vrot.slane %v948, 4
        %v951 = vshll.u32 %v665, 16
        %v953 = vrot.slane %v951, 5
        %v954 = vor.u32 %v950, %v953
        %v955 = vrot.slane %v954, 4
        %v957 = vshll.u32 %v666, 16
        %v959 = vrot.slane %v957, 5
        %v960 = vsel %vm682, %v955, %v959
        %v961 = vshrl.u32 %v666, 16
        %v963 = vrot.slane %v961, 4
        %v964 = vor.u32 %v963, %v959
        %v965 = vrot.slane %v964, 4
        %v967 = vshll.u32 %v667, 16
        %v969 = vrot.slane %v967, 5
        %v970 = vsel %vm682, %v965, %v969
        %v972 = vshrl.u32 %v668, 16
        %v974 = vrot.slane %v972, 4
        %v975 = vshll.u32 %v668, 16
        %v977 = vrot.slane %v975, 5
        %v978 = vor.u32 %v974, %v977
        %v979 = vrot.slane %v978, 4
        %v981 = vshll.u32 %v669, 16
        %v983 = vrot.slane %v981, 5
        %v984 = vsel %vm682, %v979, %v983
        %v985 = vshrl.u32 %v669, 16
        %v987 = vrot.slane %v985, 4
        %v988 = vor.u32 %v987, %v983
        %v989 = vrot.slane %v988, 4
        %v991 = vshll.u32 %v670, 16
        %v993 = vrot.slane %v991, 5
        %v994 = vsel %vm682, %v989, %v993
        %v996 = vshrl.u32 %v671, 16
        %v998 = vrot.slane %v996, 4
        %v999 = vshll.u32 %v671, 16
        %v1001 = vrot.slane %v999, 5
        %v1002 = vor.u32 %v998, %v1001
        %v1003 = vrot.slane %v1002, 4
        %v1005 = vshll.u32 %v672, 16
        %v1007 = vrot.slane %v1005, 5
        %v1008 = vsel %vm682, %v1003, %v1007
        %v1009 = vshrl.u32 %v672, 16
        %v1011 = vrot.slane %v1009, 4
        %v1012 = vor.u32 %v1011, %v1007
        %v1013 = vrot.slane %v1012, 4
        %v1015 = vshll.u32 %v673, 16
        %v1017 = vrot.slane %v1015, 5
        %v1018 = vsel %vm682, %v1013, %v1017
        %v1020 = vshrl.u32 %v674, 16
        %v1022 = vrot.slane %v1020, 4
        %v1023 = vshll.u32 %v674, 16
        %v1025 = vrot.slane %v1023, 5
        %v1026 = vor.u32 %v1022, %v1025
        %v1027 = vrot.slane %v1026, 4
        %v1029 = vshll.u32 %v675, 16
        %v1031 = vrot.slane %v1029, 5
        %v1032 = vsel %vm682, %v1027, %v1031
        %v1033 = vshrl.u32 %v675, 16
        %v1035 = vrot.slane %v1033, 4
        %v1036 = vor.u32 %v1035, %v1031
        %v1037 = vrot.slane %v1036, 4
        %v1039 = vshll.u32 %v676, 16
        %v1041 = vrot.slane %v1039, 5
        %v1042 = vsel %vm682, %v1037, %v1041
        %v1044 = vshrl.u32 %v677, 16
        %v1046 = vrot.slane %v1044, 4
        %v1047 = vshll.u32 %v677, 16
        %v1049 = vrot.slane %v1047, 5
        %v1050 = vor.u32 %v1046, %v1049
        %v1051 = vrot.slane %v1050, 4
        %v1053 = vshll.u32 %v678, 16
        %v1055 = vrot.slane %v1053, 5
        %v1056 = vsel %vm682, %v1051, %v1055
        %v1057 = vshrl.u32 %v678, 16
        %v1059 = vrot.slane %v1057, 4
        %v1060 = vor.u32 %v1059, %v1055
        %v1061 = vrot.slane %v1060, 4
        %v1063 = vshll.u32 %v679, 16
        %v1065 = vrot.slane %v1063, 5
        %v1066 = vsel %vm682, %v1061, %v1065
        %v1067 = vld [vmem:[%s163] sm:$0xff]
        %v1068 = vld [vmem:[%s163 + $0x8] sm:$0xff]
        %v1069 = vld [vmem:[%s163 + $0x10] sm:$0xff]
        %v1070 = vld [vmem:[%s163 + $0x18] sm:$0xff]
        %v1071 = vld [vmem:[%s163 + $0x20] sm:$0xff]
        %v1072 = vld [vmem:[%s163 + $0x28] sm:$0xff]
        %v1073 = vld [vmem:[%s163 + $0x30] sm:$0xff]
        %v1074 = vld [vmem:[%s163 + $0x38] sm:$0xff]
        %v1075 = vld [vmem:[%s163 + $0x40] sm:$0xff]
        %v1076 = vld [vmem:[%s163 + $0x48] sm:$0xff]
        %v1077 = vld [vmem:[%s163 + $0x50] sm:$0xff]
        %v1078 = vld [vmem:[%s163 + $0x58] sm:$0xff]
        %v1079 = vld [vmem:[%s163 + $0x60] sm:$0xff]
        %v1080 = vld [vmem:[%s163 + $0x68] sm:$0xff]
        %v1081 = vld [vmem:[%s163 + $0x70] sm:$0xff]
        %v1082 = vld [vmem:[%s163 + $0x78] sm:$0xff]
        %v1083 = vld [vmem:[%s163 + $0x80] sm:$0xff]
        %v1084 = vld [vmem:[%s163 + $0x88] sm:$0xff]
        %v1085 = vld [vmem:[%s163 + $0x90] sm:$0xff]
        %v1086 = vld [vmem:[%s163 + $0x98] sm:$0xff]
        %v1087 = vld [vmem:[%s163 + $0xa0] sm:$0xff]
        %v1088 = vld [vmem:[%s163 + $0xa8] sm:$0xff]
        %v1089 = vld [vmem:[%s163 + $0xb0] sm:$0xff]
        %v1090 = vld [vmem:[%s163 + $0xb8] sm:$0xff]
        %v1091 = vld [vmem:[%s163 + $0xc0] sm:$0xff]
        %v1092 = vld [vmem:[%s163 + $0xc8] sm:$0xff]
        %v1093 = vld [vmem:[%s163 + $0xd0] sm:$0xff]
        %v1094 = vld [vmem:[%s163 + $0xd8] sm:$0xff]
        %v1095 = vld [vmem:[%s163 + $0xe0] sm:$0xff]
        %v1096 = vld [vmem:[%s163 + $0xe8] sm:$0xff]
        %v1097 = vld [vmem:[%s163 + $0xf0] sm:$0xff]
        %v1098 = vld [vmem:[%s163 + $0xf8] sm:$0xff]
        %s1099 = scalar_lea.vmem %s1, 2
        %v1100 = vld [vmem:[%s1099] sm:$0x3]
        %v1101 = vunpack.c.l.b16 %v696
        %v1102 = vunpack.c.l.b16 %v706
        %v1103 = vunpack.c.l.b16 %v720
        %v1104 = vunpack.c.l.b16 %v730
        %v1105 = vunpack.c.l.b16 %v744
        %v1106 = vunpack.c.l.b16 %v754
        %v1107 = vunpack.c.l.b16 %v768
        %v1108 = vunpack.c.l.b16 %v778
        %v1109 = vunpack.c.l.b16 %v792
        %v1110 = vunpack.c.l.b16 %v802
        %v1111 = vunpack.c.l.b16 %v816
        %v1112 = vunpack.c.l.b16 %v826
        %v1113 = vunpack.c.l.b16 %v840
        %v1114 = vunpack.c.l.b16 %v850
        %v1115 = vunpack.c.l.b16 %v864
        %v1116 = vunpack.c.l.b16 %v874
        %v1117 = vunpack.c.l.b16 %v888
        %v1118 = vunpack.c.l.b16 %v898
        %v1119 = vunpack.c.l.b16 %v912
        %v1120 = vunpack.c.l.b16 %v922
        %v1121 = vunpack.c.l.b16 %v936
        %v1122 = vunpack.c.l.b16 %v946
        %v1123 = vunpack.c.l.b16 %v960
        %v1124 = vunpack.c.l.b16 %v970
        %v1125 = vunpack.c.l.b16 %v984
        %v1126 = vunpack.c.l.b16 %v994
        %v1127 = vunpack.c.l.b16 %v1008
        %v1128 = vunpack.c.l.b16 %v1018
        %v1129 = vunpack.c.l.b16 %v1032
        %v1130 = vunpack.c.l.b16 %v1042
        %v1131 = vunpack.c.l.b16 %v1056
        %v1132 = vunpack.c.l.b16 %v1066
        %v1133 = vpack.c.b16 %v1102, %v1101
        %v1134 = vpack.c.b16 %v1104, %v1103
        %v1135 = vpack.c.b16 %v1106, %v1105
        %v1136 = vpack.c.b16 %v1108, %v1107
        %v1137 = vpack.c.b16 %v1110, %v1109
        %v1138 = vpack.c.b16 %v1112, %v1111
        %v1139 = vpack.c.b16 %v1114, %v1113
        %v1140 = vpack.c.b16 %v1116, %v1115
        %v1141 = vpack.c.b16 %v1118, %v1117
        %v1142 = vpack.c.b16 %v1120, %v1119
        %v1143 = vpack.c.b16 %v1122, %v1121
        %v1144 = vpack.c.b16 %v1124, %v1123
        %v1145 = vpack.c.b16 %v1126, %v1125
        %v1146 = vpack.c.b16 %v1128, %v1127
        %v1147 = vpack.c.b16 %v1130, %v1129
        %v1148 = vpack.c.b16 %v1132, %v1131
        %v1150 = vsel %vm354, %v1133, 0
        %v1153 = vsel %vm354, %v1134, 0
        %v1156 = vsel %vm354, %v1135, 0
        %v1159 = vsel %vm354, %v1136, 0
        %v1162 = vsel %vm354, %v1137, 0
        %v1165 = vsel %vm354, %v1138, 0
        %v1168 = vsel %vm354, %v1139, 0
        %v1171 = vsel %vm354, %v1140, 0
        %v1174 = vsel %vm354, %v1141, 0
        %v1177 = vsel %vm354, %v1142, 0
        %v1180 = vsel %vm354, %v1143, 0
        %v1183 = vsel %vm354, %v1144, 0
        %v1186 = vsel %vm354, %v1145, 0
        %v1189 = vsel %vm354, %v1146, 0
        %v1192 = vsel %vm354, %v1147, 0
        %v1195 = vsel %vm354, %v1148, 0
        %v1198 = vsel %vm403, %v1100, 0
        %1200 = vmatprep.subr.bf16.mxu0 0
        %1201 = vmatpush1.bf16.msra.mxu0 0
        %1202 = vmatprep.subr.bf16.mxu0 0
        %1203 = vmatpush1.bf16.msra.mxu0 0
        %1204 = vmatprep.subr.bf16.mxu0 0
        %1205 = vmatpush1.bf16.msra.mxu0 0
        %1206 = vmatprep.subr.bf16.mxu0 0
        %1207 = vmatpush1.bf16.msra.mxu0 0
        %1208 = vmatprep.subr.bf16.mxu0 0
        %1209 = vmatpush1.bf16.msra.mxu0 0
        %1210 = vmatprep.subr.bf16.mxu0 0
        %1211 = vmatpush1.bf16.msra.mxu0 0
        %1212 = vmatprep.subr.bf16.mxu0 0
        %1213 = vmatpush1.bf16.msra.mxu0 0
        %1214 = vmatprep.subr.bf16.mxu0 0
        %1215 = vmatpush1.bf16.msra.mxu0 %v1198
        %1216 = vmatprep.subr.bf16.mxu0 0
        %1217 = vmatpush2.bf16.msra.mxu0 0
        %1218 = vmatprep.subr.bf16.mxu0 0
        %1219 = vmatpush2.bf16.msra.mxu0 0
        %1220 = vmatprep.subr.bf16.mxu0 0
        %1221 = vmatpush2.bf16.msra.mxu0 0
        %1222 = vmatprep.subr.bf16.mxu0 0
        %1223 = vmatpush2.bf16.msra.mxu0 0
        %1224 = vmatprep.subr.bf16.mxu0 0
        %1225 = vmatpush2.bf16.msra.mxu0 0
        %1226 = vmatprep.subr.bf16.mxu0 0
        %1227 = vmatpush2.bf16.msra.mxu0 0
        %1228 = vmatprep.subr.bf16.mxu0 0
        %1229 = vmatpush2.bf16.msra.mxu0 0
        %1230 = vmatprep.subr.bf16.mxu0 0
        %1231 = vmatpush2.bf16.msra.mxu0 0
        %1232 = vmatprep.mubr.bf16.mxu0 0
        %1233 = vmatmul.mubr.bf16.gmra.mxu0 %v1150
        %v1234 = vpop.f32.mrf.mxu0
        %v1235 = vadd.f32 0.0, %v1234
        %v1236 = vpop.f32.mrf.mxu0
        %v1237 = vpop.f32.mrf.mxu0
        %v1238 = vadd.f32 0.0, %v1237
        %v1239 = vpop.f32.mrf.mxu0
        %1240 = vmatprep.mubr.bf16.mxu0 0
        %1241 = vmatmul.mubr.bf16.gmra.mxu0 %v1153
        %v1242 = vpop.f32.mrf.mxu0
        %v1243 = vadd.f32 0.0, %v1242
        %v1244 = vpop.f32.mrf.mxu0
        %v1245 = vpop.f32.mrf.mxu0
        %v1246 = vadd.f32 0.0, %v1245
        %v1247 = vpop.f32.mrf.mxu0
        %1248 = vmatprep.mubr.bf16.mxu0 0
        %1249 = vmatmul.mubr.bf16.gmra.mxu0 %v1156
        %v1250 = vpop.f32.mrf.mxu0
        %v1251 = vadd.f32 0.0, %v1250
        %v1252 = vpop.f32.mrf.mxu0
        %v1253 = vpop.f32.mrf.mxu0
        %v1254 = vadd.f32 0.0, %v1253
        %v1255 = vpop.f32.mrf.mxu0
        %1256 = vmatprep.mubr.bf16.mxu0 0
        %1257 = vmatmul.mubr.bf16.gmra.mxu0 %v1159
        %v1258 = vpop.f32.mrf.mxu0
        %v1259 = vadd.f32 0.0, %v1258
        %v1260 = vpop.f32.mrf.mxu0
        %v1261 = vpop.f32.mrf.mxu0
        %v1262 = vadd.f32 0.0, %v1261
        %v1263 = vpop.f32.mrf.mxu0
        %1264 = vmatprep.mubr.bf16.mxu0 0
        %1265 = vmatmul.mubr.bf16.gmra.mxu0 %v1162
        %v1266 = vpop.f32.mrf.mxu0
        %v1267 = vadd.f32 0.0, %v1266
        %v1268 = vpop.f32.mrf.mxu0
        %v1269 = vpop.f32.mrf.mxu0
        %v1270 = vadd.f32 0.0, %v1269
        %v1271 = vpop.f32.mrf.mxu0
        %1272 = vmatprep.mubr.bf16.mxu0 0
        %1273 = vmatmul.mubr.bf16.gmra.mxu0 %v1165
        %v1274 = vpop.f32.mrf.mxu0
        %v1275 = vadd.f32 0.0, %v1274
        %v1276 = vpop.f32.mrf.mxu0
        %v1277 = vpop.f32.mrf.mxu0
        %v1278 = vadd.f32 0.0, %v1277
        %v1279 = vpop.f32.mrf.mxu0
        %1280 = vmatprep.mubr.bf16.mxu0 0
        %1281 = vmatmul.mubr.bf16.gmra.mxu0 %v1168
        %v1282 = vpop.f32.mrf.mxu0
        %v1283 = vadd.f32 0.0, %v1282
        %v1284 = vpop.f32.mrf.mxu0
        %v1285 = vpop.f32.mrf.mxu0
        %v1286 = vadd.f32 0.0, %v1285
        %v1287 = vpop.f32.mrf.mxu0
        %1288 = vmatprep.mubr.bf16.mxu0 0
        %1289 = vmatmul.mubr.bf16.gmra.mxu0 %v1171
        %v1290 = vpop.f32.mrf.mxu0
        %v1291 = vadd.f32 0.0, %v1290
        %v1292 = vpop.f32.mrf.mxu0
        %v1293 = vpop.f32.mrf.mxu0
        %v1294 = vadd.f32 0.0, %v1293
        %v1295 = vpop.f32.mrf.mxu0
        %1296 = vmatprep.mubr.bf16.mxu0 0
        %1297 = vmatmul.mubr.bf16.gmra.mxu0 %v1174
        %v1298 = vpop.f32.mrf.mxu0
        %v1299 = vadd.f32 0.0, %v1298
        %v1300 = vpop.f32.mrf.mxu0
        %v1301 = vpop.f32.mrf.mxu0
        %v1302 = vadd.f32 0.0, %v1301
        %v1303 = vpop.f32.mrf.mxu0
        %1304 = vmatprep.mubr.bf16.mxu0 0
        %1305 = vmatmul.mubr.bf16.gmra.mxu0 %v1177
        %v1306 = vpop.f32.mrf.mxu0
        %v1307 = vadd.f32 0.0, %v1306
        %v1308 = vpop.f32.mrf.mxu0
        %v1309 = vpop.f32.mrf.mxu0
        %v1310 = vadd.f32 0.0, %v1309
        %v1311 = vpop.f32.mrf.mxu0
        %1312 = vmatprep.mubr.bf16.mxu0 0
        %1313 = vmatmul.mubr.bf16.gmra.mxu0 %v1180
        %v1314 = vpop.f32.mrf.mxu0
        %v1315 = vadd.f32 0.0, %v1314
        %v1316 = vpop.f32.mrf.mxu0
        %v1317 = vpop.f32.mrf.mxu0
        %v1318 = vadd.f32 0.0, %v1317
        %v1319 = vpop.f32.mrf.mxu0
        %1320 = vmatprep.mubr.bf16.mxu0 0
        %1321 = vmatmul.mubr.bf16.gmra.mxu0 %v1183
        %v1322 = vpop.f32.mrf.mxu0
        %v1323 = vadd.f32 0.0, %v1322
        %v1324 = vpop.f32.mrf.mxu0
        %v1325 = vpop.f32.mrf.mxu0
        %v1326 = vadd.f32 0.0, %v1325
        %v1327 = vpop.f32.mrf.mxu0
        %1328 = vmatprep.mubr.bf16.mxu0 0
        %1329 = vmatmul.mubr.bf16.gmra.mxu0 %v1186
        %v1330 = vpop.f32.mrf.mxu0
        %v1331 = vadd.f32 0.0, %v1330
        %v1332 = vpop.f32.mrf.mxu0
        %v1333 = vpop.f32.mrf.mxu0
        %v1334 = vadd.f32 0.0, %v1333
        %v1335 = vpop.f32.mrf.mxu0
        %1336 = vmatprep.mubr.bf16.mxu0 0
        %1337 = vmatmul.mubr.bf16.gmra.mxu0 %v1189
        %v1338 = vpop.f32.mrf.mxu0
        %v1339 = vadd.f32 0.0, %v1338
        %v1340 = vpop.f32.mrf.mxu0
        %v1341 = vpop.f32.mrf.mxu0
        %v1342 = vadd.f32 0.0, %v1341
        %v1343 = vpop.f32.mrf.mxu0
        %1344 = vmatprep.mubr.bf16.mxu0 0
        %1345 = vmatmul.mubr.bf16.gmra.mxu0 %v1192
        %v1346 = vpop.f32.mrf.mxu0
        %v1347 = vadd.f32 0.0, %v1346
        %v1348 = vpop.f32.mrf.mxu0
        %v1349 = vpop.f32.mrf.mxu0
        %v1350 = vadd.f32 0.0, %v1349
        %v1351 = vpop.f32.mrf.mxu0
        %1352 = vmatprep.mubr.bf16.mxu0 0
        %1353 = vmatmul.mubr.bf16.gmra.mxu0 %v1195
        %v1354 = vpop.f32.mrf.mxu0
        %v1355 = vadd.f32 0.0, %v1354
        %v1356 = vpop.f32.mrf.mxu0
        %v1357 = vpop.f32.mrf.mxu0
        %v1358 = vadd.f32 0.0, %v1357
        %v1359 = vpop.f32.mrf.mxu0
        %1360 = vdwg.mxu0
        %v1361 = vadd.f32 %v1067, %v1235
        %v1362 = vadd.f32 %v1068, %v1238
        %v1363 = vadd.f32 %v1069, %v1243
        %v1364 = vadd.f32 %v1070, %v1246
        %v1365 = vadd.f32 %v1071, %v1251
        %v1366 = vadd.f32 %v1072, %v1254
        %v1367 = vadd.f32 %v1073, %v1259
        %v1368 = vadd.f32 %v1074, %v1262
        %v1369 = vadd.f32 %v1075, %v1267
        %v1370 = vadd.f32 %v1076, %v1270
        %v1371 = vadd.f32 %v1077, %v1275
        %v1372 = vadd.f32 %v1078, %v1278
        %v1373 = vadd.f32 %v1079, %v1283
        %v1374 = vadd.f32 %v1080, %v1286
        %v1375 = vadd.f32 %v1081, %v1291
        %v1376 = vadd.f32 %v1082, %v1294
        %v1377 = vadd.f32 %v1083, %v1299
        %v1378 = vadd.f32 %v1084, %v1302
        %v1379 = vadd.f32 %v1085, %v1307
        %v1380 = vadd.f32 %v1086, %v1310
        %v1381 = vadd.f32 %v1087, %v1315
        %v1382 = vadd.f32 %v1088, %v1318
        %v1383 = vadd.f32 %v1089, %v1323
        %v1384 = vadd.f32 %v1090, %v1326
        %v1385 = vadd.f32 %v1091, %v1331
        %v1386 = vadd.f32 %v1092, %v1334
        %v1387 = vadd.f32 %v1093, %v1339
        %v1388 = vadd.f32 %v1094, %v1342
        %v1389 = vadd.f32 %v1095, %v1347
        %v1390 = vadd.f32 %v1096, %v1350
        %v1391 = vadd.f32 %v1097, %v1355
        %v1392 = vadd.f32 %v1098, %v1358
        %1393 = vst [vmem:[%s163] sm:$0xff] %v1361
        %1394 = vst [vmem:[%s163 + $0x8] sm:$0xff] %v1362
        %1395 = vst [vmem:[%s163 + $0x10] sm:$0xff] %v1363
        %1396 = vst [vmem:[%s163 + $0x18] sm:$0xff] %v1364
        %1397 = vst [vmem:[%s163 + $0x20] sm:$0xff] %v1365
        %1398 = vst [vmem:[%s163 + $0x28] sm:$0xff] %v1366
        %1399 = vst [vmem:[%s163 + $0x30] sm:$0xff] %v1367
        %1400 = vst [vmem:[%s163 + $0x38] sm:$0xff] %v1368
        %1401 = vst [vmem:[%s163 + $0x40] sm:$0xff] %v1369
        %1402 = vst [vmem:[%s163 + $0x48] sm:$0xff] %v1370
        %1403 = vst [vmem:[%s163 + $0x50] sm:$0xff] %v1371
        %1404 = vst [vmem:[%s163 + $0x58] sm:$0xff] %v1372
        %1405 = vst [vmem:[%s163 + $0x60] sm:$0xff] %v1373
        %1406 = vst [vmem:[%s163 + $0x68] sm:$0xff] %v1374
        %1407 = vst [vmem:[%s163 + $0x70] sm:$0xff] %v1375
        %1408 = vst [vmem:[%s163 + $0x78] sm:$0xff] %v1376
        %1409 = vst [vmem:[%s163 + $0x80] sm:$0xff] %v1377
        %1410 = vst [vmem:[%s163 + $0x88] sm:$0xff] %v1378
        %1411 = vst [vmem:[%s163 + $0x90] sm:$0xff] %v1379
        %1412 = vst [vmem:[%s163 + $0x98] sm:$0xff] %v1380
        %1413 = vst [vmem:[%s163 + $0xa0] sm:$0xff] %v1381
        %1414 = vst [vmem:[%s163 + $0xa8] sm:$0xff] %v1382
        %1415 = vst [vmem:[%s163 + $0xb0] sm:$0xff] %v1383
        %1416 = vst [vmem:[%s163 + $0xb8] sm:$0xff] %v1384
        %1417 = vst [vmem:[%s163 + $0xc0] sm:$0xff] %v1385
        %1418 = vst [vmem:[%s163 + $0xc8] sm:$0xff] %v1386
        %1419 = vst [vmem:[%s163 + $0xd0] sm:$0xff] %v1387
        %1420 = vst [vmem:[%s163 + $0xd8] sm:$0xff] %v1388
        %1421 = vst [vmem:[%s163 + $0xe0] sm:$0xff] %v1389
        %1422 = vst [vmem:[%s163 + $0xe8] sm:$0xff] %v1390
        %1423 = vst [vmem:[%s163 + $0xf0] sm:$0xff] %v1391
        %1424 = vst [vmem:[%s163 + $0xf8] sm:$0xff] %v1392
        %v1425 = vld [vmem:[%s168] sm:$0xe]
        %v1426 = vld [vmem:[%s168 + $0x4] sm:$0xf]
        %v1427 = vld [vmem:[%s168 + $0x8] sm:$0x1]
        %v1428 = vld [vmem:[%s168 + $0xc] sm:$0xe]
        %v1429 = vld [vmem:[%s168 + $0x10] sm:$0xf]
        %v1430 = vld [vmem:[%s168 + $0x14] sm:$0x1]
        %v1431 = vld [vmem:[%s168 + $0x18] sm:$0xe]
        %v1432 = vld [vmem:[%s168 + $0x1c] sm:$0xf]
        %v1433 = vld [vmem:[%s168 + $0x20] sm:$0x1]
        %v1434 = vld [vmem:[%s168 + $0x24] sm:$0xe]
        %v1435 = vld [vmem:[%s168 + $0x28] sm:$0xf]
        %v1436 = vld [vmem:[%s168 + $0x2c] sm:$0x1]
        %v1437 = vld [vmem:[%s168 + $0x30] sm:$0xe]
        %v1438 = vld [vmem:[%s168 + $0x34] sm:$0xf]
        %v1439 = vld [vmem:[%s168 + $0x38] sm:$0x1]
        %v1440 = vld [vmem:[%s168 + $0x3c] sm:$0xe]
        %v1441 = vld [vmem:[%s168 + $0x40] sm:$0xf]
        %v1442 = vld [vmem:[%s168 + $0x44] sm:$0x1]
        %v1443 = vld [vmem:[%s168 + $0x48] sm:$0xe]
        %v1444 = vld [vmem:[%s168 + $0x4c] sm:$0xf]
        %v1445 = vld [vmem:[%s168 + $0x50] sm:$0x1]
        %v1446 = vld [vmem:[%s168 + $0x54] sm:$0xe]
        %v1447 = vld [vmem:[%s168 + $0x58] sm:$0xf]
        %v1448 = vld [vmem:[%s168 + $0x5c] sm:$0x1]
        %v1449 = vld [vmem:[%s168 + $0x60] sm:$0xe]
        %v1450 = vld [vmem:[%s168 + $0x64] sm:$0xf]
        %v1451 = vld [vmem:[%s168 + $0x68] sm:$0x1]
        %v1452 = vld [vmem:[%s168 + $0x6c] sm:$0xe]
        %v1453 = vld [vmem:[%s168 + $0x70] sm:$0xf]
        %v1454 = vld [vmem:[%s168 + $0x74] sm:$0x1]
        %v1455 = vld [vmem:[%s168 + $0x78] sm:$0xe]
        %v1456 = vld [vmem:[%s168 + $0x7c] sm:$0xf]
        %v1457 = vld [vmem:[%s168 + $0x80] sm:$0x1]
        %v1458 = vld [vmem:[%s168 + $0x84] sm:$0xe]
        %v1459 = vld [vmem:[%s168 + $0x88] sm:$0xf]
        %v1460 = vld [vmem:[%s168 + $0x8c] sm:$0x1]
        %v1461 = vld [vmem:[%s168 + $0x90] sm:$0xe]
        %v1462 = vld [vmem:[%s168 + $0x94] sm:$0xf]
        %v1463 = vld [vmem:[%s168 + $0x98] sm:$0x1]
        %v1464 = vld [vmem:[%s168 + $0x9c] sm:$0xe]
        %v1465 = vld [vmem:[%s168 + $0xa0] sm:$0xf]
        %v1466 = vld [vmem:[%s168 + $0xa4] sm:$0x1]
        %v1467 = vld [vmem:[%s168 + $0xa8] sm:$0xe]
        %v1468 = vld [vmem:[%s168 + $0xac] sm:$0xf]
        %v1469 = vld [vmem:[%s168 + $0xb0] sm:$0x1]
        %v1470 = vld [vmem:[%s168 + $0xb4] sm:$0xe]
        %v1471 = vld [vmem:[%s168 + $0xb8] sm:$0xf]
        %v1472 = vld [vmem:[%s168 + $0xbc] sm:$0x1]
        %vm1521 = vcmask 1042432
        %vm1522 = vcmask 1046532
        %vm1523 = vmor %vm1521, %vm1522
        %v1524 = vrot.slane %v1425, 5
        %v1525 = vrot.slane %v1524, 4
        %v1526 = vrot.slane %v1426, 5
        %v1527 = vsel %vm1523, %v1525, %v1526
        %v1528 = vrot.slane %v1526, 4
        %v1529 = vrot.slane %v1427, 5
        %v1530 = vsel %vm1523, %v1528, %v1529
        %v1531 = vrot.slane %v1428, 5
        %v1532 = vrot.slane %v1531, 4
        %v1533 = vrot.slane %v1429, 5
        %v1534 = vsel %vm1523, %v1532, %v1533
        %v1535 = vrot.slane %v1533, 4
        %v1536 = vrot.slane %v1430, 5
        %v1537 = vsel %vm1523, %v1535, %v1536
        %v1538 = vrot.slane %v1431, 5
        %v1539 = vrot.slane %v1538, 4
        %v1540 = vrot.slane %v1432, 5
        %v1541 = vsel %vm1523, %v1539, %v1540
        %v1542 = vrot.slane %v1540, 4
        %v1543 = vrot.slane %v1433, 5
        %v1544 = vsel %vm1523, %v1542, %v1543
        %v1545 = vrot.slane %v1434, 5
        %v1546 = vrot.slane %v1545, 4
        %v1547 = vrot.slane %v1435, 5
        %v1548 = vsel %vm1523, %v1546, %v1547
        %v1549 = vrot.slane %v1547, 4
        %v1550 = vrot.slane %v1436, 5
        %v1551 = vsel %vm1523, %v1549, %v1550
        %v1552 = vrot.slane %v1437, 5
        %v1553 = vrot.slane %v1552, 4
        %v1554 = vrot.slane %v1438, 5
        %v1555 = vsel %vm1523, %v1553, %v1554
        %v1556 = vrot.slane %v1554, 4
        %v1557 = vrot.slane %v1439, 5
        %v1558 = vsel %vm1523, %v1556, %v1557
        %v1559 = vrot.slane %v1440, 5
        %v1560 = vrot.slane %v1559, 4
        %v1561 = vrot.slane %v1441, 5
        %v1562 = vsel %vm1523, %v1560, %v1561
        %v1563 = vrot.slane %v1561, 4
        %v1564 = vrot.slane %v1442, 5
        %v1565 = vsel %vm1523, %v1563, %v1564
        %v1566 = vrot.slane %v1443, 5
        %v1567 = vrot.slane %v1566, 4
        %v1568 = vrot.slane %v1444, 5
        %v1569 = vsel %vm1523, %v1567, %v1568
        %v1570 = vrot.slane %v1568, 4
        %v1571 = vrot.slane %v1445, 5
        %v1572 = vsel %vm1523, %v1570, %v1571
        %v1573 = vrot.slane %v1446, 5
        %v1574 = vrot.slane %v1573, 4
        %v1575 = vrot.slane %v1447, 5
        %v1576 = vsel %vm1523, %v1574, %v1575
        %v1577 = vrot.slane %v1575, 4
        %v1578 = vrot.slane %v1448, 5
        %v1579 = vsel %vm1523, %v1577, %v1578
        %v1580 = vrot.slane %v1449, 5
        %v1581 = vrot.slane %v1580, 4
        %v1582 = vrot.slane %v1450, 5
        %v1583 = vsel %vm1523, %v1581, %v1582
        %v1584 = vrot.slane %v1582, 4
        %v1585 = vrot.slane %v1451, 5
        %v1586 = vsel %vm1523, %v1584, %v1585
        %v1587 = vrot.slane %v1452, 5
        %v1588 = vrot.slane %v1587, 4
        %v1589 = vrot.slane %v1453, 5
        %v1590 = vsel %vm1523, %v1588, %v1589
        %v1591 = vrot.slane %v1589, 4
        %v1592 = vrot.slane %v1454, 5
        %v1593 = vsel %vm1523, %v1591, %v1592
        %v1594 = vrot.slane %v1455, 5
        %v1595 = vrot.slane %v1594, 4
        %v1596 = vrot.slane %v1456, 5
        %v1597 = vsel %vm1523, %v1595, %v1596
        %v1598 = vrot.slane %v1596, 4
        %v1599 = vrot.slane %v1457, 5
        %v1600 = vsel %vm1523, %v1598, %v1599
        %v1601 = vrot.slane %v1458, 5
        %v1602 = vrot.slane %v1601, 4
        %v1603 = vrot.slane %v1459, 5
        %v1604 = vsel %vm1523, %v1602, %v1603
        %v1605 = vrot.slane %v1603, 4
        %v1606 = vrot.slane %v1460, 5
        %v1607 = vsel %vm1523, %v1605, %v1606
        %v1608 = vrot.slane %v1461, 5
        %v1609 = vrot.slane %v1608, 4
        %v1610 = vrot.slane %v1462, 5
        %v1611 = vsel %vm1523, %v1609, %v1610
        %v1612 = vrot.slane %v1610, 4
        %v1613 = vrot.slane %v1463, 5
        %v1614 = vsel %vm1523, %v1612, %v1613
        %v1615 = vrot.slane %v1464, 5
        %v1616 = vrot.slane %v1615, 4
        %v1617 = vrot.slane %v1465, 5
        %v1618 = vsel %vm1523, %v1616, %v1617
        %v1619 = vrot.slane %v1617, 4
        %v1620 = vrot.slane %v1466, 5
        %v1621 = vsel %vm1523, %v1619, %v1620
        %v1622 = vrot.slane %v1467, 5
        %v1623 = vrot.slane %v1622, 4
        %v1624 = vrot.slane %v1468, 5
        %v1625 = vsel %vm1523, %v1623, %v1624
        %v1626 = vrot.slane %v1624, 4
        %v1627 = vrot.slane %v1469, 5
        %v1628 = vsel %vm1523, %v1626, %v1627
        %v1629 = vrot.slane %v1470, 5
        %v1630 = vrot.slane %v1629, 4
        %v1631 = vrot.slane %v1471, 5
        %v1632 = vsel %vm1523, %v1630, %v1631
        %v1633 = vrot.slane %v1631, 4
        %v1634 = vrot.slane %v1472, 5
        %v1635 = vsel %vm1523, %v1633, %v1634
        %v1636 = vld [vmem:[%s163] sm:$0xff]
        %v1637 = vld [vmem:[%s163 + $0x8] sm:$0xff]
        %v1638 = vld [vmem:[%s163 + $0x10] sm:$0xff]
        %v1639 = vld [vmem:[%s163 + $0x18] sm:$0xff]
        %v1640 = vld [vmem:[%s163 + $0x20] sm:$0xff]
        %v1641 = vld [vmem:[%s163 + $0x28] sm:$0xff]
        %v1642 = vld [vmem:[%s163 + $0x30] sm:$0xff]
        %v1643 = vld [vmem:[%s163 + $0x38] sm:$0xff]
        %v1644 = vld [vmem:[%s163 + $0x40] sm:$0xff]
        %v1645 = vld [vmem:[%s163 + $0x48] sm:$0xff]
        %v1646 = vld [vmem:[%s163 + $0x50] sm:$0xff]
        %v1647 = vld [vmem:[%s163 + $0x58] sm:$0xff]
        %v1648 = vld [vmem:[%s163 + $0x60] sm:$0xff]
        %v1649 = vld [vmem:[%s163 + $0x68] sm:$0xff]
        %v1650 = vld [vmem:[%s163 + $0x70] sm:$0xff]
        %v1651 = vld [vmem:[%s163 + $0x78] sm:$0xff]
        %v1652 = vld [vmem:[%s163 + $0x80] sm:$0xff]
        %v1653 = vld [vmem:[%s163 + $0x88] sm:$0xff]
        %v1654 = vld [vmem:[%s163 + $0x90] sm:$0xff]
        %v1655 = vld [vmem:[%s163 + $0x98] sm:$0xff]
        %v1656 = vld [vmem:[%s163 + $0xa0] sm:$0xff]
        %v1657 = vld [vmem:[%s163 + $0xa8] sm:$0xff]
        %v1658 = vld [vmem:[%s163 + $0xb0] sm:$0xff]
        %v1659 = vld [vmem:[%s163 + $0xb8] sm:$0xff]
        %v1660 = vld [vmem:[%s163 + $0xc0] sm:$0xff]
        %v1661 = vld [vmem:[%s163 + $0xc8] sm:$0xff]
        %v1662 = vld [vmem:[%s163 + $0xd0] sm:$0xff]
        %v1663 = vld [vmem:[%s163 + $0xd8] sm:$0xff]
        %v1664 = vld [vmem:[%s163 + $0xe0] sm:$0xff]
        %v1665 = vld [vmem:[%s163 + $0xe8] sm:$0xff]
        %v1666 = vld [vmem:[%s163 + $0xf0] sm:$0xff]
        %v1667 = vld [vmem:[%s163 + $0xf8] sm:$0xff]
        %s1668 = scalar_lea.vmem %s1, 4
        %v1669 = vld [vmem:[%s1668] sm:$0x3]
        %v1670 = vunpack.c.l.b16 %v1527
        %v1671 = vunpack.c.l.b16 %v1530
        %v1672 = vunpack.c.l.b16 %v1534
        %v1673 = vunpack.c.l.b16 %v1537
        %v1674 = vunpack.c.l.b16 %v1541
        %v1675 = vunpack.c.l.b16 %v1544
        %v1676 = vunpack.c.l.b16 %v1548
        %v1677 = vunpack.c.l.b16 %v1551
        %v1678 = vunpack.c.l.b16 %v1555
        %v1679 = vunpack.c.l.b16 %v1558
        %v1680 = vunpack.c.l.b16 %v1562
        %v1681 = vunpack.c.l.b16 %v1565
        %v1682 = vunpack.c.l.b16 %v1569
        %v1683 = vunpack.c.l.b16 %v1572
        %v1684 = vunpack.c.l.b16 %v1576
        %v1685 = vunpack.c.l.b16 %v1579
        %v1686 = vunpack.c.l.b16 %v1583
        %v1687 = vunpack.c.l.b16 %v1586
        %v1688 = vunpack.c.l.b16 %v1590
        %v1689 = vunpack.c.l.b16 %v1593
        %v1690 = vunpack.c.l.b16 %v1597
        %v1691 = vunpack.c.l.b16 %v1600
        %v1692 = vunpack.c.l.b16 %v1604
        %v1693 = vunpack.c.l.b16 %v1607
        %v1694 = vunpack.c.l.b16 %v1611
        %v1695 = vunpack.c.l.b16 %v1614
        %v1696 = vunpack.c.l.b16 %v1618
        %v1697 = vunpack.c.l.b16 %v1621
        %v1698 = vunpack.c.l.b16 %v1625
        %v1699 = vunpack.c.l.b16 %v1628
        %v1700 = vunpack.c.l.b16 %v1632
        %v1701 = vunpack.c.l.b16 %v1635
        %v1702 = vpack.c.b16 %v1671, %v1670
        %v1703 = vpack.c.b16 %v1673, %v1672
        %v1704 = vpack.c.b16 %v1675, %v1674
        %v1705 = vpack.c.b16 %v1677, %v1676
        %v1706 = vpack.c.b16 %v1679, %v1678
        %v1707 = vpack.c.b16 %v1681, %v1680
        %v1708 = vpack.c.b16 %v1683, %v1682
        %v1709 = vpack.c.b16 %v1685, %v1684
        %v1710 = vpack.c.b16 %v1687, %v1686
        %v1711 = vpack.c.b16 %v1689, %v1688
        %v1712 = vpack.c.b16 %v1691, %v1690
        %v1713 = vpack.c.b16 %v1693, %v1692
        %v1714 = vpack.c.b16 %v1695, %v1694
        %v1715 = vpack.c.b16 %v1697, %v1696
        %v1716 = vpack.c.b16 %v1699, %v1698
        %v1717 = vpack.c.b16 %v1701, %v1700
        %v1719 = vsel %vm354, %v1702, 0
        %v1722 = vsel %vm354, %v1703, 0
        %v1725 = vsel %vm354, %v1704, 0
        %v1728 = vsel %vm354, %v1705, 0
        %v1731 = vsel %vm354, %v1706, 0
        %v1734 = vsel %vm354, %v1707, 0
        %v1737 = vsel %vm354, %v1708, 0
        %v1740 = vsel %vm354, %v1709, 0
        %v1743 = vsel %vm354, %v1710, 0
        %v1746 = vsel %vm354, %v1711, 0
        %v1749 = vsel %vm354, %v1712, 0
        %v1752 = vsel %vm354, %v1713, 0
        %v1755 = vsel %vm354, %v1714, 0
        %v1758 = vsel %vm354, %v1715, 0
        %v1761 = vsel %vm354, %v1716, 0
        %v1764 = vsel %vm354, %v1717, 0
        %v1767 = vsel %vm403, %v1669, 0
        %1769 = vmatprep.subr.bf16.mxu0 0
        %1770 = vmatpush1.bf16.msra.mxu0 0
        %1771 = vmatprep.subr.bf16.mxu0 0
        %1772 = vmatpush1.bf16.msra.mxu0 0
        %1773 = vmatprep.subr.bf16.mxu0 0
        %1774 = vmatpush1.bf16.msra.mxu0 0
        %1775 = vmatprep.subr.bf16.mxu0 0
        %1776 = vmatpush1.bf16.msra.mxu0 0
        %1777 = vmatprep.subr.bf16.mxu0 0
        %1778 = vmatpush1.bf16.msra.mxu0 0
        %1779 = vmatprep.subr.bf16.mxu0 0
        %1780 = vmatpush1.bf16.msra.mxu0 0
        %1781 = vmatprep.subr.bf16.mxu0 0
        %1782 = vmatpush1.bf16.msra.mxu0 0
        %1783 = vmatprep.subr.bf16.mxu0 0
        %1784 = vmatpush1.bf16.msra.mxu0 %v1767
        %1785 = vmatprep.subr.bf16.mxu0 0
        %1786 = vmatpush2.bf16.msra.mxu0 0
        %1787 = vmatprep.subr.bf16.mxu0 0
        %1788 = vmatpush2.bf16.msra.mxu0 0
        %1789 = vmatprep.subr.bf16.mxu0 0
        %1790 = vmatpush2.bf16.msra.mxu0 0
        %1791 = vmatprep.subr.bf16.mxu0 0
        %1792 = vmatpush2.bf16.msra.mxu0 0
        %1793 = vmatprep.subr.bf16.mxu0 0
        %1794 = vmatpush2.bf16.msra.mxu0 0
        %1795 = vmatprep.subr.bf16.mxu0 0
        %1796 = vmatpush2.bf16.msra.mxu0 0
        %1797 = vmatprep.subr.bf16.mxu0 0
        %1798 = vmatpush2.bf16.msra.mxu0 0
        %1799 = vmatprep.subr.bf16.mxu0 0
        %1800 = vmatpush2.bf16.msra.mxu0 0
        %1801 = vmatprep.mubr.bf16.mxu0 0
        %1802 = vmatmul.mubr.bf16.gmra.mxu0 %v1719
        %v1803 = vpop.f32.mrf.mxu0
        %v1804 = vadd.f32 0.0, %v1803
        %v1805 = vpop.f32.mrf.mxu0
        %v1806 = vpop.f32.mrf.mxu0
        %v1807 = vadd.f32 0.0, %v1806
        %v1808 = vpop.f32.mrf.mxu0
        %1809 = vmatprep.mubr.bf16.mxu0 0
        %1810 = vmatmul.mubr.bf16.gmra.mxu0 %v1722
        %v1811 = vpop.f32.mrf.mxu0
        %v1812 = vadd.f32 0.0, %v1811
        %v1813 = vpop.f32.mrf.mxu0
        %v1814 = vpop.f32.mrf.mxu0
        %v1815 = vadd.f32 0.0, %v1814
        %v1816 = vpop.f32.mrf.mxu0
        %1817 = vmatprep.mubr.bf16.mxu0 0
        %1818 = vmatmul.mubr.bf16.gmra.mxu0 %v1725
        %v1819 = vpop.f32.mrf.mxu0
        %v1820 = vadd.f32 0.0, %v1819
        %v1821 = vpop.f32.mrf.mxu0
        %v1822 = vpop.f32.mrf.mxu0
        %v1823 = vadd.f32 0.0, %v1822
        %v1824 = vpop.f32.mrf.mxu0
        %1825 = vmatprep.mubr.bf16.mxu0 0
        %1826 = vmatmul.mubr.bf16.gmra.mxu0 %v1728
        %v1827 = vpop.f32.mrf.mxu0
        %v1828 = vadd.f32 0.0, %v1827
        %v1829 = vpop.f32.mrf.mxu0
        %v1830 = vpop.f32.mrf.mxu0
        %v1831 = vadd.f32 0.0, %v1830
        %v1832 = vpop.f32.mrf.mxu0
        %1833 = vmatprep.mubr.bf16.mxu0 0
        %1834 = vmatmul.mubr.bf16.gmra.mxu0 %v1731
        %v1835 = vpop.f32.mrf.mxu0
        %v1836 = vadd.f32 0.0, %v1835
        %v1837 = vpop.f32.mrf.mxu0
        %v1838 = vpop.f32.mrf.mxu0
        %v1839 = vadd.f32 0.0, %v1838
        %v1840 = vpop.f32.mrf.mxu0
        %1841 = vmatprep.mubr.bf16.mxu0 0
        %1842 = vmatmul.mubr.bf16.gmra.mxu0 %v1734
        %v1843 = vpop.f32.mrf.mxu0
        %v1844 = vadd.f32 0.0, %v1843
        %v1845 = vpop.f32.mrf.mxu0
        %v1846 = vpop.f32.mrf.mxu0
        %v1847 = vadd.f32 0.0, %v1846
        %v1848 = vpop.f32.mrf.mxu0
        %1849 = vmatprep.mubr.bf16.mxu0 0
        %1850 = vmatmul.mubr.bf16.gmra.mxu0 %v1737
        %v1851 = vpop.f32.mrf.mxu0
        %v1852 = vadd.f32 0.0, %v1851
        %v1853 = vpop.f32.mrf.mxu0
        %v1854 = vpop.f32.mrf.mxu0
        %v1855 = vadd.f32 0.0, %v1854
        %v1856 = vpop.f32.mrf.mxu0
        %1857 = vmatprep.mubr.bf16.mxu0 0
        %1858 = vmatmul.mubr.bf16.gmra.mxu0 %v1740
        %v1859 = vpop.f32.mrf.mxu0
        %v1860 = vadd.f32 0.0, %v1859
        %v1861 = vpop.f32.mrf.mxu0
        %v1862 = vpop.f32.mrf.mxu0
        %v1863 = vadd.f32 0.0, %v1862
        %v1864 = vpop.f32.mrf.mxu0
        %1865 = vmatprep.mubr.bf16.mxu0 0
        %1866 = vmatmul.mubr.bf16.gmra.mxu0 %v1743
        %v1867 = vpop.f32.mrf.mxu0
        %v1868 = vadd.f32 0.0, %v1867
        %v1869 = vpop.f32.mrf.mxu0
        %v1870 = vpop.f32.mrf.mxu0
        %v1871 = vadd.f32 0.0, %v1870
        %v1872 = vpop.f32.mrf.mxu0
        %1873 = vmatprep.mubr.bf16.mxu0 0
        %1874 = vmatmul.mubr.bf16.gmra.mxu0 %v1746
        %v1875 = vpop.f32.mrf.mxu0
        %v1876 = vadd.f32 0.0, %v1875
        %v1877 = vpop.f32.mrf.mxu0
        %v1878 = vpop.f32.mrf.mxu0
        %v1879 = vadd.f32 0.0, %v1878
        %v1880 = vpop.f32.mrf.mxu0
        %1881 = vmatprep.mubr.bf16.mxu0 0
        %1882 = vmatmul.mubr.bf16.gmra.mxu0 %v1749
        %v1883 = vpop.f32.mrf.mxu0
        %v1884 = vadd.f32 0.0, %v1883
        %v1885 = vpop.f32.mrf.mxu0
        %v1886 = vpop.f32.mrf.mxu0
        %v1887 = vadd.f32 0.0, %v1886
        %v1888 = vpop.f32.mrf.mxu0
        %1889 = vmatprep.mubr.bf16.mxu0 0
        %1890 = vmatmul.mubr.bf16.gmra.mxu0 %v1752
        %v1891 = vpop.f32.mrf.mxu0
        %v1892 = vadd.f32 0.0, %v1891
        %v1893 = vpop.f32.mrf.mxu0
        %v1894 = vpop.f32.mrf.mxu0
        %v1895 = vadd.f32 0.0, %v1894
        %v1896 = vpop.f32.mrf.mxu0
        %1897 = vmatprep.mubr.bf16.mxu0 0
        %1898 = vmatmul.mubr.bf16.gmra.mxu0 %v1755
        %v1899 = vpop.f32.mrf.mxu0
        %v1900 = vadd.f32 0.0, %v1899
        %v1901 = vpop.f32.mrf.mxu0
        %v1902 = vpop.f32.mrf.mxu0
        %v1903 = vadd.f32 0.0, %v1902
        %v1904 = vpop.f32.mrf.mxu0
        %1905 = vmatprep.mubr.bf16.mxu0 0
        %1906 = vmatmul.mubr.bf16.gmra.mxu0 %v1758
        %v1907 = vpop.f32.mrf.mxu0
        %v1908 = vadd.f32 0.0, %v1907
        %v1909 = vpop.f32.mrf.mxu0
        %v1910 = vpop.f32.mrf.mxu0
        %v1911 = vadd.f32 0.0, %v1910
        %v1912 = vpop.f32.mrf.mxu0
        %1913 = vmatprep.mubr.bf16.mxu0 0
        %1914 = vmatmul.mubr.bf16.gmra.mxu0 %v1761
        %v1915 = vpop.f32.mrf.mxu0
        %v1916 = vadd.f32 0.0, %v1915
        %v1917 = vpop.f32.mrf.mxu0
        %v1918 = vpop.f32.mrf.mxu0
        %v1919 = vadd.f32 0.0, %v1918
        %v1920 = vpop.f32.mrf.mxu0
        %1921 = vmatprep.mubr.bf16.mxu0 0
        %1922 = vmatmul.mubr.bf16.gmra.mxu0 %v1764
        %v1923 = vpop.f32.mrf.mxu0
        %v1924 = vadd.f32 0.0, %v1923
        %v1925 = vpop.f32.mrf.mxu0
        %v1926 = vpop.f32.mrf.mxu0
        %v1927 = vadd.f32 0.0, %v1926
        %v1928 = vpop.f32.mrf.mxu0
        %1929 = vdwg.mxu0
        %v1930 = vadd.f32 %v1636, %v1804
        %v1931 = vadd.f32 %v1637, %v1807
        %v1932 = vadd.f32 %v1638, %v1812
        %v1933 = vadd.f32 %v1639, %v1815
        %v1934 = vadd.f32 %v1640, %v1820
        %v1935 = vadd.f32 %v1641, %v1823
        %v1936 = vadd.f32 %v1642, %v1828
        %v1937 = vadd.f32 %v1643, %v1831
        %v1938 = vadd.f32 %v1644, %v1836
        %v1939 = vadd.f32 %v1645, %v1839
        %v1940 = vadd.f32 %v1646, %v1844
        %v1941 = vadd.f32 %v1647, %v1847
        %v1942 = vadd.f32 %v1648, %v1852
        %v1943 = vadd.f32 %v1649, %v1855
        %v1944 = vadd.f32 %v1650, %v1860
        %v1945 = vadd.f32 %v1651, %v1863
        %v1946 = vadd.f32 %v1652, %v1868
        %v1947 = vadd.f32 %v1653, %v1871
        %v1948 = vadd.f32 %v1654, %v1876
        %v1949 = vadd.f32 %v1655, %v1879
        %v1950 = vadd.f32 %v1656, %v1884
        %v1951 = vadd.f32 %v1657, %v1887
        %v1952 = vadd.f32 %v1658, %v1892
        %v1953 = vadd.f32 %v1659, %v1895
        %v1954 = vadd.f32 %v1660, %v1900
        %v1955 = vadd.f32 %v1661, %v1903
        %v1956 = vadd.f32 %v1662, %v1908
        %v1957 = vadd.f32 %v1663, %v1911
        %v1958 = vadd.f32 %v1664, %v1916
        %v1959 = vadd.f32 %v1665, %v1919
        %v1960 = vadd.f32 %v1666, %v1924
        %v1961 = vadd.f32 %v1667, %v1927
        %1962 = vst [vmem:[%s163] sm:$0xff] %v1930
        %1963 = vst [vmem:[%s163 + $0x8] sm:$0xff] %v1931
        %1964 = vst [vmem:[%s163 + $0x10] sm:$0xff] %v1932
        %1965 = vst [vmem:[%s163 + $0x18] sm:$0xff] %v1933
        %1966 = vst [vmem:[%s163 + $0x20] sm:$0xff] %v1934
        %1967 = vst [vmem:[%s163 + $0x28] sm:$0xff] %v1935
        %1968 = vst [vmem:[%s163 + $0x30] sm:$0xff] %v1936
        %1969 = vst [vmem:[%s163 + $0x38] sm:$0xff] %v1937
        %1970 = vst [vmem:[%s163 + $0x40] sm:$0xff] %v1938
        %1971 = vst [vmem:[%s163 + $0x48] sm:$0xff] %v1939
        %1972 = vst [vmem:[%s163 + $0x50] sm:$0xff] %v1940
        %1973 = vst [vmem:[%s163 + $0x58] sm:$0xff] %v1941
        %1974 = vst [vmem:[%s163 + $0x60] sm:$0xff] %v1942
        %1975 = vst [vmem:[%s163 + $0x68] sm:$0xff] %v1943
        %1976 = vst [vmem:[%s163 + $0x70] sm:$0xff] %v1944
        %1977 = vst [vmem:[%s163 + $0x78] sm:$0xff] %v1945
        %1978 = vst [vmem:[%s163 + $0x80] sm:$0xff] %v1946
        %1979 = vst [vmem:[%s163 + $0x88] sm:$0xff] %v1947
        %1980 = vst [vmem:[%s163 + $0x90] sm:$0xff] %v1948
        %1981 = vst [vmem:[%s163 + $0x98] sm:$0xff] %v1949
        %1982 = vst [vmem:[%s163 + $0xa0] sm:$0xff] %v1950
        %1983 = vst [vmem:[%s163 + $0xa8] sm:$0xff] %v1951
        %1984 = vst [vmem:[%s163 + $0xb0] sm:$0xff] %v1952
        %1985 = vst [vmem:[%s163 + $0xb8] sm:$0xff] %v1953
        %1986 = vst [vmem:[%s163 + $0xc0] sm:$0xff] %v1954
        %1987 = vst [vmem:[%s163 + $0xc8] sm:$0xff] %v1955
        %1988 = vst [vmem:[%s163 + $0xd0] sm:$0xff] %v1956
        %1989 = vst [vmem:[%s163 + $0xd8] sm:$0xff] %v1957
        %1990 = vst [vmem:[%s163 + $0xe0] sm:$0xff] %v1958
        %1991 = vst [vmem:[%s163 + $0xe8] sm:$0xff] %v1959
        %1992 = vst [vmem:[%s163 + $0xf0] sm:$0xff] %v1960
        %1993 = vst [vmem:[%s163 + $0xf8] sm:$0xff] %v1961
        %s1994 = scalar_lea.vmem %s168, 12
        %v1995 = vld [vmem:[%s1994] sm:$0xf]
        %v1996 = vld [vmem:[%s1994 + $0x4] sm:$0xf]
        %v1997 = vld [vmem:[%s1994 + $0xc] sm:$0xf]
        %v1998 = vld [vmem:[%s1994 + $0x10] sm:$0xf]
        %v1999 = vld [vmem:[%s1994 + $0x18] sm:$0xf]
        %v2000 = vld [vmem:[%s1994 + $0x1c] sm:$0xf]
        %v2001 = vld [vmem:[%s1994 + $0x24] sm:$0xf]
        %v2002 = vld [vmem:[%s1994 + $0x28] sm:$0xf]
        %v2003 = vld [vmem:[%s1994 + $0x30] sm:$0xf]
        %v2004 = vld [vmem:[%s1994 + $0x34] sm:$0xf]
        %v2005 = vld [vmem:[%s1994 + $0x3c] sm:$0xf]
        %v2006 = vld [vmem:[%s1994 + $0x40] sm:$0xf]
        %v2007 = vld [vmem:[%s1994 + $0x48] sm:$0xf]
        %v2008 = vld [vmem:[%s1994 + $0x4c] sm:$0xf]
        %v2009 = vld [vmem:[%s1994 + $0x54] sm:$0xf]
        %v2010 = vld [vmem:[%s1994 + $0x58] sm:$0xf]
        %v2011 = vld [vmem:[%s1994 + $0x60] sm:$0xf]
        %v2012 = vld [vmem:[%s1994 + $0x64] sm:$0xf]
        %v2013 = vld [vmem:[%s1994 + $0x6c] sm:$0xf]
        %v2014 = vld [vmem:[%s1994 + $0x70] sm:$0xf]
        %v2015 = vld [vmem:[%s1994 + $0x78] sm:$0xf]
        %v2016 = vld [vmem:[%s1994 + $0x7c] sm:$0xf]
        %v2017 = vld [vmem:[%s1994 + $0x84] sm:$0xf]
        %v2018 = vld [vmem:[%s1994 + $0x88] sm:$0xf]
        %v2019 = vld [vmem:[%s1994 + $0x90] sm:$0xf]
        %v2020 = vld [vmem:[%s1994 + $0x94] sm:$0xf]
        %v2021 = vld [vmem:[%s1994 + $0x9c] sm:$0xf]
        %v2022 = vld [vmem:[%s1994 + $0xa0] sm:$0xf]
        %v2023 = vld [vmem:[%s1994 + $0xa8] sm:$0xf]
        %v2024 = vld [vmem:[%s1994 + $0xac] sm:$0xf]
        %v2025 = vld [vmem:[%s1994 + $0xb4] sm:$0xf]
        %v2026 = vld [vmem:[%s1994 + $0xb8] sm:$0xf]
        %v2027 = vld [vmem:[%s163] sm:$0xff]
        %v2028 = vld [vmem:[%s163 + $0x8] sm:$0xff]
        %v2029 = vld [vmem:[%s163 + $0x10] sm:$0xff]
        %v2030 = vld [vmem:[%s163 + $0x18] sm:$0xff]
        %v2031 = vld [vmem:[%s163 + $0x20] sm:$0xff]
        %v2032 = vld [vmem:[%s163 + $0x28] sm:$0xff]
        %v2033 = vld [vmem:[%s163 + $0x30] sm:$0xff]
        %v2034 = vld [vmem:[%s163 + $0x38] sm:$0xff]
        %v2035 = vld [vmem:[%s163 + $0x40] sm:$0xff]
        %v2036 = vld [vmem:[%s163 + $0x48] sm:$0xff]
        %v2037 = vld [vmem:[%s163 + $0x50] sm:$0xff]
        %v2038 = vld [vmem:[%s163 + $0x58] sm:$0xff]
        %v2039 = vld [vmem:[%s163 + $0x60] sm:$0xff]
        %v2040 = vld [vmem:[%s163 + $0x68] sm:$0xff]
        %v2041 = vld [vmem:[%s163 + $0x70] sm:$0xff]
        %v2042 = vld [vmem:[%s163 + $0x78] sm:$0xff]
        %v2043 = vld [vmem:[%s163 + $0x80] sm:$0xff]
        %v2044 = vld [vmem:[%s163 + $0x88] sm:$0xff]
        %v2045 = vld [vmem:[%s163 + $0x90] sm:$0xff]
        %v2046 = vld [vmem:[%s163 + $0x98] sm:$0xff]
        %v2047 = vld [vmem:[%s163 + $0xa0] sm:$0xff]
        %v2048 = vld [vmem:[%s163 + $0xa8] sm:$0xff]
        %v2049 = vld [vmem:[%s163 + $0xb0] sm:$0xff]
        %v2050 = vld [vmem:[%s163 + $0xb8] sm:$0xff]
        %v2051 = vld [vmem:[%s163 + $0xc0] sm:$0xff]
        %v2052 = vld [vmem:[%s163 + $0xc8] sm:$0xff]
        %v2053 = vld [vmem:[%s163 + $0xd0] sm:$0xff]
        %v2054 = vld [vmem:[%s163 + $0xd8] sm:$0xff]
        %v2055 = vld [vmem:[%s163 + $0xe0] sm:$0xff]
        %v2056 = vld [vmem:[%s163 + $0xe8] sm:$0xff]
        %v2057 = vld [vmem:[%s163 + $0xf0] sm:$0xff]
        %v2058 = vld [vmem:[%s163 + $0xf8] sm:$0xff]
        %s2059 = scalar_lea.vmem %s1, 6
        %v2060 = vld [vmem:[%s2059] sm:$0x3]
        %v2093 = vunpack.c.l.b16 %v1995
        %v2094 = vunpack.c.l.b16 %v1996
        %v2095 = vunpack.c.l.b16 %v1997
        %v2096 = vunpack.c.l.b16 %v1998
        %v2097 = vunpack.c.l.b16 %v1999
        %v2098 = vunpack.c.l.b16 %v2000
        %v2099 = vunpack.c.l.b16 %v2001
        %v2100 = vunpack.c.l.b16 %v2002
        %v2101 = vunpack.c.l.b16 %v2003
        %v2102 = vunpack.c.l.b16 %v2004
        %v2103 = vunpack.c.l.b16 %v2005
        %v2104 = vunpack.c.l.b16 %v2006
        %v2105 = vunpack.c.l.b16 %v2007
        %v2106 = vunpack.c.l.b16 %v2008
        %v2107 = vunpack.c.l.b16 %v2009
        %v2108 = vunpack.c.l.b16 %v2010
        %v2109 = vunpack.c.l.b16 %v2011
        %v2110 = vunpack.c.l.b16 %v2012
        %v2111 = vunpack.c.l.b16 %v2013
        %v2112 = vunpack.c.l.b16 %v2014
        %v2113 = vunpack.c.l.b16 %v2015
        %v2114 = vunpack.c.l.b16 %v2016
        %v2115 = vunpack.c.l.b16 %v2017
        %v2116 = vunpack.c.l.b16 %v2018
        %v2117 = vunpack.c.l.b16 %v2019
        %v2118 = vunpack.c.l.b16 %v2020
        %v2119 = vunpack.c.l.b16 %v2021
        %v2120 = vunpack.c.l.b16 %v2022
        %v2121 = vunpack.c.l.b16 %v2023
        %v2122 = vunpack.c.l.b16 %v2024
        %v2123 = vunpack.c.l.b16 %v2025
        %v2124 = vunpack.c.l.b16 %v2026
        %v2125 = vpack.c.b16 %v2094, %v2093
        %v2126 = vpack.c.b16 %v2096, %v2095
        %v2127 = vpack.c.b16 %v2098, %v2097
        %v2128 = vpack.c.b16 %v2100, %v2099
        %v2129 = vpack.c.b16 %v2102, %v2101
        %v2130 = vpack.c.b16 %v2104, %v2103
        %v2131 = vpack.c.b16 %v2106, %v2105
        %v2132 = vpack.c.b16 %v2108, %v2107
        %v2133 = vpack.c.b16 %v2110, %v2109
        %v2134 = vpack.c.b16 %v2112, %v2111
        %v2135 = vpack.c.b16 %v2114, %v2113
        %v2136 = vpack.c.b16 %v2116, %v2115
        %v2137 = vpack.c.b16 %v2118, %v2117
        %v2138 = vpack.c.b16 %v2120, %v2119
        %v2139 = vpack.c.b16 %v2122, %v2121
        %v2140 = vpack.c.b16 %v2124, %v2123
        %v2142 = vsel %vm354, %v2125, 0
        %v2145 = vsel %vm354, %v2126, 0
        %v2148 = vsel %vm354, %v2127, 0
        %v2151 = vsel %vm354, %v2128, 0
        %v2154 = vsel %vm354, %v2129, 0
        %v2157 = vsel %vm354, %v2130, 0
        %v2160 = vsel %vm354, %v2131, 0
        %v2163 = vsel %vm354, %v2132, 0
        %v2166 = vsel %vm354, %v2133, 0
        %v2169 = vsel %vm354, %v2134, 0
        %v2172 = vsel %vm354, %v2135, 0
        %v2175 = vsel %vm354, %v2136, 0
        %v2178 = vsel %vm354, %v2137, 0
        %v2181 = vsel %vm354, %v2138, 0
        %v2184 = vsel %vm354, %v2139, 0
        %v2187 = vsel %vm354, %v2140, 0
        %v2190 = vsel %vm403, %v2060, 0
        %2192 = vmatprep.subr.bf16.mxu0 0
        %2193 = vmatpush1.bf16.msra.mxu0 0
        %2194 = vmatprep.subr.bf16.mxu0 0
        %2195 = vmatpush1.bf16.msra.mxu0 0
        %2196 = vmatprep.subr.bf16.mxu0 0
        %2197 = vmatpush1.bf16.msra.mxu0 0
        %2198 = vmatprep.subr.bf16.mxu0 0
        %2199 = vmatpush1.bf16.msra.mxu0 0
        %2200 = vmatprep.subr.bf16.mxu0 0
        %2201 = vmatpush1.bf16.msra.mxu0 0
        %2202 = vmatprep.subr.bf16.mxu0 0
        %2203 = vmatpush1.bf16.msra.mxu0 0
        %2204 = vmatprep.subr.bf16.mxu0 0
        %2205 = vmatpush1.bf16.msra.mxu0 0
        %2206 = vmatprep.subr.bf16.mxu0 0
        %2207 = vmatpush1.bf16.msra.mxu0 %v2190
        %2208 = vmatprep.subr.bf16.mxu0 0
        %2209 = vmatpush2.bf16.msra.mxu0 0
        %2210 = vmatprep.subr.bf16.mxu0 0
        %2211 = vmatpush2.bf16.msra.mxu0 0
        %2212 = vmatprep.subr.bf16.mxu0 0
        %2213 = vmatpush2.bf16.msra.mxu0 0
        %2214 = vmatprep.subr.bf16.mxu0 0
        %2215 = vmatpush2.bf16.msra.mxu0 0
        %2216 = vmatprep.subr.bf16.mxu0 0
        %2217 = vmatpush2.bf16.msra.mxu0 0
        %2218 = vmatprep.subr.bf16.mxu0 0
        %2219 = vmatpush2.bf16.msra.mxu0 0
        %2220 = vmatprep.subr.bf16.mxu0 0
        %2221 = vmatpush2.bf16.msra.mxu0 0
        %2222 = vmatprep.subr.bf16.mxu0 0
        %2223 = vmatpush2.bf16.msra.mxu0 0
        %2224 = vmatprep.mubr.bf16.mxu0 0
        %2225 = vmatmul.mubr.bf16.gmra.mxu0 %v2142
        %v2226 = vpop.f32.mrf.mxu0
        %v2227 = vadd.f32 0.0, %v2226
        %v2228 = vpop.f32.mrf.mxu0
        %v2229 = vpop.f32.mrf.mxu0
        %v2230 = vadd.f32 0.0, %v2229
        %v2231 = vpop.f32.mrf.mxu0
        %2232 = vmatprep.mubr.bf16.mxu0 0
        %2233 = vmatmul.mubr.bf16.gmra.mxu0 %v2145
        %v2234 = vpop.f32.mrf.mxu0
        %v2235 = vadd.f32 0.0, %v2234
        %v2236 = vpop.f32.mrf.mxu0
        %v2237 = vpop.f32.mrf.mxu0
        %v2238 = vadd.f32 0.0, %v2237
        %v2239 = vpop.f32.mrf.mxu0
        %2240 = vmatprep.mubr.bf16.mxu0 0
        %2241 = vmatmul.mubr.bf16.gmra.mxu0 %v2148
        %v2242 = vpop.f32.mrf.mxu0
        %v2243 = vadd.f32 0.0, %v2242
        %v2244 = vpop.f32.mrf.mxu0
        %v2245 = vpop.f32.mrf.mxu0
        %v2246 = vadd.f32 0.0, %v2245
        %v2247 = vpop.f32.mrf.mxu0
        %2248 = vmatprep.mubr.bf16.mxu0 0
        %2249 = vmatmul.mubr.bf16.gmra.mxu0 %v2151
        %v2250 = vpop.f32.mrf.mxu0
        %v2251 = vadd.f32 0.0, %v2250
        %v2252 = vpop.f32.mrf.mxu0
        %v2253 = vpop.f32.mrf.mxu0
        %v2254 = vadd.f32 0.0, %v2253
        %v2255 = vpop.f32.mrf.mxu0
        %2256 = vmatprep.mubr.bf16.mxu0 0
        %2257 = vmatmul.mubr.bf16.gmra.mxu0 %v2154
        %v2258 = vpop.f32.mrf.mxu0
        %v2259 = vadd.f32 0.0, %v2258
        %v2260 = vpop.f32.mrf.mxu0
        %v2261 = vpop.f32.mrf.mxu0
        %v2262 = vadd.f32 0.0, %v2261
        %v2263 = vpop.f32.mrf.mxu0
        %2264 = vmatprep.mubr.bf16.mxu0 0
        %2265 = vmatmul.mubr.bf16.gmra.mxu0 %v2157
        %v2266 = vpop.f32.mrf.mxu0
        %v2267 = vadd.f32 0.0, %v2266
        %v2268 = vpop.f32.mrf.mxu0
        %v2269 = vpop.f32.mrf.mxu0
        %v2270 = vadd.f32 0.0, %v2269
        %v2271 = vpop.f32.mrf.mxu0
        %2272 = vmatprep.mubr.bf16.mxu0 0
        %2273 = vmatmul.mubr.bf16.gmra.mxu0 %v2160
        %v2274 = vpop.f32.mrf.mxu0
        %v2275 = vadd.f32 0.0, %v2274
        %v2276 = vpop.f32.mrf.mxu0
        %v2277 = vpop.f32.mrf.mxu0
        %v2278 = vadd.f32 0.0, %v2277
        %v2279 = vpop.f32.mrf.mxu0
        %2280 = vmatprep.mubr.bf16.mxu0 0
        %2281 = vmatmul.mubr.bf16.gmra.mxu0 %v2163
        %v2282 = vpop.f32.mrf.mxu0
        %v2283 = vadd.f32 0.0, %v2282
        %v2284 = vpop.f32.mrf.mxu0
        %v2285 = vpop.f32.mrf.mxu0
        %v2286 = vadd.f32 0.0, %v2285
        %v2287 = vpop.f32.mrf.mxu0
        %2288 = vmatprep.mubr.bf16.mxu0 0
        %2289 = vmatmul.mubr.bf16.gmra.mxu0 %v2166
        %v2290 = vpop.f32.mrf.mxu0
        %v2291 = vadd.f32 0.0, %v2290
        %v2292 = vpop.f32.mrf.mxu0
        %v2293 = vpop.f32.mrf.mxu0
        %v2294 = vadd.f32 0.0, %v2293
        %v2295 = vpop.f32.mrf.mxu0
        %2296 = vmatprep.mubr.bf16.mxu0 0
        %2297 = vmatmul.mubr.bf16.gmra.mxu0 %v2169
        %v2298 = vpop.f32.mrf.mxu0
        %v2299 = vadd.f32 0.0, %v2298
        %v2300 = vpop.f32.mrf.mxu0
        %v2301 = vpop.f32.mrf.mxu0
        %v2302 = vadd.f32 0.0, %v2301
        %v2303 = vpop.f32.mrf.mxu0
        %2304 = vmatprep.mubr.bf16.mxu0 0
        %2305 = vmatmul.mubr.bf16.gmra.mxu0 %v2172
        %v2306 = vpop.f32.mrf.mxu0
        %v2307 = vadd.f32 0.0, %v2306
        %v2308 = vpop.f32.mrf.mxu0
        %v2309 = vpop.f32.mrf.mxu0
        %v2310 = vadd.f32 0.0, %v2309
        %v2311 = vpop.f32.mrf.mxu0
        %2312 = vmatprep.mubr.bf16.mxu0 0
        %2313 = vmatmul.mubr.bf16.gmra.mxu0 %v2175
        %v2314 = vpop.f32.mrf.mxu0
        %v2315 = vadd.f32 0.0, %v2314
        %v2316 = vpop.f32.mrf.mxu0
        %v2317 = vpop.f32.mrf.mxu0
        %v2318 = vadd.f32 0.0, %v2317
        %v2319 = vpop.f32.mrf.mxu0
        %2320 = vmatprep.mubr.bf16.mxu0 0
        %2321 = vmatmul.mubr.bf16.gmra.mxu0 %v2178
        %v2322 = vpop.f32.mrf.mxu0
        %v2323 = vadd.f32 0.0, %v2322
        %v2324 = vpop.f32.mrf.mxu0
        %v2325 = vpop.f32.mrf.mxu0
        %v2326 = vadd.f32 0.0, %v2325
        %v2327 = vpop.f32.mrf.mxu0
        %2328 = vmatprep.mubr.bf16.mxu0 0
        %2329 = vmatmul.mubr.bf16.gmra.mxu0 %v2181
        %v2330 = vpop.f32.mrf.mxu0
        %v2331 = vadd.f32 0.0, %v2330
        %v2332 = vpop.f32.mrf.mxu0
        %v2333 = vpop.f32.mrf.mxu0
        %v2334 = vadd.f32 0.0, %v2333
        %v2335 = vpop.f32.mrf.mxu0
        %2336 = vmatprep.mubr.bf16.mxu0 0
        %2337 = vmatmul.mubr.bf16.gmra.mxu0 %v2184
        %v2338 = vpop.f32.mrf.mxu0
        %v2339 = vadd.f32 0.0, %v2338
        %v2340 = vpop.f32.mrf.mxu0
        %v2341 = vpop.f32.mrf.mxu0
        %v2342 = vadd.f32 0.0, %v2341
        %v2343 = vpop.f32.mrf.mxu0
        %2344 = vmatprep.mubr.bf16.mxu0 0
        %2345 = vmatmul.mubr.bf16.gmra.mxu0 %v2187
        %v2346 = vpop.f32.mrf.mxu0
        %v2347 = vadd.f32 0.0, %v2346
        %v2348 = vpop.f32.mrf.mxu0
        %v2349 = vpop.f32.mrf.mxu0
        %v2350 = vadd.f32 0.0, %v2349
        %v2351 = vpop.f32.mrf.mxu0
        %2352 = vdwg.mxu0
        %v2353 = vadd.f32 %v2027, %v2227
        %v2354 = vadd.f32 %v2028, %v2230
        %v2355 = vadd.f32 %v2029, %v2235
        %v2356 = vadd.f32 %v2030, %v2238
        %v2357 = vadd.f32 %v2031, %v2243
        %v2358 = vadd.f32 %v2032, %v2246
        %v2359 = vadd.f32 %v2033, %v2251
        %v2360 = vadd.f32 %v2034, %v2254
        %v2361 = vadd.f32 %v2035, %v2259
        %v2362 = vadd.f32 %v2036, %v2262
        %v2363 = vadd.f32 %v2037, %v2267
        %v2364 = vadd.f32 %v2038, %v2270
        %v2365 = vadd.f32 %v2039, %v2275
        %v2366 = vadd.f32 %v2040, %v2278
        %v2367 = vadd.f32 %v2041, %v2283
        %v2368 = vadd.f32 %v2042, %v2286
        %v2369 = vadd.f32 %v2043, %v2291
        %v2370 = vadd.f32 %v2044, %v2294
        %v2371 = vadd.f32 %v2045, %v2299
        %v2372 = vadd.f32 %v2046, %v2302
        %v2373 = vadd.f32 %v2047, %v2307
        %v2374 = vadd.f32 %v2048, %v2310
        %v2375 = vadd.f32 %v2049, %v2315
        %v2376 = vadd.f32 %v2050, %v2318
        %v2377 = vadd.f32 %v2051, %v2323
        %v2378 = vadd.f32 %v2052, %v2326
        %v2379 = vadd.f32 %v2053, %v2331
        %v2380 = vadd.f32 %v2054, %v2334
        %v2381 = vadd.f32 %v2055, %v2339
        %v2382 = vadd.f32 %v2056, %v2342
        %v2383 = vadd.f32 %v2057, %v2347
        %v2384 = vadd.f32 %v2058, %v2350
        %2385 = vst [vmem:[%s163] sm:$0xff] %v2353
        %2386 = vst [vmem:[%s163 + $0x8] sm:$0xff] %v2354
        %2387 = vst [vmem:[%s163 + $0x10] sm:$0xff] %v2355
        %2388 = vst [vmem:[%s163 + $0x18] sm:$0xff] %v2356
        %2389 = vst [vmem:[%s163 + $0x20] sm:$0xff] %v2357
        %2390 = vst [vmem:[%s163 + $0x28] sm:$0xff] %v2358
        %2391 = vst [vmem:[%s163 + $0x30] sm:$0xff] %v2359
        %2392 = vst [vmem:[%s163 + $0x38] sm:$0xff] %v2360
        %2393 = vst [vmem:[%s163 + $0x40] sm:$0xff] %v2361
        %2394 = vst [vmem:[%s163 + $0x48] sm:$0xff] %v2362
        %2395 = vst [vmem:[%s163 + $0x50] sm:$0xff] %v2363
        %2396 = vst [vmem:[%s163 + $0x58] sm:$0xff] %v2364
        %2397 = vst [vmem:[%s163 + $0x60] sm:$0xff] %v2365
        %2398 = vst [vmem:[%s163 + $0x68] sm:$0xff] %v2366
        %2399 = vst [vmem:[%s163 + $0x70] sm:$0xff] %v2367
        %2400 = vst [vmem:[%s163 + $0x78] sm:$0xff] %v2368
        %2401 = vst [vmem:[%s163 + $0x80] sm:$0xff] %v2369
        %2402 = vst [vmem:[%s163 + $0x88] sm:$0xff] %v2370
        %2403 = vst [vmem:[%s163 + $0x90] sm:$0xff] %v2371
        %2404 = vst [vmem:[%s163 + $0x98] sm:$0xff] %v2372
        %2405 = vst [vmem:[%s163 + $0xa0] sm:$0xff] %v2373
        %2406 = vst [vmem:[%s163 + $0xa8] sm:$0xff] %v2374
        %2407 = vst [vmem:[%s163 + $0xb0] sm:$0xff] %v2375
        %2408 = vst [vmem:[%s163 + $0xb8] sm:$0xff] %v2376
        %2409 = vst [vmem:[%s163 + $0xc0] sm:$0xff] %v2377
        %2410 = vst [vmem:[%s163 + $0xc8] sm:$0xff] %v2378
        %2411 = vst [vmem:[%s163 + $0xd0] sm:$0xff] %v2379
        %2412 = vst [vmem:[%s163 + $0xd8] sm:$0xff] %v2380
        %2413 = vst [vmem:[%s163 + $0xe0] sm:$0xff] %v2381
        %2414 = vst [vmem:[%s163 + $0xe8] sm:$0xff] %v2382
        %2415 = vst [vmem:[%s163 + $0xf0] sm:$0xff] %v2383
        %2416 = vst [vmem:[%s163 + $0xf8] sm:$0xff] %v2384
        %v2417 = vld [vmem:[%s1994] sm:$0xf]
        %v2418 = vld [vmem:[%s1994 + $0x4] sm:$0xf]
        %v2419 = vld [vmem:[%s1994 + $0x8] sm:$0x1]
        %v2420 = vld [vmem:[%s1994 + $0xc] sm:$0xf]
        %v2421 = vld [vmem:[%s1994 + $0x10] sm:$0xf]
        %v2422 = vld [vmem:[%s1994 + $0x14] sm:$0x1]
        %v2423 = vld [vmem:[%s1994 + $0x18] sm:$0xf]
        %v2424 = vld [vmem:[%s1994 + $0x1c] sm:$0xf]
        %v2425 = vld [vmem:[%s1994 + $0x20] sm:$0x1]
        %v2426 = vld [vmem:[%s1994 + $0x24] sm:$0xf]
        %v2427 = vld [vmem:[%s1994 + $0x28] sm:$0xf]
        %v2428 = vld [vmem:[%s1994 + $0x2c] sm:$0x1]
        %v2429 = vld [vmem:[%s1994 + $0x30] sm:$0xf]
        %v2430 = vld [vmem:[%s1994 + $0x34] sm:$0xf]
        %v2431 = vld [vmem:[%s1994 + $0x38] sm:$0x1]
        %v2432 = vld [vmem:[%s1994 + $0x3c] sm:$0xf]
        %v2433 = vld [vmem:[%s1994 + $0x40] sm:$0xf]
        %v2434 = vld [vmem:[%s1994 + $0x44] sm:$0x1]
        %v2435 = vld [vmem:[%s1994 + $0x48] sm:$0xf]
        %v2436 = vld [vmem:[%s1994 + $0x4c] sm:$0xf]
        %v2437 = vld [vmem:[%s1994 + $0x50] sm:$0x1]
        %v2438 = vld [vmem:[%s1994 + $0x54] sm:$0xf]
        %v2439 = vld [vmem:[%s1994 + $0x58] sm:$0xf]
        %v2440 = vld [vmem:[%s1994 + $0x5c] sm:$0x1]
        %v2441 = vld [vmem:[%s1994 + $0x60] sm:$0xf]
        %v2442 = vld [vmem:[%s1994 + $0x64] sm:$0xf]
        %v2443 = vld [vmem:[%s1994 + $0x68] sm:$0x1]
        %v2444 = vld [vmem:[%s1994 + $0x6c] sm:$0xf]
        %v2445 = vld [vmem:[%s1994 + $0x70] sm:$0xf]
        %v2446 = vld [vmem:[%s1994 + $0x74] sm:$0x1]
        %v2447 = vld [vmem:[%s1994 + $0x78] sm:$0xf]
        %v2448 = vld [vmem:[%s1994 + $0x7c] sm:$0xf]
        %v2449 = vld [vmem:[%s1994 + $0x80] sm:$0x1]
        %v2450 = vld [vmem:[%s1994 + $0x84] sm:$0xf]
        %v2451 = vld [vmem:[%s1994 + $0x88] sm:$0xf]
        %v2452 = vld [vmem:[%s1994 + $0x8c] sm:$0x1]
        %v2453 = vld [vmem:[%s1994 + $0x90] sm:$0xf]
        %v2454 = vld [vmem:[%s1994 + $0x94] sm:$0xf]
        %v2455 = vld [vmem:[%s1994 + $0x98] sm:$0x1]
        %v2456 = vld [vmem:[%s1994 + $0x9c] sm:$0xf]
        %v2457 = vld [vmem:[%s1994 + $0xa0] sm:$0xf]
        %v2458 = vld [vmem:[%s1994 + $0xa4] sm:$0x1]
        %v2459 = vld [vmem:[%s1994 + $0xa8] sm:$0xf]
        %v2460 = vld [vmem:[%s1994 + $0xac] sm:$0xf]
        %v2461 = vld [vmem:[%s1994 + $0xb0] sm:$0x1]
        %v2462 = vld [vmem:[%s1994 + $0xb4] sm:$0xf]
        %v2463 = vld [vmem:[%s1994 + $0xb8] sm:$0xf]
        %v2464 = vld [vmem:[%s1994 + $0xbc] sm:$0x1]
        %v2466 = vshrl.u32 %v2417, 16
        %v2468 = vrot.slane %v2466, 4
        %v2469 = vshll.u32 %v2417, 16
        %v2471 = vrot.slane %v2469, 5
        %v2472 = vor.u32 %v2468, %v2471
        %v2473 = vrot.slane %v2472, 4
        %v2475 = vshll.u32 %v2418, 16
        %v2477 = vrot.slane %v2475, 5
        %v2478 = vsel %vm682, %v2473, %v2477
        %v2479 = vshrl.u32 %v2418, 16
        %v2481 = vrot.slane %v2479, 4
        %v2482 = vor.u32 %v2481, %v2477
        %v2483 = vrot.slane %v2482, 4
        %v2485 = vshll.u32 %v2419, 16
        %v2487 = vrot.slane %v2485, 5
        %v2488 = vsel %vm682, %v2483, %v2487
        %v2490 = vshrl.u32 %v2420, 16
        %v2492 = vrot.slane %v2490, 4
        %v2493 = vshll.u32 %v2420, 16
        %v2495 = vrot.slane %v2493, 5
        %v2496 = vor.u32 %v2492, %v2495
        %v2497 = vrot.slane %v2496, 4
        %v2499 = vshll.u32 %v2421, 16
        %v2501 = vrot.slane %v2499, 5
        %v2502 = vsel %vm682, %v2497, %v2501
        %v2503 = vshrl.u32 %v2421, 16
        %v2505 = vrot.slane %v2503, 4
        %v2506 = vor.u32 %v2505, %v2501
        %v2507 = vrot.slane %v2506, 4
        %v2509 = vshll.u32 %v2422, 16
        %v2511 = vrot.slane %v2509, 5
        %v2512 = vsel %vm682, %v2507, %v2511
        %v2514 = vshrl.u32 %v2423, 16
        %v2516 = vrot.slane %v2514, 4
        %v2517 = vshll.u32 %v2423, 16
        %v2519 = vrot.slane %v2517, 5
        %v2520 = vor.u32 %v2516, %v2519
        %v2521 = vrot.slane %v2520, 4
        %v2523 = vshll.u32 %v2424, 16
        %v2525 = vrot.slane %v2523, 5
        %v2526 = vsel %vm682, %v2521, %v2525
        %v2527 = vshrl.u32 %v2424, 16
        %v2529 = vrot.slane %v2527, 4
        %v2530 = vor.u32 %v2529, %v2525
        %v2531 = vrot.slane %v2530, 4
        %v2533 = vshll.u32 %v2425, 16
        %v2535 = vrot.slane %v2533, 5
        %v2536 = vsel %vm682, %v2531, %v2535
        %v2538 = vshrl.u32 %v2426, 16
        %v2540 = vrot.slane %v2538, 4
        %v2541 = vshll.u32 %v2426, 16
        %v2543 = vrot.slane %v2541, 5
        %v2544 = vor.u32 %v2540, %v2543
        %v2545 = vrot.slane %v2544, 4
        %v2547 = vshll.u32 %v2427, 16
        %v2549 = vrot.slane %v2547, 5
        %v2550 = vsel %vm682, %v2545, %v2549
        %v2551 = vshrl.u32 %v2427, 16
        %v2553 = vrot.slane %v2551, 4
        %v2554 = vor.u32 %v2553, %v2549
        %v2555 = vrot.slane %v2554, 4
        %v2557 = vshll.u32 %v2428, 16
        %v2559 = vrot.slane %v2557, 5
        %v2560 = vsel %vm682, %v2555, %v2559
        %v2562 = vshrl.u32 %v2429, 16
        %v2564 = vrot.slane %v2562, 4
        %v2565 = vshll.u32 %v2429, 16
        %v2567 = vrot.slane %v2565, 5
        %v2568 = vor.u32 %v2564, %v2567
        %v2569 = vrot.slane %v2568, 4
        %v2571 = vshll.u32 %v2430, 16
        %v2573 = vrot.slane %v2571, 5
        %v2574 = vsel %vm682, %v2569, %v2573
        %v2575 = vshrl.u32 %v2430, 16
        %v2577 = vrot.slane %v2575, 4
        %v2578 = vor.u32 %v2577, %v2573
        %v2579 = vrot.slane %v2578, 4
        %v2581 = vshll.u32 %v2431, 16
        %v2583 = vrot.slane %v2581, 5
        %v2584 = vsel %vm682, %v2579, %v2583
        %v2586 = vshrl.u32 %v2432, 16
        %v2588 = vrot.slane %v2586, 4
        %v2589 = vshll.u32 %v2432, 16
        %v2591 = vrot.slane %v2589, 5
        %v2592 = vor.u32 %v2588, %v2591
        %v2593 = vrot.slane %v2592, 4
        %v2595 = vshll.u32 %v2433, 16
        %v2597 = vrot.slane %v2595, 5
        %v2598 = vsel %vm682, %v2593, %v2597
        %v2599 = vshrl.u32 %v2433, 16
        %v2601 = vrot.slane %v2599, 4
        %v2602 = vor.u32 %v2601, %v2597
        %v2603 = vrot.slane %v2602, 4
        %v2605 = vshll.u32 %v2434, 16
        %v2607 = vrot.slane %v2605, 5
        %v2608 = vsel %vm682, %v2603, %v2607
        %v2610 = vshrl.u32 %v2435, 16
        %v2612 = vrot.slane %v2610, 4
        %v2613 = vshll.u32 %v2435, 16
        %v2615 = vrot.slane %v2613, 5
        %v2616 = vor.u32 %v2612, %v2615
        %v2617 = vrot.slane %v2616, 4
        %v2619 = vshll.u32 %v2436, 16
        %v2621 = vrot.slane %v2619, 5
        %v2622 = vsel %vm682, %v2617, %v2621
        %v2623 = vshrl.u32 %v2436, 16
        %v2625 = vrot.slane %v2623, 4
        %v2626 = vor.u32 %v2625, %v2621
        %v2627 = vrot.slane %v2626, 4
        %v2629 = vshll.u32 %v2437, 16
        %v2631 = vrot.slane %v2629, 5
        %v2632 = vsel %vm682, %v2627, %v2631
        %v2634 = vshrl.u32 %v2438, 16
        %v2636 = vrot.slane %v2634, 4
        %v2637 = vshll.u32 %v2438, 16
        %v2639 = vrot.slane %v2637, 5
        %v2640 = vor.u32 %v2636, %v2639
        %v2641 = vrot.slane %v2640, 4
        %v2643 = vshll.u32 %v2439, 16
        %v2645 = vrot.slane %v2643, 5
        %v2646 = vsel %vm682, %v2641, %v2645
        %v2647 = vshrl.u32 %v2439, 16
        %v2649 = vrot.slane %v2647, 4
        %v2650 = vor.u32 %v2649, %v2645
        %v2651 = vrot.slane %v2650, 4
        %v2653 = vshll.u32 %v2440, 16
        %v2655 = vrot.slane %v2653, 5
        %v2656 = vsel %vm682, %v2651, %v2655
        %v2658 = vshrl.u32 %v2441, 16
        %v2660 = vrot.slane %v2658, 4
        %v2661 = vshll.u32 %v2441, 16
        %v2663 = vrot.slane %v2661, 5
        %v2664 = vor.u32 %v2660, %v2663
        %v2665 = vrot.slane %v2664, 4
        %v2667 = vshll.u32 %v2442, 16
        %v2669 = vrot.slane %v2667, 5
        %v2670 = vsel %vm682, %v2665, %v2669
        %v2671 = vshrl.u32 %v2442, 16
        %v2673 = vrot.slane %v2671, 4
        %v2674 = vor.u32 %v2673, %v2669
        %v2675 = vrot.slane %v2674, 4
        %v2677 = vshll.u32 %v2443, 16
        %v2679 = vrot.slane %v2677, 5
        %v2680 = vsel %vm682, %v2675, %v2679
        %v2682 = vshrl.u32 %v2444, 16
        %v2684 = vrot.slane %v2682, 4
        %v2685 = vshll.u32 %v2444, 16
        %v2687 = vrot.slane %v2685, 5
        %v2688 = vor.u32 %v2684, %v2687
        %v2689 = vrot.slane %v2688, 4
        %v2691 = vshll.u32 %v2445, 16
        %v2693 = vrot.slane %v2691, 5
        %v2694 = vsel %vm682, %v2689, %v2693
        %v2695 = vshrl.u32 %v2445, 16
        %v2697 = vrot.slane %v2695, 4
        %v2698 = vor.u32 %v2697, %v2693
        %v2699 = vrot.slane %v2698, 4
        %v2701 = vshll.u32 %v2446, 16
        %v2703 = vrot.slane %v2701, 5
        %v2704 = vsel %vm682, %v2699, %v2703
        %v2706 = vshrl.u32 %v2447, 16
        %v2708 = vrot.slane %v2706, 4
        %v2709 = vshll.u32 %v2447, 16
        %v2711 = vrot.slane %v2709, 5
        %v2712 = vor.u32 %v2708, %v2711
        %v2713 = vrot.slane %v2712, 4
        %v2715 = vshll.u32 %v2448, 16
        %v2717 = vrot.slane %v2715, 5
        %v2718 = vsel %vm682, %v2713, %v2717
        %v2719 = vshrl.u32 %v2448, 16
        %v2721 = vrot.slane %v2719, 4
        %v2722 = vor.u32 %v2721, %v2717
        %v2723 = vrot.slane %v2722, 4
        %v2725 = vshll.u32 %v2449, 16
        %v2727 = vrot.slane %v2725, 5
        %v2728 = vsel %vm682, %v2723, %v2727
        %v2730 = vshrl.u32 %v2450, 16
        %v2732 = vrot.slane %v2730, 4
        %v2733 = vshll.u32 %v2450, 16
        %v2735 = vrot.slane %v2733, 5
        %v2736 = vor.u32 %v2732, %v2735
        %v2737 = vrot.slane %v2736, 4
        %v2739 = vshll.u32 %v2451, 16
        %v2741 = vrot.slane %v2739, 5
        %v2742 = vsel %vm682, %v2737, %v2741
        %v2743 = vshrl.u32 %v2451, 16
        %v2745 = vrot.slane %v2743, 4
        %v2746 = vor.u32 %v2745, %v2741
        %v2747 = vrot.slane %v2746, 4
        %v2749 = vshll.u32 %v2452, 16
        %v2751 = vrot.slane %v2749, 5
        %v2752 = vsel %vm682, %v2747, %v2751
        %v2754 = vshrl.u32 %v2453, 16
        %v2756 = vrot.slane %v2754, 4
        %v2757 = vshll.u32 %v2453, 16
        %v2759 = vrot.slane %v2757, 5
        %v2760 = vor.u32 %v2756, %v2759
        %v2761 = vrot.slane %v2760, 4
        %v2763 = vshll.u32 %v2454, 16
        %v2765 = vrot.slane %v2763, 5
        %v2766 = vsel %vm682, %v2761, %v2765
        %v2767 = vshrl.u32 %v2454, 16
        %v2769 = vrot.slane %v2767, 4
        %v2770 = vor.u32 %v2769, %v2765
        %v2771 = vrot.slane %v2770, 4
        %v2773 = vshll.u32 %v2455, 16
        %v2775 = vrot.slane %v2773, 5
        %v2776 = vsel %vm682, %v2771, %v2775
        %v2778 = vshrl.u32 %v2456, 16
        %v2780 = vrot.slane %v2778, 4
        %v2781 = vshll.u32 %v2456, 16
        %v2783 = vrot.slane %v2781, 5
        %v2784 = vor.u32 %v2780, %v2783
        %v2785 = vrot.slane %v2784, 4
        %v2787 = vshll.u32 %v2457, 16
        %v2789 = vrot.slane %v2787, 5
        %v2790 = vsel %vm682, %v2785, %v2789
        %v2791 = vshrl.u32 %v2457, 16
        %v2793 = vrot.slane %v2791, 4
        %v2794 = vor.u32 %v2793, %v2789
        %v2795 = vrot.slane %v2794, 4
        %v2797 = vshll.u32 %v2458, 16
        %v2799 = vrot.slane %v2797, 5
        %v2800 = vsel %vm682, %v2795, %v2799
        %v2802 = vshrl.u32 %v2459, 16
        %v2804 = vrot.slane %v2802, 4
        %v2805 = vshll.u32 %v2459, 16
        %v2807 = vrot.slane %v2805, 5
        %v2808 = vor.u32 %v2804, %v2807
        %v2809 = vrot.slane %v2808, 4
        %v2811 = vshll.u32 %v2460, 16
        %v2813 = vrot.slane %v2811, 5
        %v2814 = vsel %vm682, %v2809, %v2813
        %v2815 = vshrl.u32 %v2460, 16
        %v2817 = vrot.slane %v2815, 4
        %v2818 = vor.u32 %v2817, %v2813
        %v2819 = vrot.slane %v2818, 4
        %v2821 = vshll.u32 %v2461, 16
        %v2823 = vrot.slane %v2821, 5
        %v2824 = vsel %vm682, %v2819, %v2823
        %v2826 = vshrl.u32 %v2462, 16
        %v2828 = vrot.slane %v2826, 4
        %v2829 = vshll.u32 %v2462, 16
        %v2831 = vrot.slane %v2829, 5
        %v2832 = vor.u32 %v2828, %v2831
        %v2833 = vrot.slane %v2832, 4
        %v2835 = vshll.u32 %v2463, 16
        %v2837 = vrot.slane %v2835, 5
        %v2838 = vsel %vm682, %v2833, %v2837
        %v2839 = vshrl.u32 %v2463, 16
        %v2841 = vrot.slane %v2839, 4
        %v2842 = vor.u32 %v2841, %v2837
        %v2843 = vrot.slane %v2842, 4
        %v2845 = vshll.u32 %v2464, 16
        %v2847 = vrot.slane %v2845, 5
        %v2848 = vsel %vm682, %v2843, %v2847
        %v2849 = vld [vmem:[%s163] sm:$0xff]
        %v2850 = vld [vmem:[%s163 + $0x8] sm:$0xff]
        %v2851 = vld [vmem:[%s163 + $0x10] sm:$0xff]
        %v2852 = vld [vmem:[%s163 + $0x18] sm:$0xff]
        %v2853 = vld [vmem:[%s163 + $0x20] sm:$0xff]
        %v2854 = vld [vmem:[%s163 + $0x28] sm:$0xff]
        %v2855 = vld [vmem:[%s163 + $0x30] sm:$0xff]
        %v2856 = vld [vmem:[%s163 + $0x38] sm:$0xff]
        %v2857 = vld [vmem:[%s163 + $0x40] sm:$0xff]
        %v2858 = vld [vmem:[%s163 + $0x48] sm:$0xff]
        %v2859 = vld [vmem:[%s163 + $0x50] sm:$0xff]
        %v2860 = vld [vmem:[%s163 + $0x58] sm:$0xff]
        %v2861 = vld [vmem:[%s163 + $0x60] sm:$0xff]
        %v2862 = vld [vmem:[%s163 + $0x68] sm:$0xff]
        %v2863 = vld [vmem:[%s163 + $0x70] sm:$0xff]
        %v2864 = vld [vmem:[%s163 + $0x78] sm:$0xff]
        %v2865 = vld [vmem:[%s163 + $0x80] sm:$0xff]
        %v2866 = vld [vmem:[%s163 + $0x88] sm:$0xff]
        %v2867 = vld [vmem:[%s163 + $0x90] sm:$0xff]
        %v2868 = vld [vmem:[%s163 + $0x98] sm:$0xff]
        %v2869 = vld [vmem:[%s163 + $0xa0] sm:$0xff]
        %v2870 = vld [vmem:[%s163 + $0xa8] sm:$0xff]
        %v2871 = vld [vmem:[%s163 + $0xb0] sm:$0xff]
        %v2872 = vld [vmem:[%s163 + $0xb8] sm:$0xff]
        %v2873 = vld [vmem:[%s163 + $0xc0] sm:$0xff]
        %v2874 = vld [vmem:[%s163 + $0xc8] sm:$0xff]
        %v2875 = vld [vmem:[%s163 + $0xd0] sm:$0xff]
        %v2876 = vld [vmem:[%s163 + $0xd8] sm:$0xff]
        %v2877 = vld [vmem:[%s163 + $0xe0] sm:$0xff]
        %v2878 = vld [vmem:[%s163 + $0xe8] sm:$0xff]
        %v2879 = vld [vmem:[%s163 + $0xf0] sm:$0xff]
        %v2880 = vld [vmem:[%s163 + $0xf8] sm:$0xff]
        %s2881 = scalar_lea.vmem %s1, 8
        %v2882 = vld [vmem:[%s2881] sm:$0x3]
        %v2883 = vunpack.c.l.b16 %v2478
        %v2884 = vunpack.c.l.b16 %v2488
        %v2885 = vunpack.c.l.b16 %v2502
        %v2886 = vunpack.c.l.b16 %v2512
        %v2887 = vunpack.c.l.b16 %v2526
        %v2888 = vunpack.c.l.b16 %v2536
        %v2889 = vunpack.c.l.b16 %v2550
        %v2890 = vunpack.c.l.b16 %v2560
        %v2891 = vunpack.c.l.b16 %v2574
        %v2892 = vunpack.c.l.b16 %v2584
        %v2893 = vunpack.c.l.b16 %v2598
        %v2894 = vunpack.c.l.b16 %v2608
        %v2895 = vunpack.c.l.b16 %v2622
        %v2896 = vunpack.c.l.b16 %v2632
        %v2897 = vunpack.c.l.b16 %v2646
        %v2898 = vunpack.c.l.b16 %v2656
        %v2899 = vunpack.c.l.b16 %v2670
        %v2900 = vunpack.c.l.b16 %v2680
        %v2901 = vunpack.c.l.b16 %v2694
        %v2902 = vunpack.c.l.b16 %v2704
        %v2903 = vunpack.c.l.b16 %v2718
        %v2904 = vunpack.c.l.b16 %v2728
        %v2905 = vunpack.c.l.b16 %v2742
        %v2906 = vunpack.c.l.b16 %v2752
        %v2907 = vunpack.c.l.b16 %v2766
        %v2908 = vunpack.c.l.b16 %v2776
        %v2909 = vunpack.c.l.b16 %v2790
        %v2910 = vunpack.c.l.b16 %v2800
        %v2911 = vunpack.c.l.b16 %v2814
        %v2912 = vunpack.c.l.b16 %v2824
        %v2913 = vunpack.c.l.b16 %v2838
        %v2914 = vunpack.c.l.b16 %v2848
        %v2915 = vpack.c.b16 %v2884, %v2883
        %v2916 = vpack.c.b16 %v2886, %v2885
        %v2917 = vpack.c.b16 %v2888, %v2887
        %v2918 = vpack.c.b16 %v2890, %v2889
        %v2919 = vpack.c.b16 %v2892, %v2891
        %v2920 = vpack.c.b16 %v2894, %v2893
        %v2921 = vpack.c.b16 %v2896, %v2895
        %v2922 = vpack.c.b16 %v2898, %v2897
        %v2923 = vpack.c.b16 %v2900, %v2899
        %v2924 = vpack.c.b16 %v2902, %v2901
        %v2925 = vpack.c.b16 %v2904, %v2903
        %v2926 = vpack.c.b16 %v2906, %v2905
        %v2927 = vpack.c.b16 %v2908, %v2907
        %v2928 = vpack.c.b16 %v2910, %v2909
        %v2929 = vpack.c.b16 %v2912, %v2911
        %v2930 = vpack.c.b16 %v2914, %v2913
        %v2932 = vsel %vm354, %v2915, 0
        %v2935 = vsel %vm354, %v2916, 0
        %v2938 = vsel %vm354, %v2917, 0
        %v2941 = vsel %vm354, %v2918, 0
        %v2944 = vsel %vm354, %v2919, 0
        %v2947 = vsel %vm354, %v2920, 0
        %v2950 = vsel %vm354, %v2921, 0
        %v2953 = vsel %vm354, %v2922, 0
        %v2956 = vsel %vm354, %v2923, 0
        %v2959 = vsel %vm354, %v2924, 0
        %v2962 = vsel %vm354, %v2925, 0
        %v2965 = vsel %vm354, %v2926, 0
        %v2968 = vsel %vm354, %v2927, 0
        %v2971 = vsel %vm354, %v2928, 0
        %v2974 = vsel %vm354, %v2929, 0
        %v2977 = vsel %vm354, %v2930, 0
        %v2980 = vsel %vm403, %v2882, 0
        %2982 = vmatprep.subr.bf16.mxu0 0
        %2983 = vmatpush1.bf16.msra.mxu0 0
        %2984 = vmatprep.subr.bf16.mxu0 0
        %2985 = vmatpush1.bf16.msra.mxu0 0
        %2986 = vmatprep.subr.bf16.mxu0 0
        %2987 = vmatpush1.bf16.msra.mxu0 0
        %2988 = vmatprep.subr.bf16.mxu0 0
        %2989 = vmatpush1.bf16.msra.mxu0 0
        %2990 = vmatprep.subr.bf16.mxu0 0
        %2991 = vmatpush1.bf16.msra.mxu0 0
        %2992 = vmatprep.subr.bf16.mxu0 0
        %2993 = vmatpush1.bf16.msra.mxu0 0
        %2994 = vmatprep.subr.bf16.mxu0 0
        %2995 = vmatpush1.bf16.msra.mxu0 0
        %2996 = vmatprep.subr.bf16.mxu0 0
        %2997 = vmatpush1.bf16.msra.mxu0 %v2980
        %2998 = vmatprep.subr.bf16.mxu0 0
        %2999 = vmatpush2.bf16.msra.mxu0 0
        %3000 = vmatprep.subr.bf16.mxu0 0
        %3001 = vmatpush2.bf16.msra.mxu0 0
        %3002 = vmatprep.subr.bf16.mxu0 0
        %3003 = vmatpush2.bf16.msra.mxu0 0
        %3004 = vmatprep.subr.bf16.mxu0 0
        %3005 = vmatpush2.bf16.msra.mxu0 0
        %3006 = vmatprep.subr.bf16.mxu0 0
        %3007 = vmatpush2.bf16.msra.mxu0 0
        %3008 = vmatprep.subr.bf16.mxu0 0
        %3009 = vmatpush2.bf16.msra.mxu0 0
        %3010 = vmatprep.subr.bf16.mxu0 0
        %3011 = vmatpush2.bf16.msra.mxu0 0
        %3012 = vmatprep.subr.bf16.mxu0 0
        %3013 = vmatpush2.bf16.msra.mxu0 0
        %3014 = vmatprep.mubr.bf16.mxu0 0
        %3015 = vmatmul.mubr.bf16.gmra.mxu0 %v2932
        %v3016 = vpop.f32.mrf.mxu0
        %v3017 = vadd.f32 0.0, %v3016
        %v3018 = vpop.f32.mrf.mxu0
        %v3019 = vpop.f32.mrf.mxu0
        %v3020 = vadd.f32 0.0, %v3019
        %v3021 = vpop.f32.mrf.mxu0
        %3022 = vmatprep.mubr.bf16.mxu0 0
        %3023 = vmatmul.mubr.bf16.gmra.mxu0 %v2935
        %v3024 = vpop.f32.mrf.mxu0
        %v3025 = vadd.f32 0.0, %v3024
        %v3026 = vpop.f32.mrf.mxu0
        %v3027 = vpop.f32.mrf.mxu0
        %v3028 = vadd.f32 0.0, %v3027
        %v3029 = vpop.f32.mrf.mxu0
        %3030 = vmatprep.mubr.bf16.mxu0 0
        %3031 = vmatmul.mubr.bf16.gmra.mxu0 %v2938
        %v3032 = vpop.f32.mrf.mxu0
        %v3033 = vadd.f32 0.0, %v3032
        %v3034 = vpop.f32.mrf.mxu0
        %v3035 = vpop.f32.mrf.mxu0
        %v3036 = vadd.f32 0.0, %v3035
        %v3037 = vpop.f32.mrf.mxu0
        %3038 = vmatprep.mubr.bf16.mxu0 0
        %3039 = vmatmul.mubr.bf16.gmra.mxu0 %v2941
        %v3040 = vpop.f32.mrf.mxu0
        %v3041 = vadd.f32 0.0, %v3040
        %v3042 = vpop.f32.mrf.mxu0
        %v3043 = vpop.f32.mrf.mxu0
        %v3044 = vadd.f32 0.0, %v3043
        %v3045 = vpop.f32.mrf.mxu0
        %3046 = vmatprep.mubr.bf16.mxu0 0
        %3047 = vmatmul.mubr.bf16.gmra.mxu0 %v2944
        %v3048 = vpop.f32.mrf.mxu0
        %v3049 = vadd.f32 0.0, %v3048
        %v3050 = vpop.f32.mrf.mxu0
        %v3051 = vpop.f32.mrf.mxu0
        %v3052 = vadd.f32 0.0, %v3051
        %v3053 = vpop.f32.mrf.mxu0
        %3054 = vmatprep.mubr.bf16.mxu0 0
        %3055 = vmatmul.mubr.bf16.gmra.mxu0 %v2947
        %v3056 = vpop.f32.mrf.mxu0
        %v3057 = vadd.f32 0.0, %v3056
        %v3058 = vpop.f32.mrf.mxu0
        %v3059 = vpop.f32.mrf.mxu0
        %v3060 = vadd.f32 0.0, %v3059
        %v3061 = vpop.f32.mrf.mxu0
        %3062 = vmatprep.mubr.bf16.mxu0 0
        %3063 = vmatmul.mubr.bf16.gmra.mxu0 %v2950
        %v3064 = vpop.f32.mrf.mxu0
        %v3065 = vadd.f32 0.0, %v3064
        %v3066 = vpop.f32.mrf.mxu0
        %v3067 = vpop.f32.mrf.mxu0
        %v3068 = vadd.f32 0.0, %v3067
        %v3069 = vpop.f32.mrf.mxu0
        %3070 = vmatprep.mubr.bf16.mxu0 0
        %3071 = vmatmul.mubr.bf16.gmra.mxu0 %v2953
        %v3072 = vpop.f32.mrf.mxu0
        %v3073 = vadd.f32 0.0, %v3072
        %v3074 = vpop.f32.mrf.mxu0
        %v3075 = vpop.f32.mrf.mxu0
        %v3076 = vadd.f32 0.0, %v3075
        %v3077 = vpop.f32.mrf.mxu0
        %3078 = vmatprep.mubr.bf16.mxu0 0
        %3079 = vmatmul.mubr.bf16.gmra.mxu0 %v2956
        %v3080 = vpop.f32.mrf.mxu0
        %v3081 = vadd.f32 0.0, %v3080
        %v3082 = vpop.f32.mrf.mxu0
        %v3083 = vpop.f32.mrf.mxu0
        %v3084 = vadd.f32 0.0, %v3083
        %v3085 = vpop.f32.mrf.mxu0
        %3086 = vmatprep.mubr.bf16.mxu0 0
        %3087 = vmatmul.mubr.bf16.gmra.mxu0 %v2959
        %v3088 = vpop.f32.mrf.mxu0
        %v3089 = vadd.f32 0.0, %v3088
        %v3090 = vpop.f32.mrf.mxu0
        %v3091 = vpop.f32.mrf.mxu0
        %v3092 = vadd.f32 0.0, %v3091
        %v3093 = vpop.f32.mrf.mxu0
        %3094 = vmatprep.mubr.bf16.mxu0 0
        %3095 = vmatmul.mubr.bf16.gmra.mxu0 %v2962
        %v3096 = vpop.f32.mrf.mxu0
        %v3097 = vadd.f32 0.0, %v3096
        %v3098 = vpop.f32.mrf.mxu0
        %v3099 = vpop.f32.mrf.mxu0
        %v3100 = vadd.f32 0.0, %v3099
        %v3101 = vpop.f32.mrf.mxu0
        %3102 = vmatprep.mubr.bf16.mxu0 0
        %3103 = vmatmul.mubr.bf16.gmra.mxu0 %v2965
        %v3104 = vpop.f32.mrf.mxu0
        %v3105 = vadd.f32 0.0, %v3104
        %v3106 = vpop.f32.mrf.mxu0
        %v3107 = vpop.f32.mrf.mxu0
        %v3108 = vadd.f32 0.0, %v3107
        %v3109 = vpop.f32.mrf.mxu0
        %3110 = vmatprep.mubr.bf16.mxu0 0
        %3111 = vmatmul.mubr.bf16.gmra.mxu0 %v2968
        %v3112 = vpop.f32.mrf.mxu0
        %v3113 = vadd.f32 0.0, %v3112
        %v3114 = vpop.f32.mrf.mxu0
        %v3115 = vpop.f32.mrf.mxu0
        %v3116 = vadd.f32 0.0, %v3115
        %v3117 = vpop.f32.mrf.mxu0
        %3118 = vmatprep.mubr.bf16.mxu0 0
        %3119 = vmatmul.mubr.bf16.gmra.mxu0 %v2971
        %v3120 = vpop.f32.mrf.mxu0
        %v3121 = vadd.f32 0.0, %v3120
        %v3122 = vpop.f32.mrf.mxu0
        %v3123 = vpop.f32.mrf.mxu0
        %v3124 = vadd.f32 0.0, %v3123
        %v3125 = vpop.f32.mrf.mxu0
        %3126 = vmatprep.mubr.bf16.mxu0 0
        %3127 = vmatmul.mubr.bf16.gmra.mxu0 %v2974
        %v3128 = vpop.f32.mrf.mxu0
        %v3129 = vadd.f32 0.0, %v3128
        %v3130 = vpop.f32.mrf.mxu0
        %v3131 = vpop.f32.mrf.mxu0
        %v3132 = vadd.f32 0.0, %v3131
        %v3133 = vpop.f32.mrf.mxu0
        %3134 = vmatprep.mubr.bf16.mxu0 0
        %3135 = vmatmul.mubr.bf16.gmra.mxu0 %v2977
        %v3136 = vpop.f32.mrf.mxu0
        %v3137 = vadd.f32 0.0, %v3136
        %v3138 = vpop.f32.mrf.mxu0
        %v3139 = vpop.f32.mrf.mxu0
        %v3140 = vadd.f32 0.0, %v3139
        %v3141 = vpop.f32.mrf.mxu0
        %3142 = vdwg.mxu0
        %v3143 = vadd.f32 %v2849, %v3017
        %v3144 = vadd.f32 %v2850, %v3020
        %v3145 = vadd.f32 %v2851, %v3025
        %v3146 = vadd.f32 %v2852, %v3028
        %v3147 = vadd.f32 %v2853, %v3033
        %v3148 = vadd.f32 %v2854, %v3036
        %v3149 = vadd.f32 %v2855, %v3041
        %v3150 = vadd.f32 %v2856, %v3044
        %v3151 = vadd.f32 %v2857, %v3049
        %v3152 = vadd.f32 %v2858, %v3052
        %v3153 = vadd.f32 %v2859, %v3057
        %v3154 = vadd.f32 %v2860, %v3060
        %v3155 = vadd.f32 %v2861, %v3065
        %v3156 = vadd.f32 %v2862, %v3068
        %v3157 = vadd.f32 %v2863, %v3073
        %v3158 = vadd.f32 %v2864, %v3076
        %v3159 = vadd.f32 %v2865, %v3081
        %v3160 = vadd.f32 %v2866, %v3084
        %v3161 = vadd.f32 %v2867, %v3089
        %v3162 = vadd.f32 %v2868, %v3092
        %v3163 = vadd.f32 %v2869, %v3097
        %v3164 = vadd.f32 %v2870, %v3100
        %v3165 = vadd.f32 %v2871, %v3105
        %v3166 = vadd.f32 %v2872, %v3108
        %v3167 = vadd.f32 %v2873, %v3113
        %v3168 = vadd.f32 %v2874, %v3116
        %v3169 = vadd.f32 %v2875, %v3121
        %v3170 = vadd.f32 %v2876, %v3124
        %v3171 = vadd.f32 %v2877, %v3129
        %v3172 = vadd.f32 %v2878, %v3132
        %v3173 = vadd.f32 %v2879, %v3137
        %v3174 = vadd.f32 %v2880, %v3140
        %3175 = vst [vmem:[%s163] sm:$0xff] %v3143
        %3176 = vst [vmem:[%s163 + $0x8] sm:$0xff] %v3144
        %3177 = vst [vmem:[%s163 + $0x10] sm:$0xff] %v3145
        %3178 = vst [vmem:[%s163 + $0x18] sm:$0xff] %v3146
        %3179 = vst [vmem:[%s163 + $0x20] sm:$0xff] %v3147
        %3180 = vst [vmem:[%s163 + $0x28] sm:$0xff] %v3148
        %3181 = vst [vmem:[%s163 + $0x30] sm:$0xff] %v3149
        %3182 = vst [vmem:[%s163 + $0x38] sm:$0xff] %v3150
        %3183 = vst [vmem:[%s163 + $0x40] sm:$0xff] %v3151
        %3184 = vst [vmem:[%s163 + $0x48] sm:$0xff] %v3152
        %3185 = vst [vmem:[%s163 + $0x50] sm:$0xff] %v3153
        %3186 = vst [vmem:[%s163 + $0x58] sm:$0xff] %v3154
        %3187 = vst [vmem:[%s163 + $0x60] sm:$0xff] %v3155
        %3188 = vst [vmem:[%s163 + $0x68] sm:$0xff] %v3156
        %3189 = vst [vmem:[%s163 + $0x70] sm:$0xff] %v3157
        %3190 = vst [vmem:[%s163 + $0x78] sm:$0xff] %v3158
        %3191 = vst [vmem:[%s163 + $0x80] sm:$0xff] %v3159
        %3192 = vst [vmem:[%s163 + $0x88] sm:$0xff] %v3160
        %3193 = vst [vmem:[%s163 + $0x90] sm:$0xff] %v3161
        %3194 = vst [vmem:[%s163 + $0x98] sm:$0xff] %v3162
        %3195 = vst [vmem:[%s163 + $0xa0] sm:$0xff] %v3163
        %3196 = vst [vmem:[%s163 + $0xa8] sm:$0xff] %v3164
        %3197 = vst [vmem:[%s163 + $0xb0] sm:$0xff] %v3165
        %3198 = vst [vmem:[%s163 + $0xb8] sm:$0xff] %v3166
        %3199 = vst [vmem:[%s163 + $0xc0] sm:$0xff] %v3167
        %3200 = vst [vmem:[%s163 + $0xc8] sm:$0xff] %v3168
        %3201 = vst [vmem:[%s163 + $0xd0] sm:$0xff] %v3169
        %3202 = vst [vmem:[%s163 + $0xd8] sm:$0xff] %v3170
        %3203 = vst [vmem:[%s163 + $0xe0] sm:$0xff] %v3171
        %3204 = vst [vmem:[%s163 + $0xe8] sm:$0xff] %v3172
        %3205 = vst [vmem:[%s163 + $0xf0] sm:$0xff] %v3173
        %3206 = vst [vmem:[%s163 + $0xf8] sm:$0xff] %v3174
        %v3207 = vld [vmem:[%s1994] sm:$0xe]
        %v3208 = vld [vmem:[%s1994 + $0x4] sm:$0xf]
        %v3209 = vld [vmem:[%s1994 + $0x8] sm:$0x1]
        %v3210 = vld [vmem:[%s1994 + $0xc] sm:$0xe]
        %v3211 = vld [vmem:[%s1994 + $0x10] sm:$0xf]
        %v3212 = vld [vmem:[%s1994 + $0x14] sm:$0x1]
        %v3213 = vld [vmem:[%s1994 + $0x18] sm:$0xe]
        %v3214 = vld [vmem:[%s1994 + $0x1c] sm:$0xf]
        %v3215 = vld [vmem:[%s1994 + $0x20] sm:$0x1]
        %v3216 = vld [vmem:[%s1994 + $0x24] sm:$0xe]
        %v3217 = vld [vmem:[%s1994 + $0x28] sm:$0xf]
        %v3218 = vld [vmem:[%s1994 + $0x2c] sm:$0x1]
        %v3219 = vld [vmem:[%s1994 + $0x30] sm:$0xe]
        %v3220 = vld [vmem:[%s1994 + $0x34] sm:$0xf]
        %v3221 = vld [vmem:[%s1994 + $0x38] sm:$0x1]
        %v3222 = vld [vmem:[%s1994 + $0x3c] sm:$0xe]
        %v3223 = vld [vmem:[%s1994 + $0x40] sm:$0xf]
        %v3224 = vld [vmem:[%s1994 + $0x44] sm:$0x1]
        %v3225 = vld [vmem:[%s1994 + $0x48] sm:$0xe]
        %v3226 = vld [vmem:[%s1994 + $0x4c] sm:$0xf]
        %v3227 = vld [vmem:[%s1994 + $0x50] sm:$0x1]
        %v3228 = vld [vmem:[%s1994 + $0x54] sm:$0xe]
        %v3229 = vld [vmem:[%s1994 + $0x58] sm:$0xf]
        %v3230 = vld [vmem:[%s1994 + $0x5c] sm:$0x1]
        %v3231 = vld [vmem:[%s1994 + $0x60] sm:$0xe]
        %v3232 = vld [vmem:[%s1994 + $0x64] sm:$0xf]
        %v3233 = vld [vmem:[%s1994 + $0x68] sm:$0x1]
        %v3234 = vld [vmem:[%s1994 + $0x6c] sm:$0xe]
        %v3235 = vld [vmem:[%s1994 + $0x70] sm:$0xf]
        %v3236 = vld [vmem:[%s1994 + $0x74] sm:$0x1]
        %v3237 = vld [vmem:[%s1994 + $0x78] sm:$0xe]
        %v3238 = vld [vmem:[%s1994 + $0x7c] sm:$0xf]
        %v3239 = vld [vmem:[%s1994 + $0x80] sm:$0x1]
        %v3240 = vld [vmem:[%s1994 + $0x84] sm:$0xe]
        %v3241 = vld [vmem:[%s1994 + $0x88] sm:$0xf]
        %v3242 = vld [vmem:[%s1994 + $0x8c] sm:$0x1]
        %v3243 = vld [vmem:[%s1994 + $0x90] sm:$0xe]
        %v3244 = vld [vmem:[%s1994 + $0x94] sm:$0xf]
        %v3245 = vld [vmem:[%s1994 + $0x98] sm:$0x1]
        %v3246 = vld [vmem:[%s1994 + $0x9c] sm:$0xe]
        %v3247 = vld [vmem:[%s1994 + $0xa0] sm:$0xf]
        %v3248 = vld [vmem:[%s1994 + $0xa4] sm:$0x1]
        %v3249 = vld [vmem:[%s1994 + $0xa8] sm:$0xe]
        %v3250 = vld [vmem:[%s1994 + $0xac] sm:$0xf]
        %v3251 = vld [vmem:[%s1994 + $0xb0] sm:$0x1]
        %v3252 = vld [vmem:[%s1994 + $0xb4] sm:$0xe]
        %v3253 = vld [vmem:[%s1994 + $0xb8] sm:$0xf]
        %v3254 = vld [vmem:[%s1994 + $0xbc] sm:$0x1]
        %v3303 = vrot.slane %v3207, 5
        %v3304 = vrot.slane %v3303, 4
        %v3305 = vrot.slane %v3208, 5
        %v3306 = vsel %vm1523, %v3304, %v3305
        %v3307 = vrot.slane %v3305, 4
        %v3308 = vrot.slane %v3209, 5
        %v3309 = vsel %vm1523, %v3307, %v3308
        %v3310 = vrot.slane %v3210, 5
        %v3311 = vrot.slane %v3310, 4
        %v3312 = vrot.slane %v3211, 5
        %v3313 = vsel %vm1523, %v3311, %v3312
        %v3314 = vrot.slane %v3312, 4
        %v3315 = vrot.slane %v3212, 5
        %v3316 = vsel %vm1523, %v3314, %v3315
        %v3317 = vrot.slane %v3213, 5
        %v3318 = vrot.slane %v3317, 4
        %v3319 = vrot.slane %v3214, 5
        %v3320 = vsel %vm1523, %v3318, %v3319
        %v3321 = vrot.slane %v3319, 4
        %v3322 = vrot.slane %v3215, 5
        %v3323 = vsel %vm1523, %v3321, %v3322
        %v3324 = vrot.slane %v3216, 5
        %v3325 = vrot.slane %v3324, 4
        %v3326 = vrot.slane %v3217, 5
        %v3327 = vsel %vm1523, %v3325, %v3326
        %v3328 = vrot.slane %v3326, 4
        %v3329 = vrot.slane %v3218, 5
        %v3330 = vsel %vm1523, %v3328, %v3329
        %v3331 = vrot.slane %v3219, 5
        %v3332 = vrot.slane %v3331, 4
        %v3333 = vrot.slane %v3220, 5
        %v3334 = vsel %vm1523, %v3332, %v3333
        %v3335 = vrot.slane %v3333, 4
        %v3336 = vrot.slane %v3221, 5
        %v3337 = vsel %vm1523, %v3335, %v3336
        %v3338 = vrot.slane %v3222, 5
        %v3339 = vrot.slane %v3338, 4
        %v3340 = vrot.slane %v3223, 5
        %v3341 = vsel %vm1523, %v3339, %v3340
        %v3342 = vrot.slane %v3340, 4
        %v3343 = vrot.slane %v3224, 5
        %v3344 = vsel %vm1523, %v3342, %v3343
        %v3345 = vrot.slane %v3225, 5
        %v3346 = vrot.slane %v3345, 4
        %v3347 = vrot.slane %v3226, 5
        %v3348 = vsel %vm1523, %v3346, %v3347
        %v3349 = vrot.slane %v3347, 4
        %v3350 = vrot.slane %v3227, 5
        %v3351 = vsel %vm1523, %v3349, %v3350
        %v3352 = vrot.slane %v3228, 5
        %v3353 = vrot.slane %v3352, 4
        %v3354 = vrot.slane %v3229, 5
        %v3355 = vsel %vm1523, %v3353, %v3354
        %v3356 = vrot.slane %v3354, 4
        %v3357 = vrot.slane %v3230, 5
        %v3358 = vsel %vm1523, %v3356, %v3357
        %v3359 = vrot.slane %v3231, 5
        %v3360 = vrot.slane %v3359, 4
        %v3361 = vrot.slane %v3232, 5
        %v3362 = vsel %vm1523, %v3360, %v3361
        %v3363 = vrot.slane %v3361, 4
        %v3364 = vrot.slane %v3233, 5
        %v3365 = vsel %vm1523, %v3363, %v3364
        %v3366 = vrot.slane %v3234, 5
        %v3367 = vrot.slane %v3366, 4
        %v3368 = vrot.slane %v3235, 5
        %v3369 = vsel %vm1523, %v3367, %v3368
        %v3370 = vrot.slane %v3368, 4
        %v3371 = vrot.slane %v3236, 5
        %v3372 = vsel %vm1523, %v3370, %v3371
        %v3373 = vrot.slane %v3237, 5
        %v3374 = vrot.slane %v3373, 4
        %v3375 = vrot.slane %v3238, 5
        %v3376 = vsel %vm1523, %v3374, %v3375
        %v3377 = vrot.slane %v3375, 4
        %v3378 = vrot.slane %v3239, 5
        %v3379 = vsel %vm1523, %v3377, %v3378
        %v3380 = vrot.slane %v3240, 5
        %v3381 = vrot.slane %v3380, 4
        %v3382 = vrot.slane %v3241, 5
        %v3383 = vsel %vm1523, %v3381, %v3382
        %v3384 = vrot.slane %v3382, 4
        %v3385 = vrot.slane %v3242, 5
        %v3386 = vsel %vm1523, %v3384, %v3385
        %v3387 = vrot.slane %v3243, 5
        %v3388 = vrot.slane %v3387, 4
        %v3389 = vrot.slane %v3244, 5
        %v3390 = vsel %vm1523, %v3388, %v3389
        %v3391 = vrot.slane %v3389, 4
        %v3392 = vrot.slane %v3245, 5
        %v3393 = vsel %vm1523, %v3391, %v3392
        %v3394 = vrot.slane %v3246, 5
        %v3395 = vrot.slane %v3394, 4
        %v3396 = vrot.slane %v3247, 5
        %v3397 = vsel %vm1523, %v3395, %v3396
        %v3398 = vrot.slane %v3396, 4
        %v3399 = vrot.slane %v3248, 5
        %v3400 = vsel %vm1523, %v3398, %v3399
        %v3401 = vrot.slane %v3249, 5
        %v3402 = vrot.slane %v3401, 4
        %v3403 = vrot.slane %v3250, 5
        %v3404 = vsel %vm1523, %v3402, %v3403
        %v3405 = vrot.slane %v3403, 4
        %v3406 = vrot.slane %v3251, 5
        %v3407 = vsel %vm1523, %v3405, %v3406
        %v3408 = vrot.slane %v3252, 5
        %v3409 = vrot.slane %v3408, 4
        %v3410 = vrot.slane %v3253, 5
        %v3411 = vsel %vm1523, %v3409, %v3410
        %v3412 = vrot.slane %v3410, 4
        %v3413 = vrot.slane %v3254, 5
        %v3414 = vsel %vm1523, %v3412, %v3413
        %v3415 = vld [vmem:[%s163] sm:$0xff]
        %v3416 = vld [vmem:[%s163 + $0x8] sm:$0xff]
        %v3417 = vld [vmem:[%s163 + $0x10] sm:$0xff]
        %v3418 = vld [vmem:[%s163 + $0x18] sm:$0xff]
        %v3419 = vld [vmem:[%s163 + $0x20] sm:$0xff]
        %v3420 = vld [vmem:[%s163 + $0x28] sm:$0xff]
        %v3421 = vld [vmem:[%s163 + $0x30] sm:$0xff]
        %v3422 = vld [vmem:[%s163 + $0x38] sm:$0xff]
        %v3423 = vld [vmem:[%s163 + $0x40] sm:$0xff]
        %v3424 = vld [vmem:[%s163 + $0x48] sm:$0xff]
        %v3425 = vld [vmem:[%s163 + $0x50] sm:$0xff]
        %v3426 = vld [vmem:[%s163 + $0x58] sm:$0xff]
        %v3427 = vld [vmem:[%s163 + $0x60] sm:$0xff]
        %v3428 = vld [vmem:[%s163 + $0x68] sm:$0xff]
        %v3429 = vld [vmem:[%s163 + $0x70] sm:$0xff]
        %v3430 = vld [vmem:[%s163 + $0x78] sm:$0xff]
        %v3431 = vld [vmem:[%s163 + $0x80] sm:$0xff]
        %v3432 = vld [vmem:[%s163 + $0x88] sm:$0xff]
        %v3433 = vld [vmem:[%s163 + $0x90] sm:$0xff]
        %v3434 = vld [vmem:[%s163 + $0x98] sm:$0xff]
        %v3435 = vld [vmem:[%s163 + $0xa0] sm:$0xff]
        %v3436 = vld [vmem:[%s163 + $0xa8] sm:$0xff]
        %v3437 = vld [vmem:[%s163 + $0xb0] sm:$0xff]
        %v3438 = vld [vmem:[%s163 + $0xb8] sm:$0xff]
        %v3439 = vld [vmem:[%s163 + $0xc0] sm:$0xff]
        %v3440 = vld [vmem:[%s163 + $0xc8] sm:$0xff]
        %v3441 = vld [vmem:[%s163 + $0xd0] sm:$0xff]
        %v3442 = vld [vmem:[%s163 + $0xd8] sm:$0xff]
        %v3443 = vld [vmem:[%s163 + $0xe0] sm:$0xff]
        %v3444 = vld [vmem:[%s163 + $0xe8] sm:$0xff]
        %v3445 = vld [vmem:[%s163 + $0xf0] sm:$0xff]
        %v3446 = vld [vmem:[%s163 + $0xf8] sm:$0xff]
        %s3447 = scalar_lea.vmem %s1, 10
        %v3448 = vld [vmem:[%s3447] sm:$0x3]
        %v3449 = vunpack.c.l.b16 %v3306
        %v3450 = vunpack.c.l.b16 %v3309
        %v3451 = vunpack.c.l.b16 %v3313
        %v3452 = vunpack.c.l.b16 %v3316
        %v3453 = vunpack.c.l.b16 %v3320
        %v3454 = vunpack.c.l.b16 %v3323
        %v3455 = vunpack.c.l.b16 %v3327
        %v3456 = vunpack.c.l.b16 %v3330
        %v3457 = vunpack.c.l.b16 %v3334
        %v3458 = vunpack.c.l.b16 %v3337
        %v3459 = vunpack.c.l.b16 %v3341
        %v3460 = vunpack.c.l.b16 %v3344
        %v3461 = vunpack.c.l.b16 %v3348
        %v3462 = vunpack.c.l.b16 %v3351
        %v3463 = vunpack.c.l.b16 %v3355
        %v3464 = vunpack.c.l.b16 %v3358
        %v3465 = vunpack.c.l.b16 %v3362
        %v3466 = vunpack.c.l.b16 %v3365
        %v3467 = vunpack.c.l.b16 %v3369
        %v3468 = vunpack.c.l.b16 %v3372
        %v3469 = vunpack.c.l.b16 %v3376
        %v3470 = vunpack.c.l.b16 %v3379
        %v3471 = vunpack.c.l.b16 %v3383
        %v3472 = vunpack.c.l.b16 %v3386
        %v3473 = vunpack.c.l.b16 %v3390
        %v3474 = vunpack.c.l.b16 %v3393
        %v3475 = vunpack.c.l.b16 %v3397
        %v3476 = vunpack.c.l.b16 %v3400
        %v3477 = vunpack.c.l.b16 %v3404
        %v3478 = vunpack.c.l.b16 %v3407
        %v3479 = vunpack.c.l.b16 %v3411
        %v3480 = vunpack.c.l.b16 %v3414
        %v3481 = vpack.c.b16 %v3450, %v3449
        %v3482 = vpack.c.b16 %v3452, %v3451
        %v3483 = vpack.c.b16 %v3454, %v3453
        %v3484 = vpack.c.b16 %v3456, %v3455
        %v3485 = vpack.c.b16 %v3458, %v3457
        %v3486 = vpack.c.b16 %v3460, %v3459
        %v3487 = vpack.c.b16 %v3462, %v3461
        %v3488 = vpack.c.b16 %v3464, %v3463
        %v3489 = vpack.c.b16 %v3466, %v3465
        %v3490 = vpack.c.b16 %v3468, %v3467
        %v3491 = vpack.c.b16 %v3470, %v3469
        %v3492 = vpack.c.b16 %v3472, %v3471
        %v3493 = vpack.c.b16 %v3474, %v3473
        %v3494 = vpack.c.b16 %v3476, %v3475
        %v3495 = vpack.c.b16 %v3478, %v3477
        %v3496 = vpack.c.b16 %v3480, %v3479
        %v3498 = vsel %vm354, %v3481, 0
        %v3501 = vsel %vm354, %v3482, 0
        %v3504 = vsel %vm354, %v3483, 0
        %v3507 = vsel %vm354, %v3484, 0
        %v3510 = vsel %vm354, %v3485, 0
        %v3513 = vsel %vm354, %v3486, 0
        %v3516 = vsel %vm354, %v3487, 0
        %v3519 = vsel %vm354, %v3488, 0
        %v3522 = vsel %vm354, %v3489, 0
        %v3525 = vsel %vm354, %v3490, 0
        %v3528 = vsel %vm354, %v3491, 0
        %v3531 = vsel %vm354, %v3492, 0
        %v3534 = vsel %vm354, %v3493, 0
        %v3537 = vsel %vm354, %v3494, 0
        %v3540 = vsel %vm354, %v3495, 0
        %v3543 = vsel %vm354, %v3496, 0
        %v3546 = vsel %vm403, %v3448, 0
        %3548 = vmatprep.subr.bf16.mxu0 0
        %3549 = vmatpush1.bf16.msra.mxu0 0
        %3550 = vmatprep.subr.bf16.mxu0 0
        %3551 = vmatpush1.bf16.msra.mxu0 0
        %3552 = vmatprep.subr.bf16.mxu0 0
        %3553 = vmatpush1.bf16.msra.mxu0 0
        %3554 = vmatprep.subr.bf16.mxu0 0
        %3555 = vmatpush1.bf16.msra.mxu0 0
        %3556 = vmatprep.subr.bf16.mxu0 0
        %3557 = vmatpush1.bf16.msra.mxu0 0
        %3558 = vmatprep.subr.bf16.mxu0 0
        %3559 = vmatpush1.bf16.msra.mxu0 0
        %3560 = vmatprep.subr.bf16.mxu0 0
        %3561 = vmatpush1.bf16.msra.mxu0 0
        %3562 = vmatprep.subr.bf16.mxu0 0
        %3563 = vmatpush1.bf16.msra.mxu0 %v3546
        %3564 = vmatprep.subr.bf16.mxu0 0
        %3565 = vmatpush2.bf16.msra.mxu0 0
        %3566 = vmatprep.subr.bf16.mxu0 0
        %3567 = vmatpush2.bf16.msra.mxu0 0
        %3568 = vmatprep.subr.bf16.mxu0 0
        %3569 = vmatpush2.bf16.msra.mxu0 0
        %3570 = vmatprep.subr.bf16.mxu0 0
        %3571 = vmatpush2.bf16.msra.mxu0 0
        %3572 = vmatprep.subr.bf16.mxu0 0
        %3573 = vmatpush2.bf16.msra.mxu0 0
        %3574 = vmatprep.subr.bf16.mxu0 0
        %3575 = vmatpush2.bf16.msra.mxu0 0
        %3576 = vmatprep.subr.bf16.mxu0 0
        %3577 = vmatpush2.bf16.msra.mxu0 0
        %3578 = vmatprep.subr.bf16.mxu0 0
        %3579 = vmatpush2.bf16.msra.mxu0 0
        %3580 = vmatprep.mubr.bf16.mxu0 0
        %3581 = vmatmul.mubr.bf16.gmra.mxu0 %v3498
        %v3582 = vpop.f32.mrf.mxu0
        %v3583 = vadd.f32 0.0, %v3582
        %v3584 = vpop.f32.mrf.mxu0
        %v3585 = vpop.f32.mrf.mxu0
        %v3586 = vadd.f32 0.0, %v3585
        %v3587 = vpop.f32.mrf.mxu0
        %3588 = vmatprep.mubr.bf16.mxu0 0
        %3589 = vmatmul.mubr.bf16.gmra.mxu0 %v3501
        %v3590 = vpop.f32.mrf.mxu0
        %v3591 = vadd.f32 0.0, %v3590
        %v3592 = vpop.f32.mrf.mxu0
        %v3593 = vpop.f32.mrf.mxu0
        %v3594 = vadd.f32 0.0, %v3593
        %v3595 = vpop.f32.mrf.mxu0
        %3596 = vmatprep.mubr.bf16.mxu0 0
        %3597 = vmatmul.mubr.bf16.gmra.mxu0 %v3504
        %v3598 = vpop.f32.mrf.mxu0
        %v3599 = vadd.f32 0.0, %v3598
        %v3600 = vpop.f32.mrf.mxu0
        %v3601 = vpop.f32.mrf.mxu0
        %v3602 = vadd.f32 0.0, %v3601
        %v3603 = vpop.f32.mrf.mxu0
        %3604 = vmatprep.mubr.bf16.mxu0 0
        %3605 = vmatmul.mubr.bf16.gmra.mxu0 %v3507
        %v3606 = vpop.f32.mrf.mxu0
        %v3607 = vadd.f32 0.0, %v3606
        %v3608 = vpop.f32.mrf.mxu0
        %v3609 = vpop.f32.mrf.mxu0
        %v3610 = vadd.f32 0.0, %v3609
        %v3611 = vpop.f32.mrf.mxu0
        %3612 = vmatprep.mubr.bf16.mxu0 0
        %3613 = vmatmul.mubr.bf16.gmra.mxu0 %v3510
        %v3614 = vpop.f32.mrf.mxu0
        %v3615 = vadd.f32 0.0, %v3614
        %v3616 = vpop.f32.mrf.mxu0
        %v3617 = vpop.f32.mrf.mxu0
        %v3618 = vadd.f32 0.0, %v3617
        %v3619 = vpop.f32.mrf.mxu0
        %3620 = vmatprep.mubr.bf16.mxu0 0
        %3621 = vmatmul.mubr.bf16.gmra.mxu0 %v3513
        %v3622 = vpop.f32.mrf.mxu0
        %v3623 = vadd.f32 0.0, %v3622
        %v3624 = vpop.f32.mrf.mxu0
        %v3625 = vpop.f32.mrf.mxu0
        %v3626 = vadd.f32 0.0, %v3625
        %v3627 = vpop.f32.mrf.mxu0
        %3628 = vmatprep.mubr.bf16.mxu0 0
        %3629 = vmatmul.mubr.bf16.gmra.mxu0 %v3516
        %v3630 = vpop.f32.mrf.mxu0
        %v3631 = vadd.f32 0.0, %v3630
        %v3632 = vpop.f32.mrf.mxu0
        %v3633 = vpop.f32.mrf.mxu0
        %v3634 = vadd.f32 0.0, %v3633
        %v3635 = vpop.f32.mrf.mxu0
        %3636 = vmatprep.mubr.bf16.mxu0 0
        %3637 = vmatmul.mubr.bf16.gmra.mxu0 %v3519
        %v3638 = vpop.f32.mrf.mxu0
        %v3639 = vadd.f32 0.0, %v3638
        %v3640 = vpop.f32.mrf.mxu0
        %v3641 = vpop.f32.mrf.mxu0
        %v3642 = vadd.f32 0.0, %v3641
        %v3643 = vpop.f32.mrf.mxu0
        %3644 = vmatprep.mubr.bf16.mxu0 0
        %3645 = vmatmul.mubr.bf16.gmra.mxu0 %v3522
        %v3646 = vpop.f32.mrf.mxu0
        %v3647 = vadd.f32 0.0, %v3646
        %v3648 = vpop.f32.mrf.mxu0
        %v3649 = vpop.f32.mrf.mxu0
        %v3650 = vadd.f32 0.0, %v3649
        %v3651 = vpop.f32.mrf.mxu0
        %3652 = vmatprep.mubr.bf16.mxu0 0
        %3653 = vmatmul.mubr.bf16.gmra.mxu0 %v3525
        %v3654 = vpop.f32.mrf.mxu0
        %v3655 = vadd.f32 0.0, %v3654
        %v3656 = vpop.f32.mrf.mxu0
        %v3657 = vpop.f32.mrf.mxu0
        %v3658 = vadd.f32 0.0, %v3657
        %v3659 = vpop.f32.mrf.mxu0
        %3660 = vmatprep.mubr.bf16.mxu0 0
        %3661 = vmatmul.mubr.bf16.gmra.mxu0 %v3528
        %v3662 = vpop.f32.mrf.mxu0
        %v3663 = vadd.f32 0.0, %v3662
        %v3664 = vpop.f32.mrf.mxu0
        %v3665 = vpop.f32.mrf.mxu0
        %v3666 = vadd.f32 0.0, %v3665
        %v3667 = vpop.f32.mrf.mxu0
        %3668 = vmatprep.mubr.bf16.mxu0 0
        %3669 = vmatmul.mubr.bf16.gmra.mxu0 %v3531
        %v3670 = vpop.f32.mrf.mxu0
        %v3671 = vadd.f32 0.0, %v3670
        %v3672 = vpop.f32.mrf.mxu0
        %v3673 = vpop.f32.mrf.mxu0
        %v3674 = vadd.f32 0.0, %v3673
        %v3675 = vpop.f32.mrf.mxu0
        %3676 = vmatprep.mubr.bf16.mxu0 0
        %3677 = vmatmul.mubr.bf16.gmra.mxu0 %v3534
        %v3678 = vpop.f32.mrf.mxu0
        %v3679 = vadd.f32 0.0, %v3678
        %v3680 = vpop.f32.mrf.mxu0
        %v3681 = vpop.f32.mrf.mxu0
        %v3682 = vadd.f32 0.0, %v3681
        %v3683 = vpop.f32.mrf.mxu0
        %3684 = vmatprep.mubr.bf16.mxu0 0
        %3685 = vmatmul.mubr.bf16.gmra.mxu0 %v3537
        %v3686 = vpop.f32.mrf.mxu0
        %v3687 = vadd.f32 0.0, %v3686
        %v3688 = vpop.f32.mrf.mxu0
        %v3689 = vpop.f32.mrf.mxu0
        %v3690 = vadd.f32 0.0, %v3689
        %v3691 = vpop.f32.mrf.mxu0
        %3692 = vmatprep.mubr.bf16.mxu0 0
        %3693 = vmatmul.mubr.bf16.gmra.mxu0 %v3540
        %v3694 = vpop.f32.mrf.mxu0
        %v3695 = vadd.f32 0.0, %v3694
        %v3696 = vpop.f32.mrf.mxu0
        %v3697 = vpop.f32.mrf.mxu0
        %v3698 = vadd.f32 0.0, %v3697
        %v3699 = vpop.f32.mrf.mxu0
        %3700 = vmatprep.mubr.bf16.mxu0 0
        %3701 = vmatmul.mubr.bf16.gmra.mxu0 %v3543
        %v3702 = vpop.f32.mrf.mxu0
        %v3703 = vadd.f32 0.0, %v3702
        %v3704 = vpop.f32.mrf.mxu0
        %v3705 = vpop.f32.mrf.mxu0
        %v3706 = vadd.f32 0.0, %v3705
        %v3707 = vpop.f32.mrf.mxu0
        %3708 = vdwg.mxu0
        %v3709 = vadd.f32 %v3415, %v3583
        %v3710 = vadd.f32 %v3416, %v3586
        %v3711 = vadd.f32 %v3417, %v3591
        %v3712 = vadd.f32 %v3418, %v3594
        %v3713 = vadd.f32 %v3419, %v3599
        %v3714 = vadd.f32 %v3420, %v3602
        %v3715 = vadd.f32 %v3421, %v3607
        %v3716 = vadd.f32 %v3422, %v3610
        %v3717 = vadd.f32 %v3423, %v3615
        %v3718 = vadd.f32 %v3424, %v3618
        %v3719 = vadd.f32 %v3425, %v3623
        %v3720 = vadd.f32 %v3426, %v3626
        %v3721 = vadd.f32 %v3427, %v3631
        %v3722 = vadd.f32 %v3428, %v3634
        %v3723 = vadd.f32 %v3429, %v3639
        %v3724 = vadd.f32 %v3430, %v3642
        %v3725 = vadd.f32 %v3431, %v3647
        %v3726 = vadd.f32 %v3432, %v3650
        %v3727 = vadd.f32 %v3433, %v3655
        %v3728 = vadd.f32 %v3434, %v3658
        %v3729 = vadd.f32 %v3435, %v3663
        %v3730 = vadd.f32 %v3436, %v3666
        %v3731 = vadd.f32 %v3437, %v3671
        %v3732 = vadd.f32 %v3438, %v3674
        %v3733 = vadd.f32 %v3439, %v3679
        %v3734 = vadd.f32 %v3440, %v3682
        %v3735 = vadd.f32 %v3441, %v3687
        %v3736 = vadd.f32 %v3442, %v3690
        %v3737 = vadd.f32 %v3443, %v3695
        %v3738 = vadd.f32 %v3444, %v3698
        %v3739 = vadd.f32 %v3445, %v3703
        %v3740 = vadd.f32 %v3446, %v3706
        %3741 = vst [vmem:[%s163] sm:$0xff] %v3709
        %3742 = vst [vmem:[%s163 + $0x8] sm:$0xff] %v3710
        %3743 = vst [vmem:[%s163 + $0x10] sm:$0xff] %v3711
        %3744 = vst [vmem:[%s163 + $0x18] sm:$0xff] %v3712
        %3745 = vst [vmem:[%s163 + $0x20] sm:$0xff] %v3713
        %3746 = vst [vmem:[%s163 + $0x28] sm:$0xff] %v3714
        %3747 = vst [vmem:[%s163 + $0x30] sm:$0xff] %v3715
        %3748 = vst [vmem:[%s163 + $0x38] sm:$0xff] %v3716
        %3749 = vst [vmem:[%s163 + $0x40] sm:$0xff] %v3717
        %3750 = vst [vmem:[%s163 + $0x48] sm:$0xff] %v3718
        %3751 = vst [vmem:[%s163 + $0x50] sm:$0xff] %v3719
        %3752 = vst [vmem:[%s163 + $0x58] sm:$0xff] %v3720
        %3753 = vst [vmem:[%s163 + $0x60] sm:$0xff] %v3721
        %3754 = vst [vmem:[%s163 + $0x68] sm:$0xff] %v3722
        %3755 = vst [vmem:[%s163 + $0x70] sm:$0xff] %v3723
        %3756 = vst [vmem:[%s163 + $0x78] sm:$0xff] %v3724
        %3757 = vst [vmem:[%s163 + $0x80] sm:$0xff] %v3725
        %3758 = vst [vmem:[%s163 + $0x88] sm:$0xff] %v3726
        %3759 = vst [vmem:[%s163 + $0x90] sm:$0xff] %v3727
        %3760 = vst [vmem:[%s163 + $0x98] sm:$0xff] %v3728
        %3761 = vst [vmem:[%s163 + $0xa0] sm:$0xff] %v3729
        %3762 = vst [vmem:[%s163 + $0xa8] sm:$0xff] %v3730
        %3763 = vst [vmem:[%s163 + $0xb0] sm:$0xff] %v3731
        %3764 = vst [vmem:[%s163 + $0xb8] sm:$0xff] %v3732
        %3765 = vst [vmem:[%s163 + $0xc0] sm:$0xff] %v3733
        %3766 = vst [vmem:[%s163 + $0xc8] sm:$0xff] %v3734
        %3767 = vst [vmem:[%s163 + $0xd0] sm:$0xff] %v3735
        %3768 = vst [vmem:[%s163 + $0xd8] sm:$0xff] %v3736
        %3769 = vst [vmem:[%s163 + $0xe0] sm:$0xff] %v3737
        %3770 = vst [vmem:[%s163 + $0xe8] sm:$0xff] %v3738
        %3771 = vst [vmem:[%s163 + $0xf0] sm:$0xff] %v3739
        %3772 = vst [vmem:[%s163 + $0xf8] sm:$0xff] %v3740
        %s3773 = scalar_lea.vmem %s168, 24
        %v3774 = vld [vmem:[%s3773] sm:$0xf]
        %v3775 = vld [vmem:[%s3773 + $0x4] sm:$0xf]
        %v3776 = vld [vmem:[%s3773 + $0xc] sm:$0xf]
        %v3777 = vld [vmem:[%s3773 + $0x10] sm:$0xf]
        %v3778 = vld [vmem:[%s3773 + $0x18] sm:$0xf]
        %v3779 = vld [vmem:[%s3773 + $0x1c] sm:$0xf]
        %v3780 = vld [vmem:[%s3773 + $0x24] sm:$0xf]
        %v3781 = vld [vmem:[%s3773 + $0x28] sm:$0xf]
        %v3782 = vld [vmem:[%s3773 + $0x30] sm:$0xf]
        %v3783 = vld [vmem:[%s3773 + $0x34] sm:$0xf]
        %v3784 = vld [vmem:[%s3773 + $0x3c] sm:$0xf]
        %v3785 = vld [vmem:[%s3773 + $0x40] sm:$0xf]
        %v3786 = vld [vmem:[%s3773 + $0x48] sm:$0xf]
        %v3787 = vld [vmem:[%s3773 + $0x4c] sm:$0xf]
        %v3788 = vld [vmem:[%s3773 + $0x54] sm:$0xf]
        %v3789 = vld [vmem:[%s3773 + $0x58] sm:$0xf]
        %v3790 = vld [vmem:[%s3773 + $0x60] sm:$0xf]
        %v3791 = vld [vmem:[%s3773 + $0x64] sm:$0xf]
        %v3792 = vld [vmem:[%s3773 + $0x6c] sm:$0xf]
        %v3793 = vld [vmem:[%s3773 + $0x70] sm:$0xf]
        %v3794 = vld [vmem:[%s3773 + $0x78] sm:$0xf]
        %v3795 = vld [vmem:[%s3773 + $0x7c] sm:$0xf]
        %v3796 = vld [vmem:[%s3773 + $0x84] sm:$0xf]
        %v3797 = vld [vmem:[%s3773 + $0x88] sm:$0xf]
        %v3798 = vld [vmem:[%s3773 + $0x90] sm:$0xf]
        %v3799 = vld [vmem:[%s3773 + $0x94] sm:$0xf]
        %v3800 = vld [vmem:[%s3773 + $0x9c] sm:$0xf]
        %v3801 = vld [vmem:[%s3773 + $0xa0] sm:$0xf]
        %v3802 = vld [vmem:[%s3773 + $0xa8] sm:$0xf]
        %v3803 = vld [vmem:[%s3773 + $0xac] sm:$0xf]
        %v3804 = vld [vmem:[%s3773 + $0xb4] sm:$0xf]
        %v3805 = vld [vmem:[%s3773 + $0xb8] sm:$0xf]
        %v3806 = vld [vmem:[%s163] sm:$0xff]
        %v3807 = vld [vmem:[%s163 + $0x8] sm:$0xff]
        %v3808 = vld [vmem:[%s163 + $0x10] sm:$0xff]
        %v3809 = vld [vmem:[%s163 + $0x18] sm:$0xff]
        %v3810 = vld [vmem:[%s163 + $0x20] sm:$0xff]
        %v3811 = vld [vmem:[%s163 + $0x28] sm:$0xff]
        %v3812 = vld [vmem:[%s163 + $0x30] sm:$0xff]
        %v3813 = vld [vmem:[%s163 + $0x38] sm:$0xff]
        %v3814 = vld [vmem:[%s163 + $0x40] sm:$0xff]
        %v3815 = vld [vmem:[%s163 + $0x48] sm:$0xff]
        %v3816 = vld [vmem:[%s163 + $0x50] sm:$0xff]
        %v3817 = vld [vmem:[%s163 + $0x58] sm:$0xff]
        %v3818 = vld [vmem:[%s163 + $0x60] sm:$0xff]
        %v3819 = vld [vmem:[%s163 + $0x68] sm:$0xff]
        %v3820 = vld [vmem:[%s163 + $0x70] sm:$0xff]
        %v3821 = vld [vmem:[%s163 + $0x78] sm:$0xff]
        %v3822 = vld [vmem:[%s163 + $0x80] sm:$0xff]
        %v3823 = vld [vmem:[%s163 + $0x88] sm:$0xff]
        %v3824 = vld [vmem:[%s163 + $0x90] sm:$0xff]
        %v3825 = vld [vmem:[%s163 + $0x98] sm:$0xff]
        %v3826 = vld [vmem:[%s163 + $0xa0] sm:$0xff]
        %v3827 = vld [vmem:[%s163 + $0xa8] sm:$0xff]
        %v3828 = vld [vmem:[%s163 + $0xb0] sm:$0xff]
        %v3829 = vld [vmem:[%s163 + $0xb8] sm:$0xff]
        %v3830 = vld [vmem:[%s163 + $0xc0] sm:$0xff]
        %v3831 = vld [vmem:[%s163 + $0xc8] sm:$0xff]
        %v3832 = vld [vmem:[%s163 + $0xd0] sm:$0xff]
        %v3833 = vld [vmem:[%s163 + $0xd8] sm:$0xff]
        %v3834 = vld [vmem:[%s163 + $0xe0] sm:$0xff]
        %v3835 = vld [vmem:[%s163 + $0xe8] sm:$0xff]
        %v3836 = vld [vmem:[%s163 + $0xf0] sm:$0xff]
        %v3837 = vld [vmem:[%s163 + $0xf8] sm:$0xff]
        %s3838 = scalar_lea.vmem %s1, 12
        %v3839 = vld [vmem:[%s3838] sm:$0x3]
        %v3872 = vunpack.c.l.b16 %v3774
        %v3873 = vunpack.c.l.b16 %v3775
        %v3874 = vunpack.c.l.b16 %v3776
        %v3875 = vunpack.c.l.b16 %v3777
        %v3876 = vunpack.c.l.b16 %v3778
        %v3877 = vunpack.c.l.b16 %v3779
        %v3878 = vunpack.c.l.b16 %v3780
        %v3879 = vunpack.c.l.b16 %v3781
        %v3880 = vunpack.c.l.b16 %v3782
        %v3881 = vunpack.c.l.b16 %v3783
        %v3882 = vunpack.c.l.b16 %v3784
        %v3883 = vunpack.c.l.b16 %v3785
        %v3884 = vunpack.c.l.b16 %v3786
        %v3885 = vunpack.c.l.b16 %v3787
        %v3886 = vunpack.c.l.b16 %v3788
        %v3887 = vunpack.c.l.b16 %v3789
        %v3888 = vunpack.c.l.b16 %v3790
        %v3889 = vunpack.c.l.b16 %v3791
        %v3890 = vunpack.c.l.b16 %v3792
        %v3891 = vunpack.c.l.b16 %v3793
        %v3892 = vunpack.c.l.b16 %v3794
        %v3893 = vunpack.c.l.b16 %v3795
        %v3894 = vunpack.c.l.b16 %v3796
        %v3895 = vunpack.c.l.b16 %v3797
        %v3896 = vunpack.c.l.b16 %v3798
        %v3897 = vunpack.c.l.b16 %v3799
        %v3898 = vunpack.c.l.b16 %v3800
        %v3899 = vunpack.c.l.b16 %v3801
        %v3900 = vunpack.c.l.b16 %v3802
        %v3901 = vunpack.c.l.b16 %v3803
        %v3902 = vunpack.c.l.b16 %v3804
        %v3903 = vunpack.c.l.b16 %v3805
        %v3904 = vpack.c.b16 %v3873, %v3872
        %v3905 = vpack.c.b16 %v3875, %v3874
        %v3906 = vpack.c.b16 %v3877, %v3876
        %v3907 = vpack.c.b16 %v3879, %v3878
        %v3908 = vpack.c.b16 %v3881, %v3880
        %v3909 = vpack.c.b16 %v3883, %v3882
        %v3910 = vpack.c.b16 %v3885, %v3884
        %v3911 = vpack.c.b16 %v3887, %v3886
        %v3912 = vpack.c.b16 %v3889, %v3888
        %v3913 = vpack.c.b16 %v3891, %v3890
        %v3914 = vpack.c.b16 %v3893, %v3892
        %v3915 = vpack.c.b16 %v3895, %v3894
        %v3916 = vpack.c.b16 %v3897, %v3896
        %v3917 = vpack.c.b16 %v3899, %v3898
        %v3918 = vpack.c.b16 %v3901, %v3900
        %v3919 = vpack.c.b16 %v3903, %v3902
        %v3921 = vsel %vm354, %v3904, 0
        %v3924 = vsel %vm354, %v3905, 0
        %v3927 = vsel %vm354, %v3906, 0
        %v3930 = vsel %vm354, %v3907, 0
        %v3933 = vsel %vm354, %v3908, 0
        %v3936 = vsel %vm354, %v3909, 0
        %v3939 = vsel %vm354, %v3910, 0
        %v3942 = vsel %vm354, %v3911, 0
        %v3945 = vsel %vm354, %v3912, 0
        %v3948 = vsel %vm354, %v3913, 0
        %v3951 = vsel %vm354, %v3914, 0
        %v3954 = vsel %vm354, %v3915, 0
        %v3957 = vsel %vm354, %v3916, 0
        %v3960 = vsel %vm354, %v3917, 0
        %v3963 = vsel %vm354, %v3918, 0
        %v3966 = vsel %vm354, %v3919, 0
        %v3969 = vsel %vm403, %v3839, 0
        %3971 = vmatprep.subr.bf16.mxu0 0
        %3972 = vmatpush1.bf16.msra.mxu0 0
        %3973 = vmatprep.subr.bf16.mxu0 0
        %3974 = vmatpush1.bf16.msra.mxu0 0
        %3975 = vmatprep.subr.bf16.mxu0 0
        %3976 = vmatpush1.bf16.msra.mxu0 0
        %3977 = vmatprep.subr.bf16.mxu0 0
        %3978 = vmatpush1.bf16.msra.mxu0 0
        %3979 = vmatprep.subr.bf16.mxu0 0
        %3980 = vmatpush1.bf16.msra.mxu0 0
        %3981 = vmatprep.subr.bf16.mxu0 0
        %3982 = vmatpush1.bf16.msra.mxu0 0
        %3983 = vmatprep.subr.bf16.mxu0 0
        %3984 = vmatpush1.bf16.msra.mxu0 0
        %3985 = vmatprep.subr.bf16.mxu0 0
        %3986 = vmatpush1.bf16.msra.mxu0 %v3969
        %3987 = vmatprep.subr.bf16.mxu0 0
        %3988 = vmatpush2.bf16.msra.mxu0 0
        %3989 = vmatprep.subr.bf16.mxu0 0
        %3990 = vmatpush2.bf16.msra.mxu0 0
        %3991 = vmatprep.subr.bf16.mxu0 0
        %3992 = vmatpush2.bf16.msra.mxu0 0
        %3993 = vmatprep.subr.bf16.mxu0 0
        %3994 = vmatpush2.bf16.msra.mxu0 0
        %3995 = vmatprep.subr.bf16.mxu0 0
        %3996 = vmatpush2.bf16.msra.mxu0 0
        %3997 = vmatprep.subr.bf16.mxu0 0
        %3998 = vmatpush2.bf16.msra.mxu0 0
        %3999 = vmatprep.subr.bf16.mxu0 0
        %4000 = vmatpush2.bf16.msra.mxu0 0
        %4001 = vmatprep.subr.bf16.mxu0 0
        %4002 = vmatpush2.bf16.msra.mxu0 0
        %4003 = vmatprep.mubr.bf16.mxu0 0
        %4004 = vmatmul.mubr.bf16.gmra.mxu0 %v3921
        %v4005 = vpop.f32.mrf.mxu0
        %v4006 = vadd.f32 0.0, %v4005
        %v4007 = vpop.f32.mrf.mxu0
        %v4008 = vpop.f32.mrf.mxu0
        %v4009 = vadd.f32 0.0, %v4008
        %v4010 = vpop.f32.mrf.mxu0
        %4011 = vmatprep.mubr.bf16.mxu0 0
        %4012 = vmatmul.mubr.bf16.gmra.mxu0 %v3924
        %v4013 = vpop.f32.mrf.mxu0
        %v4014 = vadd.f32 0.0, %v4013
        %v4015 = vpop.f32.mrf.mxu0
        %v4016 = vpop.f32.mrf.mxu0
        %v4017 = vadd.f32 0.0, %v4016
        %v4018 = vpop.f32.mrf.mxu0
        %4019 = vmatprep.mubr.bf16.mxu0 0
        %4020 = vmatmul.mubr.bf16.gmra.mxu0 %v3927
        %v4021 = vpop.f32.mrf.mxu0
        %v4022 = vadd.f32 0.0, %v4021
        %v4023 = vpop.f32.mrf.mxu0
        %v4024 = vpop.f32.mrf.mxu0
        %v4025 = vadd.f32 0.0, %v4024
        %v4026 = vpop.f32.mrf.mxu0
        %4027 = vmatprep.mubr.bf16.mxu0 0
        %4028 = vmatmul.mubr.bf16.gmra.mxu0 %v3930
        %v4029 = vpop.f32.mrf.mxu0
        %v4030 = vadd.f32 0.0, %v4029
        %v4031 = vpop.f32.mrf.mxu0
        %v4032 = vpop.f32.mrf.mxu0
        %v4033 = vadd.f32 0.0, %v4032
        %v4034 = vpop.f32.mrf.mxu0
        %4035 = vmatprep.mubr.bf16.mxu0 0
        %4036 = vmatmul.mubr.bf16.gmra.mxu0 %v3933
        %v4037 = vpop.f32.mrf.mxu0
        %v4038 = vadd.f32 0.0, %v4037
        %v4039 = vpop.f32.mrf.mxu0
        %v4040 = vpop.f32.mrf.mxu0
        %v4041 = vadd.f32 0.0, %v4040
        %v4042 = vpop.f32.mrf.mxu0
        %4043 = vmatprep.mubr.bf16.mxu0 0
        %4044 = vmatmul.mubr.bf16.gmra.mxu0 %v3936
        %v4045 = vpop.f32.mrf.mxu0
        %v4046 = vadd.f32 0.0, %v4045
        %v4047 = vpop.f32.mrf.mxu0
        %v4048 = vpop.f32.mrf.mxu0
        %v4049 = vadd.f32 0.0, %v4048
        %v4050 = vpop.f32.mrf.mxu0
        %4051 = vmatprep.mubr.bf16.mxu0 0
        %4052 = vmatmul.mubr.bf16.gmra.mxu0 %v3939
        %v4053 = vpop.f32.mrf.mxu0
        %v4054 = vadd.f32 0.0, %v4053
        %v4055 = vpop.f32.mrf.mxu0
        %v4056 = vpop.f32.mrf.mxu0
        %v4057 = vadd.f32 0.0, %v4056
        %v4058 = vpop.f32.mrf.mxu0
        %4059 = vmatprep.mubr.bf16.mxu0 0
        %4060 = vmatmul.mubr.bf16.gmra.mxu0 %v3942
        %v4061 = vpop.f32.mrf.mxu0
        %v4062 = vadd.f32 0.0, %v4061
        %v4063 = vpop.f32.mrf.mxu0
        %v4064 = vpop.f32.mrf.mxu0
        %v4065 = vadd.f32 0.0, %v4064
        %v4066 = vpop.f32.mrf.mxu0
        %4067 = vmatprep.mubr.bf16.mxu0 0
        %4068 = vmatmul.mubr.bf16.gmra.mxu0 %v3945
        %v4069 = vpop.f32.mrf.mxu0
        %v4070 = vadd.f32 0.0, %v4069
        %v4071 = vpop.f32.mrf.mxu0
        %v4072 = vpop.f32.mrf.mxu0
        %v4073 = vadd.f32 0.0, %v4072
        %v4074 = vpop.f32.mrf.mxu0
        %4075 = vmatprep.mubr.bf16.mxu0 0
        %4076 = vmatmul.mubr.bf16.gmra.mxu0 %v3948
        %v4077 = vpop.f32.mrf.mxu0
        %v4078 = vadd.f32 0.0, %v4077
        %v4079 = vpop.f32.mrf.mxu0
        %v4080 = vpop.f32.mrf.mxu0
        %v4081 = vadd.f32 0.0, %v4080
        %v4082 = vpop.f32.mrf.mxu0
        %4083 = vmatprep.mubr.bf16.mxu0 0
        %4084 = vmatmul.mubr.bf16.gmra.mxu0 %v3951
        %v4085 = vpop.f32.mrf.mxu0
        %v4086 = vadd.f32 0.0, %v4085
        %v4087 = vpop.f32.mrf.mxu0
        %v4088 = vpop.f32.mrf.mxu0
        %v4089 = vadd.f32 0.0, %v4088
        %v4090 = vpop.f32.mrf.mxu0
        %4091 = vmatprep.mubr.bf16.mxu0 0
        %4092 = vmatmul.mubr.bf16.gmra.mxu0 %v3954
        %v4093 = vpop.f32.mrf.mxu0
        %v4094 = vadd.f32 0.0, %v4093
        %v4095 = vpop.f32.mrf.mxu0
        %v4096 = vpop.f32.mrf.mxu0
        %v4097 = vadd.f32 0.0, %v4096
        %v4098 = vpop.f32.mrf.mxu0
        %4099 = vmatprep.mubr.bf16.mxu0 0
        %4100 = vmatmul.mubr.bf16.gmra.mxu0 %v3957
        %v4101 = vpop.f32.mrf.mxu0
        %v4102 = vadd.f32 0.0, %v4101
        %v4103 = vpop.f32.mrf.mxu0
        %v4104 = vpop.f32.mrf.mxu0
        %v4105 = vadd.f32 0.0, %v4104
        %v4106 = vpop.f32.mrf.mxu0
        %4107 = vmatprep.mubr.bf16.mxu0 0
        %4108 = vmatmul.mubr.bf16.gmra.mxu0 %v3960
        %v4109 = vpop.f32.mrf.mxu0
        %v4110 = vadd.f32 0.0, %v4109
        %v4111 = vpop.f32.mrf.mxu0
        %v4112 = vpop.f32.mrf.mxu0
        %v4113 = vadd.f32 0.0, %v4112
        %v4114 = vpop.f32.mrf.mxu0
        %4115 = vmatprep.mubr.bf16.mxu0 0
        %4116 = vmatmul.mubr.bf16.gmra.mxu0 %v3963
        %v4117 = vpop.f32.mrf.mxu0
        %v4118 = vadd.f32 0.0, %v4117
        %v4119 = vpop.f32.mrf.mxu0
        %v4120 = vpop.f32.mrf.mxu0
        %v4121 = vadd.f32 0.0, %v4120
        %v4122 = vpop.f32.mrf.mxu0
        %4123 = vmatprep.mubr.bf16.mxu0 0
        %4124 = vmatmul.mubr.bf16.gmra.mxu0 %v3966
        %v4125 = vpop.f32.mrf.mxu0
        %v4126 = vadd.f32 0.0, %v4125
        %v4127 = vpop.f32.mrf.mxu0
        %v4128 = vpop.f32.mrf.mxu0
        %v4129 = vadd.f32 0.0, %v4128
        %v4130 = vpop.f32.mrf.mxu0
        %4131 = vdwg.mxu0
        %v4132 = vadd.f32 %v3806, %v4006
        %v4133 = vadd.f32 %v3807, %v4009
        %v4134 = vadd.f32 %v3808, %v4014
        %v4135 = vadd.f32 %v3809, %v4017
        %v4136 = vadd.f32 %v3810, %v4022
        %v4137 = vadd.f32 %v3811, %v4025
        %v4138 = vadd.f32 %v3812, %v4030
        %v4139 = vadd.f32 %v3813, %v4033
        %v4140 = vadd.f32 %v3814, %v4038
        %v4141 = vadd.f32 %v3815, %v4041
        %v4142 = vadd.f32 %v3816, %v4046
        %v4143 = vadd.f32 %v3817, %v4049
        %v4144 = vadd.f32 %v3818, %v4054
        %v4145 = vadd.f32 %v3819, %v4057
        %v4146 = vadd.f32 %v3820, %v4062
        %v4147 = vadd.f32 %v3821, %v4065
        %v4148 = vadd.f32 %v3822, %v4070
        %v4149 = vadd.f32 %v3823, %v4073
        %v4150 = vadd.f32 %v3824, %v4078
        %v4151 = vadd.f32 %v3825, %v4081
        %v4152 = vadd.f32 %v3826, %v4086
        %v4153 = vadd.f32 %v3827, %v4089
        %v4154 = vadd.f32 %v3828, %v4094
        %v4155 = vadd.f32 %v3829, %v4097
        %v4156 = vadd.f32 %v3830, %v4102
        %v4157 = vadd.f32 %v3831, %v4105
        %v4158 = vadd.f32 %v3832, %v4110
        %v4159 = vadd.f32 %v3833, %v4113
        %v4160 = vadd.f32 %v3834, %v4118
        %v4161 = vadd.f32 %v3835, %v4121
        %v4162 = vadd.f32 %v3836, %v4126
        %v4163 = vadd.f32 %v3837, %v4129
        %4164 = vst [vmem:[%s163] sm:$0xff] %v4132
        %4165 = vst [vmem:[%s163 + $0x8] sm:$0xff] %v4133
        %4166 = vst [vmem:[%s163 + $0x10] sm:$0xff] %v4134
        %4167 = vst [vmem:[%s163 + $0x18] sm:$0xff] %v4135
        %4168 = vst [vmem:[%s163 + $0x20] sm:$0xff] %v4136
        %4169 = vst [vmem:[%s163 + $0x28] sm:$0xff] %v4137
        %4170 = vst [vmem:[%s163 + $0x30] sm:$0xff] %v4138
        %4171 = vst [vmem:[%s163 + $0x38] sm:$0xff] %v4139
        %4172 = vst [vmem:[%s163 + $0x40] sm:$0xff] %v4140
        %4173 = vst [vmem:[%s163 + $0x48] sm:$0xff] %v4141
        %4174 = vst [vmem:[%s163 + $0x50] sm:$0xff] %v4142
        %4175 = vst [vmem:[%s163 + $0x58] sm:$0xff] %v4143
        %4176 = vst [vmem:[%s163 + $0x60] sm:$0xff] %v4144
        %4177 = vst [vmem:[%s163 + $0x68] sm:$0xff] %v4145
        %4178 = vst [vmem:[%s163 + $0x70] sm:$0xff] %v4146
        %4179 = vst [vmem:[%s163 + $0x78] sm:$0xff] %v4147
        %4180 = vst [vmem:[%s163 + $0x80] sm:$0xff] %v4148
        %4181 = vst [vmem:[%s163 + $0x88] sm:$0xff] %v4149
        %4182 = vst [vmem:[%s163 + $0x90] sm:$0xff] %v4150
        %4183 = vst [vmem:[%s163 + $0x98] sm:$0xff] %v4151
        %4184 = vst [vmem:[%s163 + $0xa0] sm:$0xff] %v4152
        %4185 = vst [vmem:[%s163 + $0xa8] sm:$0xff] %v4153
        %4186 = vst [vmem:[%s163 + $0xb0] sm:$0xff] %v4154
        %4187 = vst [vmem:[%s163 + $0xb8] sm:$0xff] %v4155
        %4188 = vst [vmem:[%s163 + $0xc0] sm:$0xff] %v4156
        %4189 = vst [vmem:[%s163 + $0xc8] sm:$0xff] %v4157
        %4190 = vst [vmem:[%s163 + $0xd0] sm:$0xff] %v4158
        %4191 = vst [vmem:[%s163 + $0xd8] sm:$0xff] %v4159
        %4192 = vst [vmem:[%s163 + $0xe0] sm:$0xff] %v4160
        %4193 = vst [vmem:[%s163 + $0xe8] sm:$0xff] %v4161
        %4194 = vst [vmem:[%s163 + $0xf0] sm:$0xff] %v4162
        %4195 = vst [vmem:[%s163 + $0xf8] sm:$0xff] %v4163
        %v4196 = vld [vmem:[%s3773] sm:$0xf]
        %v4197 = vld [vmem:[%s3773 + $0x4] sm:$0xf]
        %v4198 = vld [vmem:[%s3773 + $0x8] sm:$0x1]
        %v4199 = vld [vmem:[%s3773 + $0xc] sm:$0xf]
        %v4200 = vld [vmem:[%s3773 + $0x10] sm:$0xf]
        %v4201 = vld [vmem:[%s3773 + $0x14] sm:$0x1]
        %v4202 = vld [vmem:[%s3773 + $0x18] sm:$0xf]
        %v4203 = vld [vmem:[%s3773 + $0x1c] sm:$0xf]
        %v4204 = vld [vmem:[%s3773 + $0x20] sm:$0x1]
        %v4205 = vld [vmem:[%s3773 + $0x24] sm:$0xf]
        %v4206 = vld [vmem:[%s3773 + $0x28] sm:$0xf]
        %v4207 = vld [vmem:[%s3773 + $0x2c] sm:$0x1]
        %v4208 = vld [vmem:[%s3773 + $0x30] sm:$0xf]
        %v4209 = vld [vmem:[%s3773 + $0x34] sm:$0xf]
        %v4210 = vld [vmem:[%s3773 + $0x38] sm:$0x1]
        %v4211 = vld [vmem:[%s3773 + $0x3c] sm:$0xf]
        %v4212 = vld [vmem:[%s3773 + $0x40] sm:$0xf]
        %v4213 = vld [vmem:[%s3773 + $0x44] sm:$0x1]
        %v4214 = vld [vmem:[%s3773 + $0x48] sm:$0xf]
        %v4215 = vld [vmem:[%s3773 + $0x4c] sm:$0xf]
        %v4216 = vld [vmem:[%s3773 + $0x50] sm:$0x1]
        %v4217 = vld [vmem:[%s3773 + $0x54] sm:$0xf]
        %v4218 = vld [vmem:[%s3773 + $0x58] sm:$0xf]
        %v4219 = vld [vmem:[%s3773 + $0x5c] sm:$0x1]
        %v4220 = vld [vmem:[%s3773 + $0x60] sm:$0xf]
        %v4221 = vld [vmem:[%s3773 + $0x64] sm:$0xf]
        %v4222 = vld [vmem:[%s3773 + $0x68] sm:$0x1]
        %v4223 = vld [vmem:[%s3773 + $0x6c] sm:$0xf]
        %v4224 = vld [vmem:[%s3773 + $0x70] sm:$0xf]
        %v4225 = vld [vmem:[%s3773 + $0x74] sm:$0x1]
        %v4226 = vld [vmem:[%s3773 + $0x78] sm:$0xf]
        %v4227 = vld [vmem:[%s3773 + $0x7c] sm:$0xf]
        %v4228 = vld [vmem:[%s3773 + $0x80] sm:$0x1]
        %v4229 = vld [vmem:[%s3773 + $0x84] sm:$0xf]
        %v4230 = vld [vmem:[%s3773 + $0x88] sm:$0xf]
        %v4231 = vld [vmem:[%s3773 + $0x8c] sm:$0x1]
        %v4232 = vld [vmem:[%s3773 + $0x90] sm:$0xf]
        %v4233 = vld [vmem:[%s3773 + $0x94] sm:$0xf]
        %v4234 = vld [vmem:[%s3773 + $0x98] sm:$0x1]
        %v4235 = vld [vmem:[%s3773 + $0x9c] sm:$0xf]
        %v4236 = vld [vmem:[%s3773 + $0xa0] sm:$0xf]
        %v4237 = vld [vmem:[%s3773 + $0xa4] sm:$0x1]
        %v4238 = vld [vmem:[%s3773 + $0xa8] sm:$0xf]
        %v4239 = vld [vmem:[%s3773 + $0xac] sm:$0xf]
        %v4240 = vld [vmem:[%s3773 + $0xb0] sm:$0x1]
        %v4241 = vld [vmem:[%s3773 + $0xb4] sm:$0xf]
        %v4242 = vld [vmem:[%s3773 + $0xb8] sm:$0xf]
        %v4243 = vld [vmem:[%s3773 + $0xbc] sm:$0x1]
        %v4245 = vshrl.u32 %v4196, 16
        %v4247 = vrot.slane %v4245, 4
        %v4248 = vshll.u32 %v4196, 16
        %v4250 = vrot.slane %v4248, 5
        %v4251 = vor.u32 %v4247, %v4250
        %v4252 = vrot.slane %v4251, 4
        %v4254 = vshll.u32 %v4197, 16
        %v4256 = vrot.slane %v4254, 5
        %v4257 = vsel %vm682, %v4252, %v4256
        %v4258 = vshrl.u32 %v4197, 16
        %v4260 = vrot.slane %v4258, 4
        %v4261 = vor.u32 %v4260, %v4256
        %v4262 = vrot.slane %v4261, 4
        %v4264 = vshll.u32 %v4198, 16
        %v4266 = vrot.slane %v4264, 5
        %v4267 = vsel %vm682, %v4262, %v4266
        %v4269 = vshrl.u32 %v4199, 16
        %v4271 = vrot.slane %v4269, 4
        %v4272 = vshll.u32 %v4199, 16
        %v4274 = vrot.slane %v4272, 5
        %v4275 = vor.u32 %v4271, %v4274
        %v4276 = vrot.slane %v4275, 4
        %v4278 = vshll.u32 %v4200, 16
        %v4280 = vrot.slane %v4278, 5
        %v4281 = vsel %vm682, %v4276, %v4280
        %v4282 = vshrl.u32 %v4200, 16
        %v4284 = vrot.slane %v4282, 4
        %v4285 = vor.u32 %v4284, %v4280
        %v4286 = vrot.slane %v4285, 4
        %v4288 = vshll.u32 %v4201, 16
        %v4290 = vrot.slane %v4288, 5
        %v4291 = vsel %vm682, %v4286, %v4290
        %v4293 = vshrl.u32 %v4202, 16
        %v4295 = vrot.slane %v4293, 4
        %v4296 = vshll.u32 %v4202, 16
        %v4298 = vrot.slane %v4296, 5
        %v4299 = vor.u32 %v4295, %v4298
        %v4300 = vrot.slane %v4299, 4
        %v4302 = vshll.u32 %v4203, 16
        %v4304 = vrot.slane %v4302, 5
        %v4305 = vsel %vm682, %v4300, %v4304
        %v4306 = vshrl.u32 %v4203, 16
        %v4308 = vrot.slane %v4306, 4
        %v4309 = vor.u32 %v4308, %v4304
        %v4310 = vrot.slane %v4309, 4
        %v4312 = vshll.u32 %v4204, 16
        %v4314 = vrot.slane %v4312, 5
        %v4315 = vsel %vm682, %v4310, %v4314
        %v4317 = vshrl.u32 %v4205, 16
        %v4319 = vrot.slane %v4317, 4
        %v4320 = vshll.u32 %v4205, 16
        %v4322 = vrot.slane %v4320, 5
        %v4323 = vor.u32 %v4319, %v4322
        %v4324 = vrot.slane %v4323, 4
        %v4326 = vshll.u32 %v4206, 16
        %v4328 = vrot.slane %v4326, 5
        %v4329 = vsel %vm682, %v4324, %v4328
        %v4330 = vshrl.u32 %v4206, 16
        %v4332 = vrot.slane %v4330, 4
        %v4333 = vor.u32 %v4332, %v4328
        %v4334 = vrot.slane %v4333, 4
        %v4336 = vshll.u32 %v4207, 16
        %v4338 = vrot.slane %v4336, 5
        %v4339 = vsel %vm682, %v4334, %v4338
        %v4341 = vshrl.u32 %v4208, 16
        %v4343 = vrot.slane %v4341, 4
        %v4344 = vshll.u32 %v4208, 16
        %v4346 = vrot.slane %v4344, 5
        %v4347 = vor.u32 %v4343, %v4346
        %v4348 = vrot.slane %v4347, 4
        %v4350 = vshll.u32 %v4209, 16
        %v4352 = vrot.slane %v4350, 5
        %v4353 = vsel %vm682, %v4348, %v4352
        %v4354 = vshrl.u32 %v4209, 16
        %v4356 = vrot.slane %v4354, 4
        %v4357 = vor.u32 %v4356, %v4352
        %v4358 = vrot.slane %v4357, 4
        %v4360 = vshll.u32 %v4210, 16
        %v4362 = vrot.slane %v4360, 5
        %v4363 = vsel %vm682, %v4358, %v4362
        %v4365 = vshrl.u32 %v4211, 16
        %v4367 = vrot.slane %v4365, 4
        %v4368 = vshll.u32 %v4211, 16
        %v4370 = vrot.slane %v4368, 5
        %v4371 = vor.u32 %v4367, %v4370
        %v4372 = vrot.slane %v4371, 4
        %v4374 = vshll.u32 %v4212, 16
        %v4376 = vrot.slane %v4374, 5
        %v4377 = vsel %vm682, %v4372, %v4376
        %v4378 = vshrl.u32 %v4212, 16
        %v4380 = vrot.slane %v4378, 4
        %v4381 = vor.u32 %v4380, %v4376
        %v4382 = vrot.slane %v4381, 4
        %v4384 = vshll.u32 %v4213, 16
        %v4386 = vrot.slane %v4384, 5
        %v4387 = vsel %vm682, %v4382, %v4386
        %v4389 = vshrl.u32 %v4214, 16
        %v4391 = vrot.slane %v4389, 4
        %v4392 = vshll.u32 %v4214, 16
        %v4394 = vrot.slane %v4392, 5
        %v4395 = vor.u32 %v4391, %v4394
        %v4396 = vrot.slane %v4395, 4
        %v4398 = vshll.u32 %v4215, 16
        %v4400 = vrot.slane %v4398, 5
        %v4401 = vsel %vm682, %v4396, %v4400
        %v4402 = vshrl.u32 %v4215, 16
        %v4404 = vrot.slane %v4402, 4
        %v4405 = vor.u32 %v4404, %v4400
        %v4406 = vrot.slane %v4405, 4
        %v4408 = vshll.u32 %v4216, 16
        %v4410 = vrot.slane %v4408, 5
        %v4411 = vsel %vm682, %v4406, %v4410
        %v4413 = vshrl.u32 %v4217, 16
        %v4415 = vrot.slane %v4413, 4
        %v4416 = vshll.u32 %v4217, 16
        %v4418 = vrot.slane %v4416, 5
        %v4419 = vor.u32 %v4415, %v4418
        %v4420 = vrot.slane %v4419, 4
        %v4422 = vshll.u32 %v4218, 16
        %v4424 = vrot.slane %v4422, 5
        %v4425 = vsel %vm682, %v4420, %v4424
        %v4426 = vshrl.u32 %v4218, 16
        %v4428 = vrot.slane %v4426, 4
        %v4429 = vor.u32 %v4428, %v4424
        %v4430 = vrot.slane %v4429, 4
        %v4432 = vshll.u32 %v4219, 16
        %v4434 = vrot.slane %v4432, 5
        %v4435 = vsel %vm682, %v4430, %v4434
        %v4437 = vshrl.u32 %v4220, 16
        %v4439 = vrot.slane %v4437, 4
        %v4440 = vshll.u32 %v4220, 16
        %v4442 = vrot.slane %v4440, 5
        %v4443 = vor.u32 %v4439, %v4442
        %v4444 = vrot.slane %v4443, 4
        %v4446 = vshll.u32 %v4221, 16
        %v4448 = vrot.slane %v4446, 5
        %v4449 = vsel %vm682, %v4444, %v4448
        %v4450 = vshrl.u32 %v4221, 16
        %v4452 = vrot.slane %v4450, 4
        %v4453 = vor.u32 %v4452, %v4448
        %v4454 = vrot.slane %v4453, 4
        %v4456 = vshll.u32 %v4222, 16
        %v4458 = vrot.slane %v4456, 5
        %v4459 = vsel %vm682, %v4454, %v4458
        %v4461 = vshrl.u32 %v4223, 16
        %v4463 = vrot.slane %v4461, 4
        %v4464 = vshll.u32 %v4223, 16
        %v4466 = vrot.slane %v4464, 5
        %v4467 = vor.u32 %v4463, %v4466
        %v4468 = vrot.slane %v4467, 4
        %v4470 = vshll.u32 %v4224, 16
        %v4472 = vrot.slane %v4470, 5
        %v4473 = vsel %vm682, %v4468, %v4472
        %v4474 = vshrl.u32 %v4224, 16
        %v4476 = vrot.slane %v4474, 4
        %v4477 = vor.u32 %v4476, %v4472
        %v4478 = vrot.slane %v4477, 4
        %v4480 = vshll.u32 %v4225, 16
        %v4482 = vrot.slane %v4480, 5
        %v4483 = vsel %vm682, %v4478, %v4482
        %v4485 = vshrl.u32 %v4226, 16
        %v4487 = vrot.slane %v4485, 4
        %v4488 = vshll.u32 %v4226, 16
        %v4490 = vrot.slane %v4488, 5
        %v4491 = vor.u32 %v4487, %v4490
        %v4492 = vrot.slane %v4491, 4
        %v4494 = vshll.u32 %v4227, 16
        %v4496 = vrot.slane %v4494, 5
        %v4497 = vsel %vm682, %v4492, %v4496
        %v4498 = vshrl.u32 %v4227, 16
        %v4500 = vrot.slane %v4498, 4
        %v4501 = vor.u32 %v4500, %v4496
        %v4502 = vrot.slane %v4501, 4
        %v4504 = vshll.u32 %v4228, 16
        %v4506 = vrot.slane %v4504, 5
        %v4507 = vsel %vm682, %v4502, %v4506
        %v4509 = vshrl.u32 %v4229, 16
        %v4511 = vrot.slane %v4509, 4
        %v4512 = vshll.u32 %v4229, 16
        %v4514 = vrot.slane %v4512, 5
        %v4515 = vor.u32 %v4511, %v4514
        %v4516 = vrot.slane %v4515, 4
        %v4518 = vshll.u32 %v4230, 16
        %v4520 = vrot.slane %v4518, 5
        %v4521 = vsel %vm682, %v4516, %v4520
        %v4522 = vshrl.u32 %v4230, 16
        %v4524 = vrot.slane %v4522, 4
        %v4525 = vor.u32 %v4524, %v4520
        %v4526 = vrot.slane %v4525, 4
        %v4528 = vshll.u32 %v4231, 16
        %v4530 = vrot.slane %v4528, 5
        %v4531 = vsel %vm682, %v4526, %v4530
        %v4533 = vshrl.u32 %v4232, 16
        %v4535 = vrot.slane %v4533, 4
        %v4536 = vshll.u32 %v4232, 16
        %v4538 = vrot.slane %v4536, 5
        %v4539 = vor.u32 %v4535, %v4538
        %v4540 = vrot.slane %v4539, 4
        %v4542 = vshll.u32 %v4233, 16
        %v4544 = vrot.slane %v4542, 5
        %v4545 = vsel %vm682, %v4540, %v4544
        %v4546 = vshrl.u32 %v4233, 16
        %v4548 = vrot.slane %v4546, 4
        %v4549 = vor.u32 %v4548, %v4544
        %v4550 = vrot.slane %v4549, 4
        %v4552 = vshll.u32 %v4234, 16
        %v4554 = vrot.slane %v4552, 5
        %v4555 = vsel %vm682, %v4550, %v4554
        %v4557 = vshrl.u32 %v4235, 16
        %v4559 = vrot.slane %v4557, 4
        %v4560 = vshll.u32 %v4235, 16
        %v4562 = vrot.slane %v4560, 5
        %v4563 = vor.u32 %v4559, %v4562
        %v4564 = vrot.slane %v4563, 4
        %v4566 = vshll.u32 %v4236, 16
        %v4568 = vrot.slane %v4566, 5
        %v4569 = vsel %vm682, %v4564, %v4568
        %v4570 = vshrl.u32 %v4236, 16
        %v4572 = vrot.slane %v4570, 4
        %v4573 = vor.u32 %v4572, %v4568
        %v4574 = vrot.slane %v4573, 4
        %v4576 = vshll.u32 %v4237, 16
        %v4578 = vrot.slane %v4576, 5
        %v4579 = vsel %vm682, %v4574, %v4578
        %v4581 = vshrl.u32 %v4238, 16
        %v4583 = vrot.slane %v4581, 4
        %v4584 = vshll.u32 %v4238, 16
        %v4586 = vrot.slane %v4584, 5
        %v4587 = vor.u32 %v4583, %v4586
        %v4588 = vrot.slane %v4587, 4
        %v4590 = vshll.u32 %v4239, 16
        %v4592 = vrot.slane %v4590, 5
        %v4593 = vsel %vm682, %v4588, %v4592
        %v4594 = vshrl.u32 %v4239, 16
        %v4596 = vrot.slane %v4594, 4
        %v4597 = vor.u32 %v4596, %v4592
        %v4598 = vrot.slane %v4597, 4
        %v4600 = vshll.u32 %v4240, 16
        %v4602 = vrot.slane %v4600, 5
        %v4603 = vsel %vm682, %v4598, %v4602
        %v4605 = vshrl.u32 %v4241, 16
        %v4607 = vrot.slane %v4605, 4
        %v4608 = vshll.u32 %v4241, 16
        %v4610 = vrot.slane %v4608, 5
        %v4611 = vor.u32 %v4607, %v4610
        %v4612 = vrot.slane %v4611, 4
        %v4614 = vshll.u32 %v4242, 16
        %v4616 = vrot.slane %v4614, 5
        %v4617 = vsel %vm682, %v4612, %v4616
        %v4618 = vshrl.u32 %v4242, 16
        %v4620 = vrot.slane %v4618, 4
        %v4621 = vor.u32 %v4620, %v4616
        %v4622 = vrot.slane %v4621, 4
        %v4624 = vshll.u32 %v4243, 16
        %v4626 = vrot.slane %v4624, 5
        %v4627 = vsel %vm682, %v4622, %v4626
        %v4628 = vld [vmem:[%s163] sm:$0xff]
        %v4629 = vld [vmem:[%s163 + $0x8] sm:$0xff]
        %v4630 = vld [vmem:[%s163 + $0x10] sm:$0xff]
        %v4631 = vld [vmem:[%s163 + $0x18] sm:$0xff]
        %v4632 = vld [vmem:[%s163 + $0x20] sm:$0xff]
        %v4633 = vld [vmem:[%s163 + $0x28] sm:$0xff]
        %v4634 = vld [vmem:[%s163 + $0x30] sm:$0xff]
        %v4635 = vld [vmem:[%s163 + $0x38] sm:$0xff]
        %v4636 = vld [vmem:[%s163 + $0x40] sm:$0xff]
        %v4637 = vld [vmem:[%s163 + $0x48] sm:$0xff]
        %v4638 = vld [vmem:[%s163 + $0x50] sm:$0xff]
        %v4639 = vld [vmem:[%s163 + $0x58] sm:$0xff]
        %v4640 = vld [vmem:[%s163 + $0x60] sm:$0xff]
        %v4641 = vld [vmem:[%s163 + $0x68] sm:$0xff]
        %v4642 = vld [vmem:[%s163 + $0x70] sm:$0xff]
        %v4643 = vld [vmem:[%s163 + $0x78] sm:$0xff]
        %v4644 = vld [vmem:[%s163 + $0x80] sm:$0xff]
        %v4645 = vld [vmem:[%s163 + $0x88] sm:$0xff]
        %v4646 = vld [vmem:[%s163 + $0x90] sm:$0xff]
        %v4647 = vld [vmem:[%s163 + $0x98] sm:$0xff]
        %v4648 = vld [vmem:[%s163 + $0xa0] sm:$0xff]
        %v4649 = vld [vmem:[%s163 + $0xa8] sm:$0xff]
        %v4650 = vld [vmem:[%s163 + $0xb0] sm:$0xff]
        %v4651 = vld [vmem:[%s163 + $0xb8] sm:$0xff]
        %v4652 = vld [vmem:[%s163 + $0xc0] sm:$0xff]
        %v4653 = vld [vmem:[%s163 + $0xc8] sm:$0xff]
        %v4654 = vld [vmem:[%s163 + $0xd0] sm:$0xff]
        %v4655 = vld [vmem:[%s163 + $0xd8] sm:$0xff]
        %v4656 = vld [vmem:[%s163 + $0xe0] sm:$0xff]
        %v4657 = vld [vmem:[%s163 + $0xe8] sm:$0xff]
        %v4658 = vld [vmem:[%s163 + $0xf0] sm:$0xff]
        %v4659 = vld [vmem:[%s163 + $0xf8] sm:$0xff]
        %s4660 = scalar_lea.vmem %s1, 14
        %v4661 = vld [vmem:[%s4660] sm:$0x3]
        %v4662 = vunpack.c.l.b16 %v4257
        %v4663 = vunpack.c.l.b16 %v4267
        %v4664 = vunpack.c.l.b16 %v4281
        %v4665 = vunpack.c.l.b16 %v4291
        %v4666 = vunpack.c.l.b16 %v4305
        %v4667 = vunpack.c.l.b16 %v4315
        %v4668 = vunpack.c.l.b16 %v4329
        %v4669 = vunpack.c.l.b16 %v4339
        %v4670 = vunpack.c.l.b16 %v4353
        %v4671 = vunpack.c.l.b16 %v4363
        %v4672 = vunpack.c.l.b16 %v4377
        %v4673 = vunpack.c.l.b16 %v4387
        %v4674 = vunpack.c.l.b16 %v4401
        %v4675 = vunpack.c.l.b16 %v4411
        %v4676 = vunpack.c.l.b16 %v4425
        %v4677 = vunpack.c.l.b16 %v4435
        %v4678 = vunpack.c.l.b16 %v4449
        %v4679 = vunpack.c.l.b16 %v4459
        %v4680 = vunpack.c.l.b16 %v4473
        %v4681 = vunpack.c.l.b16 %v4483
        %v4682 = vunpack.c.l.b16 %v4497
        %v4683 = vunpack.c.l.b16 %v4507
        %v4684 = vunpack.c.l.b16 %v4521
        %v4685 = vunpack.c.l.b16 %v4531
        %v4686 = vunpack.c.l.b16 %v4545
        %v4687 = vunpack.c.l.b16 %v4555
        %v4688 = vunpack.c.l.b16 %v4569
        %v4689 = vunpack.c.l.b16 %v4579
        %v4690 = vunpack.c.l.b16 %v4593
        %v4691 = vunpack.c.l.b16 %v4603
        %v4692 = vunpack.c.l.b16 %v4617
        %v4693 = vunpack.c.l.b16 %v4627
        %v4694 = vpack.c.b16 %v4663, %v4662
        %v4695 = vpack.c.b16 %v4665, %v4664
        %v4696 = vpack.c.b16 %v4667, %v4666
        %v4697 = vpack.c.b16 %v4669, %v4668
        %v4698 = vpack.c.b16 %v4671, %v4670
        %v4699 = vpack.c.b16 %v4673, %v4672
        %v4700 = vpack.c.b16 %v4675, %v4674
        %v4701 = vpack.c.b16 %v4677, %v4676
        %v4702 = vpack.c.b16 %v4679, %v4678
        %v4703 = vpack.c.b16 %v4681, %v4680
        %v4704 = vpack.c.b16 %v4683, %v4682
        %v4705 = vpack.c.b16 %v4685, %v4684
        %v4706 = vpack.c.b16 %v4687, %v4686
        %v4707 = vpack.c.b16 %v4689, %v4688
        %v4708 = vpack.c.b16 %v4691, %v4690
        %v4709 = vpack.c.b16 %v4693, %v4692
        %v4711 = vsel %vm354, %v4694, 0
        %v4714 = vsel %vm354, %v4695, 0
        %v4717 = vsel %vm354, %v4696, 0
        %v4720 = vsel %vm354, %v4697, 0
        %v4723 = vsel %vm354, %v4698, 0
        %v4726 = vsel %vm354, %v4699, 0
        %v4729 = vsel %vm354, %v4700, 0
        %v4732 = vsel %vm354, %v4701, 0
        %v4735 = vsel %vm354, %v4702, 0
        %v4738 = vsel %vm354, %v4703, 0
        %v4741 = vsel %vm354, %v4704, 0
        %v4744 = vsel %vm354, %v4705, 0
        %v4747 = vsel %vm354, %v4706, 0
        %v4750 = vsel %vm354, %v4707, 0
        %v4753 = vsel %vm354, %v4708, 0
        %v4756 = vsel %vm354, %v4709, 0
        %v4759 = vsel %vm403, %v4661, 0
        %4761 = vmatprep.subr.bf16.mxu0 0
        %4762 = vmatpush1.bf16.msra.mxu0 0
        %4763 = vmatprep.subr.bf16.mxu0 0
        %4764 = vmatpush1.bf16.msra.mxu0 0
        %4765 = vmatprep.subr.bf16.mxu0 0
        %4766 = vmatpush1.bf16.msra.mxu0 0
        %4767 = vmatprep.subr.bf16.mxu0 0
        %4768 = vmatpush1.bf16.msra.mxu0 0
        %4769 = vmatprep.subr.bf16.mxu0 0
        %4770 = vmatpush1.bf16.msra.mxu0 0
        %4771 = vmatprep.subr.bf16.mxu0 0
        %4772 = vmatpush1.bf16.msra.mxu0 0
        %4773 = vmatprep.subr.bf16.mxu0 0
        %4774 = vmatpush1.bf16.msra.mxu0 0
        %4775 = vmatprep.subr.bf16.mxu0 0
        %4776 = vmatpush1.bf16.msra.mxu0 %v4759
        %4777 = vmatprep.subr.bf16.mxu0 0
        %4778 = vmatpush2.bf16.msra.mxu0 0
        %4779 = vmatprep.subr.bf16.mxu0 0
        %4780 = vmatpush2.bf16.msra.mxu0 0
        %4781 = vmatprep.subr.bf16.mxu0 0
        %4782 = vmatpush2.bf16.msra.mxu0 0
        %4783 = vmatprep.subr.bf16.mxu0 0
        %4784 = vmatpush2.bf16.msra.mxu0 0
        %4785 = vmatprep.subr.bf16.mxu0 0
        %4786 = vmatpush2.bf16.msra.mxu0 0
        %4787 = vmatprep.subr.bf16.mxu0 0
        %4788 = vmatpush2.bf16.msra.mxu0 0
        %4789 = vmatprep.subr.bf16.mxu0 0
        %4790 = vmatpush2.bf16.msra.mxu0 0
        %4791 = vmatprep.subr.bf16.mxu0 0
        %4792 = vmatpush2.bf16.msra.mxu0 0
        %4793 = vmatprep.mubr.bf16.mxu0 0
        %4794 = vmatmul.mubr.bf16.gmra.mxu0 %v4711
        %v4795 = vpop.f32.mrf.mxu0
        %v4796 = vadd.f32 0.0, %v4795
        %v4797 = vpop.f32.mrf.mxu0
        %v4798 = vpop.f32.mrf.mxu0
        %v4799 = vadd.f32 0.0, %v4798
        %v4800 = vpop.f32.mrf.mxu0
        %4801 = vmatprep.mubr.bf16.mxu0 0
        %4802 = vmatmul.mubr.bf16.gmra.mxu0 %v4714
        %v4803 = vpop.f32.mrf.mxu0
        %v4804 = vadd.f32 0.0, %v4803
        %v4805 = vpop.f32.mrf.mxu0
        %v4806 = vpop.f32.mrf.mxu0
        %v4807 = vadd.f32 0.0, %v4806
        %v4808 = vpop.f32.mrf.mxu0
        %4809 = vmatprep.mubr.bf16.mxu0 0
        %4810 = vmatmul.mubr.bf16.gmra.mxu0 %v4717
        %v4811 = vpop.f32.mrf.mxu0
        %v4812 = vadd.f32 0.0, %v4811
        %v4813 = vpop.f32.mrf.mxu0
        %v4814 = vpop.f32.mrf.mxu0
        %v4815 = vadd.f32 0.0, %v4814
        %v4816 = vpop.f32.mrf.mxu0
        %4817 = vmatprep.mubr.bf16.mxu0 0
        %4818 = vmatmul.mubr.bf16.gmra.mxu0 %v4720
        %v4819 = vpop.f32.mrf.mxu0
        %v4820 = vadd.f32 0.0, %v4819
        %v4821 = vpop.f32.mrf.mxu0
        %v4822 = vpop.f32.mrf.mxu0
        %v4823 = vadd.f32 0.0, %v4822
        %v4824 = vpop.f32.mrf.mxu0
        %4825 = vmatprep.mubr.bf16.mxu0 0
        %4826 = vmatmul.mubr.bf16.gmra.mxu0 %v4723
        %v4827 = vpop.f32.mrf.mxu0
        %v4828 = vadd.f32 0.0, %v4827
        %v4829 = vpop.f32.mrf.mxu0
        %v4830 = vpop.f32.mrf.mxu0
        %v4831 = vadd.f32 0.0, %v4830
        %v4832 = vpop.f32.mrf.mxu0
        %4833 = vmatprep.mubr.bf16.mxu0 0
        %4834 = vmatmul.mubr.bf16.gmra.mxu0 %v4726
        %v4835 = vpop.f32.mrf.mxu0
        %v4836 = vadd.f32 0.0, %v4835
        %v4837 = vpop.f32.mrf.mxu0
        %v4838 = vpop.f32.mrf.mxu0
        %v4839 = vadd.f32 0.0, %v4838
        %v4840 = vpop.f32.mrf.mxu0
        %4841 = vmatprep.mubr.bf16.mxu0 0
        %4842 = vmatmul.mubr.bf16.gmra.mxu0 %v4729
        %v4843 = vpop.f32.mrf.mxu0
        %v4844 = vadd.f32 0.0, %v4843
        %v4845 = vpop.f32.mrf.mxu0
        %v4846 = vpop.f32.mrf.mxu0
        %v4847 = vadd.f32 0.0, %v4846
        %v4848 = vpop.f32.mrf.mxu0
        %4849 = vmatprep.mubr.bf16.mxu0 0
        %4850 = vmatmul.mubr.bf16.gmra.mxu0 %v4732
        %v4851 = vpop.f32.mrf.mxu0
        %v4852 = vadd.f32 0.0, %v4851
        %v4853 = vpop.f32.mrf.mxu0
        %v4854 = vpop.f32.mrf.mxu0
        %v4855 = vadd.f32 0.0, %v4854
        %v4856 = vpop.f32.mrf.mxu0
        %4857 = vmatprep.mubr.bf16.mxu0 0
        %4858 = vmatmul.mubr.bf16.gmra.mxu0 %v4735
        %v4859 = vpop.f32.mrf.mxu0
        %v4860 = vadd.f32 0.0, %v4859
        %v4861 = vpop.f32.mrf.mxu0
        %v4862 = vpop.f32.mrf.mxu0
        %v4863 = vadd.f32 0.0, %v4862
        %v4864 = vpop.f32.mrf.mxu0
        %4865 = vmatprep.mubr.bf16.mxu0 0
        %4866 = vmatmul.mubr.bf16.gmra.mxu0 %v4738
        %v4867 = vpop.f32.mrf.mxu0
        %v4868 = vadd.f32 0.0, %v4867
        %v4869 = vpop.f32.mrf.mxu0
        %v4870 = vpop.f32.mrf.mxu0
        %v4871 = vadd.f32 0.0, %v4870
        %v4872 = vpop.f32.mrf.mxu0
        %4873 = vmatprep.mubr.bf16.mxu0 0
        %4874 = vmatmul.mubr.bf16.gmra.mxu0 %v4741
        %v4875 = vpop.f32.mrf.mxu0
        %v4876 = vadd.f32 0.0, %v4875
        %v4877 = vpop.f32.mrf.mxu0
        %v4878 = vpop.f32.mrf.mxu0
        %v4879 = vadd.f32 0.0, %v4878
        %v4880 = vpop.f32.mrf.mxu0
        %4881 = vmatprep.mubr.bf16.mxu0 0
        %4882 = vmatmul.mubr.bf16.gmra.mxu0 %v4744
        %v4883 = vpop.f32.mrf.mxu0
        %v4884 = vadd.f32 0.0, %v4883
        %v4885 = vpop.f32.mrf.mxu0
        %v4886 = vpop.f32.mrf.mxu0
        %v4887 = vadd.f32 0.0, %v4886
        %v4888 = vpop.f32.mrf.mxu0
        %4889 = vmatprep.mubr.bf16.mxu0 0
        %4890 = vmatmul.mubr.bf16.gmra.mxu0 %v4747
        %v4891 = vpop.f32.mrf.mxu0
        %v4892 = vadd.f32 0.0, %v4891
        %v4893 = vpop.f32.mrf.mxu0
        %v4894 = vpop.f32.mrf.mxu0
        %v4895 = vadd.f32 0.0, %v4894
        %v4896 = vpop.f32.mrf.mxu0
        %4897 = vmatprep.mubr.bf16.mxu0 0
        %4898 = vmatmul.mubr.bf16.gmra.mxu0 %v4750
        %v4899 = vpop.f32.mrf.mxu0
        %v4900 = vadd.f32 0.0, %v4899
        %v4901 = vpop.f32.mrf.mxu0
        %v4902 = vpop.f32.mrf.mxu0
        %v4903 = vadd.f32 0.0, %v4902
        %v4904 = vpop.f32.mrf.mxu0
        %4905 = vmatprep.mubr.bf16.mxu0 0
        %4906 = vmatmul.mubr.bf16.gmra.mxu0 %v4753
        %v4907 = vpop.f32.mrf.mxu0
        %v4908 = vadd.f32 0.0, %v4907
        %v4909 = vpop.f32.mrf.mxu0
        %v4910 = vpop.f32.mrf.mxu0
        %v4911 = vadd.f32 0.0, %v4910
        %v4912 = vpop.f32.mrf.mxu0
        %4913 = vmatprep.mubr.bf16.mxu0 0
        %4914 = vmatmul.mubr.bf16.gmra.mxu0 %v4756
        %v4915 = vpop.f32.mrf.mxu0
        %v4916 = vadd.f32 0.0, %v4915
        %v4917 = vpop.f32.mrf.mxu0
        %v4918 = vpop.f32.mrf.mxu0
        %v4919 = vadd.f32 0.0, %v4918
        %v4920 = vpop.f32.mrf.mxu0
        %4921 = vdwg.mxu0
        %v4922 = vadd.f32 %v4628, %v4796
        %v4923 = vadd.f32 %v4629, %v4799
        %v4924 = vadd.f32 %v4630, %v4804
        %v4925 = vadd.f32 %v4631, %v4807
        %v4926 = vadd.f32 %v4632, %v4812
        %v4927 = vadd.f32 %v4633, %v4815
        %v4928 = vadd.f32 %v4634, %v4820
        %v4929 = vadd.f32 %v4635, %v4823
        %v4930 = vadd.f32 %v4636, %v4828
        %v4931 = vadd.f32 %v4637, %v4831
        %v4932 = vadd.f32 %v4638, %v4836
        %v4933 = vadd.f32 %v4639, %v4839
        %v4934 = vadd.f32 %v4640, %v4844
        %v4935 = vadd.f32 %v4641, %v4847
        %v4936 = vadd.f32 %v4642, %v4852
        %v4937 = vadd.f32 %v4643, %v4855
        %v4938 = vadd.f32 %v4644, %v4860
        %v4939 = vadd.f32 %v4645, %v4863
        %v4940 = vadd.f32 %v4646, %v4868
        %v4941 = vadd.f32 %v4647, %v4871
        %v4942 = vadd.f32 %v4648, %v4876
        %v4943 = vadd.f32 %v4649, %v4879
        %v4944 = vadd.f32 %v4650, %v4884
        %v4945 = vadd.f32 %v4651, %v4887
        %v4946 = vadd.f32 %v4652, %v4892
        %v4947 = vadd.f32 %v4653, %v4895
        %v4948 = vadd.f32 %v4654, %v4900
        %v4949 = vadd.f32 %v4655, %v4903
        %v4950 = vadd.f32 %v4656, %v4908
        %v4951 = vadd.f32 %v4657, %v4911
        %v4952 = vadd.f32 %v4658, %v4916
        %v4953 = vadd.f32 %v4659, %v4919
        %4954 = vst [vmem:[%s163] sm:$0xff] %v4922
        %4955 = vst [vmem:[%s163 + $0x8] sm:$0xff] %v4923
        %4956 = vst [vmem:[%s163 + $0x10] sm:$0xff] %v4924
        %4957 = vst [vmem:[%s163 + $0x18] sm:$0xff] %v4925
        %4958 = vst [vmem:[%s163 + $0x20] sm:$0xff] %v4926
        %4959 = vst [vmem:[%s163 + $0x28] sm:$0xff] %v4927
        %4960 = vst [vmem:[%s163 + $0x30] sm:$0xff] %v4928
        %4961 = vst [vmem:[%s163 + $0x38] sm:$0xff] %v4929
        %4962 = vst [vmem:[%s163 + $0x40] sm:$0xff] %v4930
        %4963 = vst [vmem:[%s163 + $0x48] sm:$0xff] %v4931
        %4964 = vst [vmem:[%s163 + $0x50] sm:$0xff] %v4932
        %4965 = vst [vmem:[%s163 + $0x58] sm:$0xff] %v4933
        %4966 = vst [vmem:[%s163 + $0x60] sm:$0xff] %v4934
        %4967 = vst [vmem:[%s163 + $0x68] sm:$0xff] %v4935
        %4968 = vst [vmem:[%s163 + $0x70] sm:$0xff] %v4936
        %4969 = vst [vmem:[%s163 + $0x78] sm:$0xff] %v4937
        %4970 = vst [vmem:[%s163 + $0x80] sm:$0xff] %v4938
        %4971 = vst [vmem:[%s163 + $0x88] sm:$0xff] %v4939
        %4972 = vst [vmem:[%s163 + $0x90] sm:$0xff] %v4940
        %4973 = vst [vmem:[%s163 + $0x98] sm:$0xff] %v4941
        %4974 = vst [vmem:[%s163 + $0xa0] sm:$0xff] %v4942
        %4975 = vst [vmem:[%s163 + $0xa8] sm:$0xff] %v4943
        %4976 = vst [vmem:[%s163 + $0xb0] sm:$0xff] %v4944
        %4977 = vst [vmem:[%s163 + $0xb8] sm:$0xff] %v4945
        %4978 = vst [vmem:[%s163 + $0xc0] sm:$0xff] %v4946
        %4979 = vst [vmem:[%s163 + $0xc8] sm:$0xff] %v4947
        %4980 = vst [vmem:[%s163 + $0xd0] sm:$0xff] %v4948
        %4981 = vst [vmem:[%s163 + $0xd8] sm:$0xff] %v4949
        %4982 = vst [vmem:[%s163 + $0xe0] sm:$0xff] %v4950
        %4983 = vst [vmem:[%s163 + $0xe8] sm:$0xff] %v4951
        %4984 = vst [vmem:[%s163 + $0xf0] sm:$0xff] %v4952
        %4985 = vst [vmem:[%s163 + $0xf8] sm:$0xff] %v4953
        %v4986 = vld [vmem:[%s3773] sm:$0xe]
        %v4987 = vld [vmem:[%s3773 + $0x4] sm:$0xf]
        %v4988 = vld [vmem:[%s3773 + $0x8] sm:$0x1]
        %v4989 = vld [vmem:[%s3773 + $0xc] sm:$0xe]
        %v4990 = vld [vmem:[%s3773 + $0x10] sm:$0xf]
        %v4991 = vld [vmem:[%s3773 + $0x14] sm:$0x1]
        %v4992 = vld [vmem:[%s3773 + $0x18] sm:$0xe]
        %v4993 = vld [vmem:[%s3773 + $0x1c] sm:$0xf]
        %v4994 = vld [vmem:[%s3773 + $0x20] sm:$0x1]
        %v4995 = vld [vmem:[%s3773 + $0x24] sm:$0xe]
        %v4996 = vld [vmem:[%s3773 + $0x28] sm:$0xf]
        %v4997 = vld [vmem:[%s3773 + $0x2c] sm:$0x1]
        %v4998 = vld [vmem:[%s3773 + $0x30] sm:$0xe]
        %v4999 = vld [vmem:[%s3773 + $0x34] sm:$0xf]
        %v5000 = vld [vmem:[%s3773 + $0x38] sm:$0x1]
        %v5001 = vld [vmem:[%s3773 + $0x3c] sm:$0xe]
        %v5002 = vld [vmem:[%s3773 + $0x40] sm:$0xf]
        %v5003 = vld [vmem:[%s3773 + $0x44] sm:$0x1]
        %v5004 = vld [vmem:[%s3773 + $0x48] sm:$0xe]
        %v5005 = vld [vmem:[%s3773 + $0x4c] sm:$0xf]
        %v5006 = vld [vmem:[%s3773 + $0x50] sm:$0x1]
        %v5007 = vld [vmem:[%s3773 + $0x54] sm:$0xe]
        %v5008 = vld [vmem:[%s3773 + $0x58] sm:$0xf]
        %v5009 = vld [vmem:[%s3773 + $0x5c] sm:$0x1]
        %v5010 = vld [vmem:[%s3773 + $0x60] sm:$0xe]
        %v5011 = vld [vmem:[%s3773 + $0x64] sm:$0xf]
        %v5012 = vld [vmem:[%s3773 + $0x68] sm:$0x1]
        %v5013 = vld [vmem:[%s3773 + $0x6c] sm:$0xe]
        %v5014 = vld [vmem:[%s3773 + $0x70] sm:$0xf]
        %v5015 = vld [vmem:[%s3773 + $0x74] sm:$0x1]
        %v5016 = vld [vmem:[%s3773 + $0x78] sm:$0xe]
        %v5017 = vld [vmem:[%s3773 + $0x7c] sm:$0xf]
        %v5018 = vld [vmem:[%s3773 + $0x80] sm:$0x1]
        %v5019 = vld [vmem:[%s3773 + $0x84] sm:$0xe]
        %v5020 = vld [vmem:[%s3773 + $0x88] sm:$0xf]
        %v5021 = vld [vmem:[%s3773 + $0x8c] sm:$0x1]
        %v5022 = vld [vmem:[%s3773 + $0x90] sm:$0xe]
        %v5023 = vld [vmem:[%s3773 + $0x94] sm:$0xf]
        %v5024 = vld [vmem:[%s3773 + $0x98] sm:$0x1]
        %v5025 = vld [vmem:[%s3773 + $0x9c] sm:$0xe]
        %v5026 = vld [vmem:[%s3773 + $0xa0] sm:$0xf]
        %v5027 = vld [vmem:[%s3773 + $0xa4] sm:$0x1]
        %v5028 = vld [vmem:[%s3773 + $0xa8] sm:$0xe]
        %v5029 = vld [vmem:[%s3773 + $0xac] sm:$0xf]
        %v5030 = vld [vmem:[%s3773 + $0xb0] sm:$0x1]
        %v5031 = vld [vmem:[%s3773 + $0xb4] sm:$0xe]
        %v5032 = vld [vmem:[%s3773 + $0xb8] sm:$0xf]
        %v5033 = vld [vmem:[%s3773 + $0xbc] sm:$0x1]
        %v5082 = vrot.slane %v4986, 5
        %v5083 = vrot.slane %v5082, 4
        %v5084 = vrot.slane %v4987, 5
        %v5085 = vsel %vm1523, %v5083, %v5084
        %v5086 = vrot.slane %v5084, 4
        %v5087 = vrot.slane %v4988, 5
        %v5088 = vsel %vm1523, %v5086, %v5087
        %v5089 = vrot.slane %v4989, 5
        %v5090 = vrot.slane %v5089, 4
        %v5091 = vrot.slane %v4990, 5
        %v5092 = vsel %vm1523, %v5090, %v5091
        %v5093 = vrot.slane %v5091, 4
        %v5094 = vrot.slane %v4991, 5
        %v5095 = vsel %vm1523, %v5093, %v5094
        %v5096 = vrot.slane %v4992, 5
        %v5097 = vrot.slane %v5096, 4
        %v5098 = vrot.slane %v4993, 5
        %v5099 = vsel %vm1523, %v5097, %v5098
        %v5100 = vrot.slane %v5098, 4
        %v5101 = vrot.slane %v4994, 5
        %v5102 = vsel %vm1523, %v5100, %v5101
        %v5103 = vrot.slane %v4995, 5
        %v5104 = vrot.slane %v5103, 4
        %v5105 = vrot.slane %v4996, 5
        %v5106 = vsel %vm1523, %v5104, %v5105
        %v5107 = vrot.slane %v5105, 4
        %v5108 = vrot.slane %v4997, 5
        %v5109 = vsel %vm1523, %v5107, %v5108
        %v5110 = vrot.slane %v4998, 5
        %v5111 = vrot.slane %v5110, 4
        %v5112 = vrot.slane %v4999, 5
        %v5113 = vsel %vm1523, %v5111, %v5112
        %v5114 = vrot.slane %v5112, 4
        %v5115 = vrot.slane %v5000, 5
        %v5116 = vsel %vm1523, %v5114, %v5115
        %v5117 = vrot.slane %v5001, 5
        %v5118 = vrot.slane %v5117, 4
        %v5119 = vrot.slane %v5002, 5
        %v5120 = vsel %vm1523, %v5118, %v5119
        %v5121 = vrot.slane %v5119, 4
        %v5122 = vrot.slane %v5003, 5
        %v5123 = vsel %vm1523, %v5121, %v5122
        %v5124 = vrot.slane %v5004, 5
        %v5125 = vrot.slane %v5124, 4
        %v5126 = vrot.slane %v5005, 5
        %v5127 = vsel %vm1523, %v5125, %v5126
        %v5128 = vrot.slane %v5126, 4
        %v5129 = vrot.slane %v5006, 5
        %v5130 = vsel %vm1523, %v5128, %v5129
        %v5131 = vrot.slane %v5007, 5
        %v5132 = vrot.slane %v5131, 4
        %v5133 = vrot.slane %v5008, 5
        %v5134 = vsel %vm1523, %v5132, %v5133
        %v5135 = vrot.slane %v5133, 4
        %v5136 = vrot.slane %v5009, 5
        %v5137 = vsel %vm1523, %v5135, %v5136
        %v5138 = vrot.slane %v5010, 5
        %v5139 = vrot.slane %v5138, 4
        %v5140 = vrot.slane %v5011, 5
        %v5141 = vsel %vm1523, %v5139, %v5140
        %v5142 = vrot.slane %v5140, 4
        %v5143 = vrot.slane %v5012, 5
        %v5144 = vsel %vm1523, %v5142, %v5143
        %v5145 = vrot.slane %v5013, 5
        %v5146 = vrot.slane %v5145, 4
        %v5147 = vrot.slane %v5014, 5
        %v5148 = vsel %vm1523, %v5146, %v5147
        %v5149 = vrot.slane %v5147, 4
        %v5150 = vrot.slane %v5015, 5
        %v5151 = vsel %vm1523, %v5149, %v5150
        %v5152 = vrot.slane %v5016, 5
        %v5153 = vrot.slane %v5152, 4
        %v5154 = vrot.slane %v5017, 5
        %v5155 = vsel %vm1523, %v5153, %v5154
        %v5156 = vrot.slane %v5154, 4
        %v5157 = vrot.slane %v5018, 5
        %v5158 = vsel %vm1523, %v5156, %v5157
        %v5159 = vrot.slane %v5019, 5
        %v5160 = vrot.slane %v5159, 4
        %v5161 = vrot.slane %v5020, 5
        %v5162 = vsel %vm1523, %v5160, %v5161
        %v5163 = vrot.slane %v5161, 4
        %v5164 = vrot.slane %v5021, 5
        %v5165 = vsel %vm1523, %v5163, %v5164
        %v5166 = vrot.slane %v5022, 5
        %v5167 = vrot.slane %v5166, 4
        %v5168 = vrot.slane %v5023, 5
        %v5169 = vsel %vm1523, %v5167, %v5168
        %v5170 = vrot.slane %v5168, 4
        %v5171 = vrot.slane %v5024, 5
        %v5172 = vsel %vm1523, %v5170, %v5171
        %v5173 = vrot.slane %v5025, 5
        %v5174 = vrot.slane %v5173, 4
        %v5175 = vrot.slane %v5026, 5
        %v5176 = vsel %vm1523, %v5174, %v5175
        %v5177 = vrot.slane %v5175, 4
        %v5178 = vrot.slane %v5027, 5
        %v5179 = vsel %vm1523, %v5177, %v5178
        %v5180 = vrot.slane %v5028, 5
        %v5181 = vrot.slane %v5180, 4
        %v5182 = vrot.slane %v5029, 5
        %v5183 = vsel %vm1523, %v5181, %v5182
        %v5184 = vrot.slane %v5182, 4
        %v5185 = vrot.slane %v5030, 5
        %v5186 = vsel %vm1523, %v5184, %v5185
        %v5187 = vrot.slane %v5031, 5
        %v5188 = vrot.slane %v5187, 4
        %v5189 = vrot.slane %v5032, 5
        %v5190 = vsel %vm1523, %v5188, %v5189
        %v5191 = vrot.slane %v5189, 4
        %v5192 = vrot.slane %v5033, 5
        %v5193 = vsel %vm1523, %v5191, %v5192
        %v5194 = vld [vmem:[%s163] sm:$0xff]
        %v5195 = vld [vmem:[%s163 + $0x8] sm:$0xff]
        %v5196 = vld [vmem:[%s163 + $0x10] sm:$0xff]
        %v5197 = vld [vmem:[%s163 + $0x18] sm:$0xff]
        %v5198 = vld [vmem:[%s163 + $0x20] sm:$0xff]
        %v5199 = vld [vmem:[%s163 + $0x28] sm:$0xff]
        %v5200 = vld [vmem:[%s163 + $0x30] sm:$0xff]
        %v5201 = vld [vmem:[%s163 + $0x38] sm:$0xff]
        %v5202 = vld [vmem:[%s163 + $0x40] sm:$0xff]
        %v5203 = vld [vmem:[%s163 + $0x48] sm:$0xff]
        %v5204 = vld [vmem:[%s163 + $0x50] sm:$0xff]
        %v5205 = vld [vmem:[%s163 + $0x58] sm:$0xff]
        %v5206 = vld [vmem:[%s163 + $0x60] sm:$0xff]
        %v5207 = vld [vmem:[%s163 + $0x68] sm:$0xff]
        %v5208 = vld [vmem:[%s163 + $0x70] sm:$0xff]
        %v5209 = vld [vmem:[%s163 + $0x78] sm:$0xff]
        %v5210 = vld [vmem:[%s163 + $0x80] sm:$0xff]
        %v5211 = vld [vmem:[%s163 + $0x88] sm:$0xff]
        %v5212 = vld [vmem:[%s163 + $0x90] sm:$0xff]
        %v5213 = vld [vmem:[%s163 + $0x98] sm:$0xff]
        %v5214 = vld [vmem:[%s163 + $0xa0] sm:$0xff]
        %v5215 = vld [vmem:[%s163 + $0xa8] sm:$0xff]
        %v5216 = vld [vmem:[%s163 + $0xb0] sm:$0xff]
        %v5217 = vld [vmem:[%s163 + $0xb8] sm:$0xff]
        %v5218 = vld [vmem:[%s163 + $0xc0] sm:$0xff]
        %v5219 = vld [vmem:[%s163 + $0xc8] sm:$0xff]
        %v5220 = vld [vmem:[%s163 + $0xd0] sm:$0xff]
        %v5221 = vld [vmem:[%s163 + $0xd8] sm:$0xff]
        %v5222 = vld [vmem:[%s163 + $0xe0] sm:$0xff]
        %v5223 = vld [vmem:[%s163 + $0xe8] sm:$0xff]
        %v5224 = vld [vmem:[%s163 + $0xf0] sm:$0xff]
        %v5225 = vld [vmem:[%s163 + $0xf8] sm:$0xff]
        %s5226 = scalar_lea.vmem %s1, 16
        %v5227 = vld [vmem:[%s5226] sm:$0x3]
        %v5228 = vunpack.c.l.b16 %v5085
        %v5229 = vunpack.c.l.b16 %v5088
        %v5230 = vunpack.c.l.b16 %v5092
        %v5231 = vunpack.c.l.b16 %v5095
        %v5232 = vunpack.c.l.b16 %v5099
        %v5233 = vunpack.c.l.b16 %v5102
        %v5234 = vunpack.c.l.b16 %v5106
        %v5235 = vunpack.c.l.b16 %v5109
        %v5236 = vunpack.c.l.b16 %v5113
        %v5237 = vunpack.c.l.b16 %v5116
        %v5238 = vunpack.c.l.b16 %v5120
        %v5239 = vunpack.c.l.b16 %v5123
        %v5240 = vunpack.c.l.b16 %v5127
        %v5241 = vunpack.c.l.b16 %v5130
        %v5242 = vunpack.c.l.b16 %v5134
        %v5243 = vunpack.c.l.b16 %v5137
        %v5244 = vunpack.c.l.b16 %v5141
        %v5245 = vunpack.c.l.b16 %v5144
        %v5246 = vunpack.c.l.b16 %v5148
        %v5247 = vunpack.c.l.b16 %v5151
        %v5248 = vunpack.c.l.b16 %v5155
        %v5249 = vunpack.c.l.b16 %v5158
        %v5250 = vunpack.c.l.b16 %v5162
        %v5251 = vunpack.c.l.b16 %v5165
        %v5252 = vunpack.c.l.b16 %v5169
        %v5253 = vunpack.c.l.b16 %v5172
        %v5254 = vunpack.c.l.b16 %v5176
        %v5255 = vunpack.c.l.b16 %v5179
        %v5256 = vunpack.c.l.b16 %v5183
        %v5257 = vunpack.c.l.b16 %v5186
        %v5258 = vunpack.c.l.b16 %v5190
        %v5259 = vunpack.c.l.b16 %v5193
        %v5260 = vpack.c.b16 %v5229, %v5228
        %v5261 = vpack.c.b16 %v5231, %v5230
        %v5262 = vpack.c.b16 %v5233, %v5232
        %v5263 = vpack.c.b16 %v5235, %v5234
        %v5264 = vpack.c.b16 %v5237, %v5236
        %v5265 = vpack.c.b16 %v5239, %v5238
        %v5266 = vpack.c.b16 %v5241, %v5240
        %v5267 = vpack.c.b16 %v5243, %v5242
        %v5268 = vpack.c.b16 %v5245, %v5244
        %v5269 = vpack.c.b16 %v5247, %v5246
        %v5270 = vpack.c.b16 %v5249, %v5248
        %v5271 = vpack.c.b16 %v5251, %v5250
        %v5272 = vpack.c.b16 %v5253, %v5252
        %v5273 = vpack.c.b16 %v5255, %v5254
        %v5274 = vpack.c.b16 %v5257, %v5256
        %v5275 = vpack.c.b16 %v5259, %v5258
        %v5277 = vsel %vm354, %v5260, 0
        %v5280 = vsel %vm354, %v5261, 0
        %v5283 = vsel %vm354, %v5262, 0
        %v5286 = vsel %vm354, %v5263, 0
        %v5289 = vsel %vm354, %v5264, 0
        %v5292 = vsel %vm354, %v5265, 0
        %v5295 = vsel %vm354, %v5266, 0
        %v5298 = vsel %vm354, %v5267, 0
        %v5301 = vsel %vm354, %v5268, 0
        %v5304 = vsel %vm354, %v5269, 0
        %v5307 = vsel %vm354, %v5270, 0
        %v5310 = vsel %vm354, %v5271, 0
        %v5313 = vsel %vm354, %v5272, 0
        %v5316 = vsel %vm354, %v5273, 0
        %v5319 = vsel %vm354, %v5274, 0
        %v5322 = vsel %vm354, %v5275, 0
        %v5325 = vsel %vm403, %v5227, 0
        %5327 = vmatprep.subr.bf16.mxu0 0
        %5328 = vmatpush1.bf16.msra.mxu0 0
        %5329 = vmatprep.subr.bf16.mxu0 0
        %5330 = vmatpush1.bf16.msra.mxu0 0
        %5331 = vmatprep.subr.bf16.mxu0 0
        %5332 = vmatpush1.bf16.msra.mxu0 0
        %5333 = vmatprep.subr.bf16.mxu0 0
        %5334 = vmatpush1.bf16.msra.mxu0 0
        %5335 = vmatprep.subr.bf16.mxu0 0
        %5336 = vmatpush1.bf16.msra.mxu0 0
        %5337 = vmatprep.subr.bf16.mxu0 0
        %5338 = vmatpush1.bf16.msra.mxu0 0
        %5339 = vmatprep.subr.bf16.mxu0 0
        %5340 = vmatpush1.bf16.msra.mxu0 0
        %5341 = vmatprep.subr.bf16.mxu0 0
        %5342 = vmatpush1.bf16.msra.mxu0 %v5325
        %5343 = vmatprep.subr.bf16.mxu0 0
        %5344 = vmatpush2.bf16.msra.mxu0 0
        %5345 = vmatprep.subr.bf16.mxu0 0
        %5346 = vmatpush2.bf16.msra.mxu0 0
        %5347 = vmatprep.subr.bf16.mxu0 0
        %5348 = vmatpush2.bf16.msra.mxu0 0
        %5349 = vmatprep.subr.bf16.mxu0 0
        %5350 = vmatpush2.bf16.msra.mxu0 0
        %5351 = vmatprep.subr.bf16.mxu0 0
        %5352 = vmatpush2.bf16.msra.mxu0 0
        %5353 = vmatprep.subr.bf16.mxu0 0
        %5354 = vmatpush2.bf16.msra.mxu0 0
        %5355 = vmatprep.subr.bf16.mxu0 0
        %5356 = vmatpush2.bf16.msra.mxu0 0
        %5357 = vmatprep.subr.bf16.mxu0 0
        %5358 = vmatpush2.bf16.msra.mxu0 0
        %5359 = vmatprep.mubr.bf16.mxu0 0
        %5360 = vmatmul.mubr.bf16.gmra.mxu0 %v5277
        %v5361 = vpop.f32.mrf.mxu0
        %v5362 = vadd.f32 0.0, %v5361
        %v5363 = vpop.f32.mrf.mxu0
        %v5364 = vpop.f32.mrf.mxu0
        %v5365 = vadd.f32 0.0, %v5364
        %v5366 = vpop.f32.mrf.mxu0
        %5367 = vmatprep.mubr.bf16.mxu0 0
        %5368 = vmatmul.mubr.bf16.gmra.mxu0 %v5280
        %v5369 = vpop.f32.mrf.mxu0
        %v5370 = vadd.f32 0.0, %v5369
        %v5371 = vpop.f32.mrf.mxu0
        %v5372 = vpop.f32.mrf.mxu0
        %v5373 = vadd.f32 0.0, %v5372
        %v5374 = vpop.f32.mrf.mxu0
        %5375 = vmatprep.mubr.bf16.mxu0 0
        %5376 = vmatmul.mubr.bf16.gmra.mxu0 %v5283
        %v5377 = vpop.f32.mrf.mxu0
        %v5378 = vadd.f32 0.0, %v5377
        %v5379 = vpop.f32.mrf.mxu0
        %v5380 = vpop.f32.mrf.mxu0
        %v5381 = vadd.f32 0.0, %v5380
        %v5382 = vpop.f32.mrf.mxu0
        %5383 = vmatprep.mubr.bf16.mxu0 0
        %5384 = vmatmul.mubr.bf16.gmra.mxu0 %v5286
        %v5385 = vpop.f32.mrf.mxu0
        %v5386 = vadd.f32 0.0, %v5385
        %v5387 = vpop.f32.mrf.mxu0
        %v5388 = vpop.f32.mrf.mxu0
        %v5389 = vadd.f32 0.0, %v5388
        %v5390 = vpop.f32.mrf.mxu0
        %5391 = vmatprep.mubr.bf16.mxu0 0
        %5392 = vmatmul.mubr.bf16.gmra.mxu0 %v5289
        %v5393 = vpop.f32.mrf.mxu0
        %v5394 = vadd.f32 0.0, %v5393
        %v5395 = vpop.f32.mrf.mxu0
        %v5396 = vpop.f32.mrf.mxu0
        %v5397 = vadd.f32 0.0, %v5396
        %v5398 = vpop.f32.mrf.mxu0
        %5399 = vmatprep.mubr.bf16.mxu0 0
        %5400 = vmatmul.mubr.bf16.gmra.mxu0 %v5292
        %v5401 = vpop.f32.mrf.mxu0
        %v5402 = vadd.f32 0.0, %v5401
        %v5403 = vpop.f32.mrf.mxu0
        %v5404 = vpop.f32.mrf.mxu0
        %v5405 = vadd.f32 0.0, %v5404
        %v5406 = vpop.f32.mrf.mxu0
        %5407 = vmatprep.mubr.bf16.mxu0 0
        %5408 = vmatmul.mubr.bf16.gmra.mxu0 %v5295
        %v5409 = vpop.f32.mrf.mxu0
        %v5410 = vadd.f32 0.0, %v5409
        %v5411 = vpop.f32.mrf.mxu0
        %v5412 = vpop.f32.mrf.mxu0
        %v5413 = vadd.f32 0.0, %v5412
        %v5414 = vpop.f32.mrf.mxu0
        %5415 = vmatprep.mubr.bf16.mxu0 0
        %5416 = vmatmul.mubr.bf16.gmra.mxu0 %v5298
        %v5417 = vpop.f32.mrf.mxu0
        %v5418 = vadd.f32 0.0, %v5417
        %v5419 = vpop.f32.mrf.mxu0
        %v5420 = vpop.f32.mrf.mxu0
        %v5421 = vadd.f32 0.0, %v5420
        %v5422 = vpop.f32.mrf.mxu0
        %5423 = vmatprep.mubr.bf16.mxu0 0
        %5424 = vmatmul.mubr.bf16.gmra.mxu0 %v5301
        %v5425 = vpop.f32.mrf.mxu0
        %v5426 = vadd.f32 0.0, %v5425
        %v5427 = vpop.f32.mrf.mxu0
        %v5428 = vpop.f32.mrf.mxu0
        %v5429 = vadd.f32 0.0, %v5428
        %v5430 = vpop.f32.mrf.mxu0
        %5431 = vmatprep.mubr.bf16.mxu0 0
        %5432 = vmatmul.mubr.bf16.gmra.mxu0 %v5304
        %v5433 = vpop.f32.mrf.mxu0
        %v5434 = vadd.f32 0.0, %v5433
        %v5435 = vpop.f32.mrf.mxu0
        %v5436 = vpop.f32.mrf.mxu0
        %v5437 = vadd.f32 0.0, %v5436
        %v5438 = vpop.f32.mrf.mxu0
        %5439 = vmatprep.mubr.bf16.mxu0 0
        %5440 = vmatmul.mubr.bf16.gmra.mxu0 %v5307
        %v5441 = vpop.f32.mrf.mxu0
        %v5442 = vadd.f32 0.0, %v5441
        %v5443 = vpop.f32.mrf.mxu0
        %v5444 = vpop.f32.mrf.mxu0
        %v5445 = vadd.f32 0.0, %v5444
        %v5446 = vpop.f32.mrf.mxu0
        %5447 = vmatprep.mubr.bf16.mxu0 0
        %5448 = vmatmul.mubr.bf16.gmra.mxu0 %v5310
        %v5449 = vpop.f32.mrf.mxu0
        %v5450 = vadd.f32 0.0, %v5449
        %v5451 = vpop.f32.mrf.mxu0
        %v5452 = vpop.f32.mrf.mxu0
        %v5453 = vadd.f32 0.0, %v5452
        %v5454 = vpop.f32.mrf.mxu0
        %5455 = vmatprep.mubr.bf16.mxu0 0
        %5456 = vmatmul.mubr.bf16.gmra.mxu0 %v5313
        %v5457 = vpop.f32.mrf.mxu0
        %v5458 = vadd.f32 0.0, %v5457
        %v5459 = vpop.f32.mrf.mxu0
        %v5460 = vpop.f32.mrf.mxu0
        %v5461 = vadd.f32 0.0, %v5460
        %v5462 = vpop.f32.mrf.mxu0
        %5463 = vmatprep.mubr.bf16.mxu0 0
        %5464 = vmatmul.mubr.bf16.gmra.mxu0 %v5316
        %v5465 = vpop.f32.mrf.mxu0
        %v5466 = vadd.f32 0.0, %v5465
        %v5467 = vpop.f32.mrf.mxu0
        %v5468 = vpop.f32.mrf.mxu0
        %v5469 = vadd.f32 0.0, %v5468
        %v5470 = vpop.f32.mrf.mxu0
        %5471 = vmatprep.mubr.bf16.mxu0 0
        %5472 = vmatmul.mubr.bf16.gmra.mxu0 %v5319
        %v5473 = vpop.f32.mrf.mxu0
        %v5474 = vadd.f32 0.0, %v5473
        %v5475 = vpop.f32.mrf.mxu0
        %v5476 = vpop.f32.mrf.mxu0
        %v5477 = vadd.f32 0.0, %v5476
        %v5478 = vpop.f32.mrf.mxu0
        %5479 = vmatprep.mubr.bf16.mxu0 0
        %5480 = vmatmul.mubr.bf16.gmra.mxu0 %v5322
        %v5481 = vpop.f32.mrf.mxu0
        %v5482 = vadd.f32 0.0, %v5481
        %v5483 = vpop.f32.mrf.mxu0
        %v5484 = vpop.f32.mrf.mxu0
        %v5485 = vadd.f32 0.0, %v5484
        %v5486 = vpop.f32.mrf.mxu0
        %5487 = vdwg.mxu0
        %v5488 = vadd.f32 %v5194, %v5362
        %v5489 = vadd.f32 %v5195, %v5365
        %v5490 = vadd.f32 %v5196, %v5370
        %v5491 = vadd.f32 %v5197, %v5373
        %v5492 = vadd.f32 %v5198, %v5378
        %v5493 = vadd.f32 %v5199, %v5381
        %v5494 = vadd.f32 %v5200, %v5386
        %v5495 = vadd.f32 %v5201, %v5389
        %v5496 = vadd.f32 %v5202, %v5394
        %v5497 = vadd.f32 %v5203, %v5397
        %v5498 = vadd.f32 %v5204, %v5402
        %v5499 = vadd.f32 %v5205, %v5405
        %v5500 = vadd.f32 %v5206, %v5410
        %v5501 = vadd.f32 %v5207, %v5413
        %v5502 = vadd.f32 %v5208, %v5418
        %v5503 = vadd.f32 %v5209, %v5421
        %v5504 = vadd.f32 %v5210, %v5426
        %v5505 = vadd.f32 %v5211, %v5429
        %v5506 = vadd.f32 %v5212, %v5434
        %v5507 = vadd.f32 %v5213, %v5437
        %v5508 = vadd.f32 %v5214, %v5442
        %v5509 = vadd.f32 %v5215, %v5445
        %v5510 = vadd.f32 %v5216, %v5450
        %v5511 = vadd.f32 %v5217, %v5453
        %v5512 = vadd.f32 %v5218, %v5458
        %v5513 = vadd.f32 %v5219, %v5461
        %v5514 = vadd.f32 %v5220, %v5466
        %v5515 = vadd.f32 %v5221, %v5469
        %v5516 = vadd.f32 %v5222, %v5474
        %v5517 = vadd.f32 %v5223, %v5477
        %v5518 = vadd.f32 %v5224, %v5482
        %v5519 = vadd.f32 %v5225, %v5485
        %5520 = vst [vmem:[%s163] sm:$0xff] %v5488
        %5521 = vst [vmem:[%s163 + $0x8] sm:$0xff] %v5489
        %5522 = vst [vmem:[%s163 + $0x10] sm:$0xff] %v5490
        %5523 = vst [vmem:[%s163 + $0x18] sm:$0xff] %v5491
        %5524 = vst [vmem:[%s163 + $0x20] sm:$0xff] %v5492
        %5525 = vst [vmem:[%s163 + $0x28] sm:$0xff] %v5493
        %5526 = vst [vmem:[%s163 + $0x30] sm:$0xff] %v5494
        %5527 = vst [vmem:[%s163 + $0x38] sm:$0xff] %v5495
        %5528 = vst [vmem:[%s163 + $0x40] sm:$0xff] %v5496
        %5529 = vst [vmem:[%s163 + $0x48] sm:$0xff] %v5497
        %5530 = vst [vmem:[%s163 + $0x50] sm:$0xff] %v5498
        %5531 = vst [vmem:[%s163 + $0x58] sm:$0xff] %v5499
        %5532 = vst [vmem:[%s163 + $0x60] sm:$0xff] %v5500
        %5533 = vst [vmem:[%s163 + $0x68] sm:$0xff] %v5501
        %5534 = vst [vmem:[%s163 + $0x70] sm:$0xff] %v5502
        %5535 = vst [vmem:[%s163 + $0x78] sm:$0xff] %v5503
        %5536 = vst [vmem:[%s163 + $0x80] sm:$0xff] %v5504
        %5537 = vst [vmem:[%s163 + $0x88] sm:$0xff] %v5505
        %5538 = vst [vmem:[%s163 + $0x90] sm:$0xff] %v5506
        %5539 = vst [vmem:[%s163 + $0x98] sm:$0xff] %v5507
        %5540 = vst [vmem:[%s163 + $0xa0] sm:$0xff] %v5508
        %5541 = vst [vmem:[%s163 + $0xa8] sm:$0xff] %v5509
        %5542 = vst [vmem:[%s163 + $0xb0] sm:$0xff] %v5510
        %5543 = vst [vmem:[%s163 + $0xb8] sm:$0xff] %v5511
        %5544 = vst [vmem:[%s163 + $0xc0] sm:$0xff] %v5512
        %5545 = vst [vmem:[%s163 + $0xc8] sm:$0xff] %v5513
        %5546 = vst [vmem:[%s163 + $0xd0] sm:$0xff] %v5514
        %5547 = vst [vmem:[%s163 + $0xd8] sm:$0xff] %v5515
        %5548 = vst [vmem:[%s163 + $0xe0] sm:$0xff] %v5516
        %5549 = vst [vmem:[%s163 + $0xe8] sm:$0xff] %v5517
        %5550 = vst [vmem:[%s163 + $0xf0] sm:$0xff] %v5518
        %5551 = vst [vmem:[%s163 + $0xf8] sm:$0xff] %v5519
        %v5552 = vld [vmem:[%s163] sm:$0xff]
        %v5553 = vld [vmem:[%s163 + $0x8] sm:$0xff]
        %v5554 = vld [vmem:[%s163 + $0x10] sm:$0xff]
        %v5555 = vld [vmem:[%s163 + $0x18] sm:$0xff]
        %v5556 = vld [vmem:[%s163 + $0x20] sm:$0xff]
        %v5557 = vld [vmem:[%s163 + $0x28] sm:$0xff]
        %v5558 = vld [vmem:[%s163 + $0x30] sm:$0xff]
        %v5559 = vld [vmem:[%s163 + $0x38] sm:$0xff]
        %v5560 = vld [vmem:[%s163 + $0x40] sm:$0xff]
        %v5561 = vld [vmem:[%s163 + $0x48] sm:$0xff]
        %v5562 = vld [vmem:[%s163 + $0x50] sm:$0xff]
        %v5563 = vld [vmem:[%s163 + $0x58] sm:$0xff]
        %v5564 = vld [vmem:[%s163 + $0x60] sm:$0xff]
        %v5565 = vld [vmem:[%s163 + $0x68] sm:$0xff]
        %v5566 = vld [vmem:[%s163 + $0x70] sm:$0xff]
        %v5567 = vld [vmem:[%s163 + $0x78] sm:$0xff]
        %v5568 = vld [vmem:[%s163 + $0x80] sm:$0xff]
        %v5569 = vld [vmem:[%s163 + $0x88] sm:$0xff]
        %v5570 = vld [vmem:[%s163 + $0x90] sm:$0xff]
        %v5571 = vld [vmem:[%s163 + $0x98] sm:$0xff]
        %v5572 = vld [vmem:[%s163 + $0xa0] sm:$0xff]
        %v5573 = vld [vmem:[%s163 + $0xa8] sm:$0xff]
        %v5574 = vld [vmem:[%s163 + $0xb0] sm:$0xff]
        %v5575 = vld [vmem:[%s163 + $0xb8] sm:$0xff]
        %v5576 = vld [vmem:[%s163 + $0xc0] sm:$0xff]
        %v5577 = vld [vmem:[%s163 + $0xc8] sm:$0xff]
        %v5578 = vld [vmem:[%s163 + $0xd0] sm:$0xff]
        %v5579 = vld [vmem:[%s163 + $0xd8] sm:$0xff]
        %v5580 = vld [vmem:[%s163 + $0xe0] sm:$0xff]
        %v5581 = vld [vmem:[%s163 + $0xe8] sm:$0xff]
        %v5582 = vld [vmem:[%s163 + $0xf0] sm:$0xff]
        %v5583 = vld [vmem:[%s163 + $0xf8] sm:$0xff]
        %v5584 = vmax.f32 %v5552, 0.0
        %v5585 = vmax.f32 %v5553, 0.0
        %v5586 = vmax.f32 %v5554, 0.0
        %v5587 = vmax.f32 %v5555, 0.0
        %v5588 = vmax.f32 %v5556, 0.0
        %v5589 = vmax.f32 %v5557, 0.0
        %v5590 = vmax.f32 %v5558, 0.0
        %v5591 = vmax.f32 %v5559, 0.0
        %v5592 = vmax.f32 %v5560, 0.0
        %v5593 = vmax.f32 %v5561, 0.0
        %v5594 = vmax.f32 %v5562, 0.0
        %v5595 = vmax.f32 %v5563, 0.0
        %v5596 = vmax.f32 %v5564, 0.0
        %v5597 = vmax.f32 %v5565, 0.0
        %v5598 = vmax.f32 %v5566, 0.0
        %v5599 = vmax.f32 %v5567, 0.0
        %v5600 = vmax.f32 %v5568, 0.0
        %v5601 = vmax.f32 %v5569, 0.0
        %v5602 = vmax.f32 %v5570, 0.0
        %v5603 = vmax.f32 %v5571, 0.0
        %v5604 = vmax.f32 %v5572, 0.0
        %v5605 = vmax.f32 %v5573, 0.0
        %v5606 = vmax.f32 %v5574, 0.0
        %v5607 = vmax.f32 %v5575, 0.0
        %v5608 = vmax.f32 %v5576, 0.0
        %v5609 = vmax.f32 %v5577, 0.0
        %v5610 = vmax.f32 %v5578, 0.0
        %v5611 = vmax.f32 %v5579, 0.0
        %v5612 = vmax.f32 %v5580, 0.0
        %v5613 = vmax.f32 %v5581, 0.0
        %v5614 = vmax.f32 %v5582, 0.0
        %v5615 = vmax.f32 %v5583, 0.0
        %5616 = vst [vmem:[%s163] sm:$0xff] %v5584
        %5617 = vst [vmem:[%s163 + $0x8] sm:$0xff] %v5585
        %5618 = vst [vmem:[%s163 + $0x10] sm:$0xff] %v5586
        %5619 = vst [vmem:[%s163 + $0x18] sm:$0xff] %v5587
        %5620 = vst [vmem:[%s163 + $0x20] sm:$0xff] %v5588
        %5621 = vst [vmem:[%s163 + $0x28] sm:$0xff] %v5589
        %5622 = vst [vmem:[%s163 + $0x30] sm:$0xff] %v5590
        %5623 = vst [vmem:[%s163 + $0x38] sm:$0xff] %v5591
        %5624 = vst [vmem:[%s163 + $0x40] sm:$0xff] %v5592
        %5625 = vst [vmem:[%s163 + $0x48] sm:$0xff] %v5593
        %5626 = vst [vmem:[%s163 + $0x50] sm:$0xff] %v5594
        %5627 = vst [vmem:[%s163 + $0x58] sm:$0xff] %v5595
        %5628 = vst [vmem:[%s163 + $0x60] sm:$0xff] %v5596
        %5629 = vst [vmem:[%s163 + $0x68] sm:$0xff] %v5597
        %5630 = vst [vmem:[%s163 + $0x70] sm:$0xff] %v5598
        %5631 = vst [vmem:[%s163 + $0x78] sm:$0xff] %v5599
        %5632 = vst [vmem:[%s163 + $0x80] sm:$0xff] %v5600
        %5633 = vst [vmem:[%s163 + $0x88] sm:$0xff] %v5601
        %5634 = vst [vmem:[%s163 + $0x90] sm:$0xff] %v5602
        %5635 = vst [vmem:[%s163 + $0x98] sm:$0xff] %v5603
        %5636 = vst [vmem:[%s163 + $0xa0] sm:$0xff] %v5604
        %5637 = vst [vmem:[%s163 + $0xa8] sm:$0xff] %v5605
        %5638 = vst [vmem:[%s163 + $0xb0] sm:$0xff] %v5606
        %5639 = vst [vmem:[%s163 + $0xb8] sm:$0xff] %v5607
        %5640 = vst [vmem:[%s163 + $0xc0] sm:$0xff] %v5608
        %5641 = vst [vmem:[%s163 + $0xc8] sm:$0xff] %v5609
        %5642 = vst [vmem:[%s163 + $0xd0] sm:$0xff] %v5610
        %5643 = vst [vmem:[%s163 + $0xd8] sm:$0xff] %v5611
        %5644 = vst [vmem:[%s163 + $0xe0] sm:$0xff] %v5612
        %5645 = vst [vmem:[%s163 + $0xe8] sm:$0xff] %v5613
        %5646 = vst [vmem:[%s163 + $0xf0] sm:$0xff] %v5614
        %5647 = vst [vmem:[%s163 + $0xf8] sm:$0xff] %v5615
        %s5648 = sand.u32 %s93, 1
        %s5649 = scalar_lea.sflag [#allocation3], %s5648
        %s5650 = sand.u32 %s93, 1
        %s5651 = smul.addr %s5650, 256
        %s5652 = scalar_lea.vmem [#allocation2], %s5651
        // Predicated region
        $region33: #{tpu_custom_call.1} parent=31 // pred_check
          %p5653 = pneg %p103
        $region34: #{tpu_custom_call.1} parent=31 // pred_check_branch
          %5655 = sbr.rel (%p5653) target = $region36
        $region35: #{tpu_custom_call.1} parent=31 // pred_region
          %s5657 = ssub.s32 4096, 4096
          %5658 = vsyncadd %s5649, %s5657
          %s5659 = smul.addr %s17, 32
          %s5660 = smul.addr %s5659, 128
          %s5661 = scalar_lea.hbm %s3, %s5660
          %s5662 = sshll.u32 %s5652, 4
          %s5663 = int_to_ptr.vmem [resolvable:$true] %s5662
          %5668 = dma.vmem_to_hbm [thread:$0]  %s5663, 4096, %s5661, %s5649, 128, 128, 8
        $region36: #{tpu_custom_call.1} parent=31 // pred_fallthru
          _
      $region32: #{tpu_custom_call.1} parent=5 // pred_fallthru
        _
      %p5669 = scmp.le.s32.totalorder 2, %s12
      // Predicated region
      $region37: #{tpu_custom_call.1} parent=5 // pred_check
        %p5670 = pneg %p5669
      $region38: #{tpu_custom_call.1} parent=5 // pred_check_branch
        %5672 = sbr.rel (%p5670) target = $region40
      $region39: #{tpu_custom_call.1} parent=5 // pred_region
        %s5673 = ssub.s32 %s12, 2
        // Predicated region
        $region41: #{tpu_custom_call.1} parent=39 // pred_check
          %p5674 = pneg %p109
        $region42: #{tpu_custom_call.1} parent=39 // pred_check_branch
          %5676 = sbr.rel (%p5674) target = $region44
        $region43: #{tpu_custom_call.1} parent=39 // pred_region
          %s5677 = sand.u32 %s94, 1
          %s5678 = scalar_lea.sflag [#allocation3], %s5677
          %s5679 = sand.u32 %s94, 1
          %s5680 = smul.addr %s5679, 256
          %s5681 = scalar_lea.vmem [#allocation2], %s5680
          %5682 = dma.done %s5678, 4096
        $region44: #{tpu_custom_call.1} parent=39 // pred_fallthru
          _
      $region40: #{tpu_custom_call.1} parent=5 // pred_fallthru
        _
    $region6: #{tpu_custom_call.1} parent=1 // loop_footer
      %s16 = sadd.s32 1, %s12
    $region7: #{tpu_custom_call.1} parent=1 // loop_footer_branch
      %11 = sbr.rel target = $region3
    $region8: #{tpu_custom_call.1} parent=1 // loop_exit
      _
    %5683 = vsyncpa [#allocation3], 1
    %s5684 = scalar_lea.sflag [#allocation3], 1
    %5685 = vsyncpa %s5684, 1

</llo_original>
